<compile_context>
chip_gen: v7x
topology: tpu7x:2x2x1
jax: 0.10.0
libtpu: 0.0.40
codegen_flags: <defaults>
</compile_context>

<pallas_src>
import functools

import numpy as np
import jax
import jax.numpy as jnp
from jax import lax
from jax.experimental import pallas as pl
from jax.experimental.pallas import tpu as pltpu


def _round_up(v, m):
    return (v + m - 1) // m * m


def _cdiv(a, b):
    return (a + b - 1) // b


def _next_pow2(v):
    return 1 if v <= 1 else 1 << (int(v) - 1).bit_length()


# ----------------------------- Pallas kernel -----------------------------

def _stacked_dconv_kernel(xm_ref, xh_ref, w_ref, o_ref, *, deltas, tile):
    """One (group, lane-tile) step of the dilated 3-D conv as a stacked-K matmul.

    xm_ref: (cip_g, tile)      bf16  main window of the pre-activated padded slab
    xh_ref: (cip_g, halo_pad)  bf16  right halo (max tap offset <= halo_pad)
    w_ref : (cop_g, T*cip_g)   bf16  taps stacked along the contraction axis
    o_ref : (cop_g, tile)      f32   lane-dense conv output tile
    """
    win = jnp.concatenate([xm_ref[...], xh_ref[...]], axis=1)   # (cip_g, tile+halo)
    # Static lane-offset tap slices, stacked on the sublane/contraction axis.
    stacked = jnp.concatenate([win[:, d:d + tile] for d in deltas], axis=0)
    # Single MXU contraction over K = T*cip_g with f32 accumulation.
    o_ref[...] = jnp.dot(w_ref[...], stacked,
                         preferred_element_type=jnp.float32)


# ----------------------------- Forward wrapper -----------------------------

def dilated_conv3d_block(x, gamma, beta, weight, *, kernel_size, dilation,
                         stride=1, groups=1, eps=1e-5, tile=8192):
    """DilatedConv3DBlock forward (norm='bn', training-mode batch statistics).

    x:      [N, Cin, D, H, W]  float32 (NCDHW, PyTorch layout)
    weight: [Cout, Cin // groups, kd, kh, kw]
    returns [N, Cout, Dout, Hout, Wout]
    """
    if isinstance(stride, (tuple, list)):
        assert all(s == 1 for s in stride), "stride > 1 not supported"
    else:
        assert stride == 1, "stride > 1 not supported"

    N, Cin, D, H, W = x.shape
    Cout = weight.shape[0]
    assert Cin % groups == 0 and Cout % groups == 0
    Kd, Kh, Kw = kernel_size
    dd, dh, dw = dilation
    pd, ph, pw = (Kd - 1) // 2 * dd, (Kh - 1) // 2 * dh, (Kw - 1) // 2 * dw
    Dp, Hp, Wp = D + 2 * pd, H + 2 * ph, W + 2 * pw
    Dout, Hout, Wout = Dp - dd * (Kd - 1), Hp - dh * (Kh - 1), Wp - dw * (Kw - 1)

    in_pg, out_pg = Cin // groups, Cout // groups
    cip_g = _round_up(in_pg, 16)      # bf16 sublane packing (row pairs)
    cop_g = _round_up(out_pg, 8)      # f32 output sublanes
    T = Kd * Kh * Kw
    TK = T * cip_g
    Mp = N * Dp * Hp * Wp             # padded voxel count (flat length)

    # Flat lane offsets of the taps inside the padded slab.
    deltas = tuple(kd * dd * Hp * Wp + kh * dh * Wp + kw * dw
                   for kd in range(Kd) for kh in range(Kh) for kw in range(Kw))
    max_delta = max(deltas)
    halo_pad = max(128, _next_pow2(max_delta))   # power of two, >= 128

    # Lane tile: power of two >= halo (so halo_pad | tile).  Auto-shrink so the
    # per-step VMEM footprint stays v7x-safe and the grid keeps >= 4 steps.
    tile = max(_next_pow2(max(tile, 128)), halo_pad)

    def _footprint(t):
        return (3 * cip_g * (t + halo_pad) * 2   # input windows (2 bufs) + concat tmp
                + 3 * cop_g * t * 4              # output tile (2 bufs) + dot result
                + TK * t * 2                     # stacked activation block
                + 2 * cop_g * TK * 2)            # weights (double-buffered)

    while tile > halo_pad and (_footprint(tile) > 40 * 2**20 or _cdiv(Mp, tile) < 4):
        tile //= 2

    Mout = _round_up(Mp, tile)
    nconv = Mout // tile
    L = Mout + halo_pad               # slab length (main tiles + trailing halo)
    halo_blk = tile // halo_pad       # halo block-index stride along the lane axis
    f32 = jnp.float32

    # ---- BatchNorm batch statistics (centered, stable) + affine + ReLU -------
    xf = x.astype(f32)
    mean = jnp.mean(xf, axis=(0, 2, 3, 4))
    var = jnp.var(xf, axis=(0, 2, 3, 4))                 # biased var (training BN)
    scale = gamma.astype(f32) * lax.rsqrt(var + eps)
    shift = beta.astype(f32) - mean * scale
    h = jnp.maximum(xf * scale[None, :, None, None, None]
                    + shift[None, :, None, None, None], 0.0)

    # ---- channel-major, group-blocked, zero-padded bf16 slab  [G, cip_g, L] --
    h = jnp.transpose(h, (1, 0, 2, 3, 4)).reshape(groups, in_pg, N, D, H, W)
    h = jnp.pad(h, ((0, 0), (0, cip_g - in_pg), (0, 0),
                    (pd, pd), (ph, ph), (pw, pw)))
    xs = h.reshape(groups, cip_g, Mp).astype(jnp.bfloat16)
    xs = jnp.pad(xs, ((0, 0), (0, 0), (0, L - Mp)))

    # ---- stacked tap weights  [G, cop_g, T*cip_g]  (bf16) ---------------------
    w = weight.astype(f32).reshape(groups, out_pg, in_pg, Kd, Kh, Kw)
    w = jnp.transpose(w, (0, 1, 3, 4, 5, 2))             # (G, out_pg, Kd, Kh, Kw, in_pg)
    w = jnp.pad(w, ((0, 0), (0, 0), (0, 0), (0, 0), (0, 0), (0, cip_g - in_pg)))
    w = w.reshape(groups, out_pg, TK)
    w = jnp.pad(w, ((0, 0), (0, cop_g - out_pg), (0, 0))).astype(jnp.bfloat16)

    vmem_limit = int(min(96 * 2**20, max(32 * 2**20, 3 * _footprint(tile))))

    out = pl.pallas_call(
        functools.partial(_stacked_dconv_kernel, deltas=deltas, tile=tile),
        out_shape=jax.ShapeDtypeStruct((groups, cop_g, Mout), f32),
        grid=(groups, nconv),
        in_specs=[
            # main tile window
            pl.BlockSpec((None, cip_g, tile), lambda g, i: (g, 0, i)),
            # narrow right-halo window (fetched once per step, halo_pad lanes)
            pl.BlockSpec((None, cip_g, halo_pad),
                         lambda g, i: (g, 0, (i + 1) * halo_blk)),
            # per-group stacked weights (block index constant across i -> no refetch)
            pl.BlockSpec((None, cop_g, TK), lambda g, i: (g, 0, 0)),
        ],
        out_specs=pl.BlockSpec((None, cop_g, tile), lambda g, i: (g, 0, i)),
        compiler_params=pltpu.CompilerParams(
            dimension_semantics=("parallel", "parallel"),
            vmem_limit_bytes=vmem_limit),
    )(xs, xs, w)

    # ---- crop padded-coordinate, lane-dense output back to NCDHW -------------
    y = out[:, :out_pg, :Mp].reshape(groups, out_pg, N, Dp, Hp, Wp)
    y = y[:, :, :, :Dout, :Hout, :Wout].reshape(Cout, N, Dout, Hout, Wout)
    return jnp.transpose(y, (1, 0, 2, 3, 4))


# ----------------------------- Pure-JAX reference -----------------------------

def reference_forward(x, gamma, beta, weight, *, kernel_size, dilation,
                      groups=1, eps=1e-5):
    Kd, Kh, Kw = kernel_size
    dd, dh, dw = dilation
    pd, ph, pw = (Kd - 1) // 2 * dd, (Kh - 1) // 2 * dh, (Kw - 1) // 2 * dw
    bc = lambda v: v[None, :, None, None, None]
    mean = jnp.mean(x, axis=(0, 2, 3, 4))
    var = jnp.var(x, axis=(0, 2, 3, 4))
    h = (x - bc(mean)) * bc(lax.rsqrt(var + eps))
    h = jnp.maximum(h * bc(gamma) + bc(beta), 0.0)
    return lax.conv_general_dilated(
        h, weight, window_strides=(1, 1, 1),
        padding=((pd, pd), (ph, ph), (pw, pw)),
        rhs_dilation=(dd, dh, dw),
        dimension_numbers=('NCDHW', 'OIDHW', 'NCDHW'),
        feature_group_count=groups)


# ----------------------------- Main -----------------------------

if __name__ == "__main__":
    key = jax.random.PRNGKey(0)
    kx, kw1, kg1, kb1, kw2, kg2, kb2 = jax.random.split(key, 7)

    N, Cin, D, H, W = 2, 4, 16, 16, 16
    x = jax.random.normal(kx, (N, Cin, D, H, W), jnp.float32)

    # block 1: 4 -> 8 channels, kernel (3,3,3), dilation (2,2,2), groups=1
    Cout1, ks1, dil1, g1 = 8, (3, 3, 3), (2, 2, 2), 1
    fan1 = (Cin // g1) * ks1[0] * ks1[1] * ks1[2]
    w1 = jax.random.normal(kw1, (Cout1, Cin // g1) + ks1, jnp.float32) / np.sqrt(fan1)
    gamma1 = 1.0 + 0.1 * jax.random.normal(kg1, (Cin,), jnp.float32)
    beta1 = 0.3 + 0.2 * jax.random.normal(kb1, (Cin,), jnp.float32)

    fwd1 = jax.jit(functools.partial(dilated_conv3d_block,
                                     kernel_size=ks1, dilation=dil1, groups=g1))
    y1 = jax.block_until_ready(fwd1(x, gamma1, beta1, w1))
    r1 = jax.block_until_ready(jax.jit(functools.partial(
        reference_forward, kernel_size=ks1, dilation=dil1, groups=g1))(
            x, gamma1, beta1, w1))
    assert y1.shape == (N, Cout1, D, H, W), y1.shape
    assert bool(jnp.all(jnp.isfinite(y1)))
    err1 = float(jnp.max(jnp.abs(y1 - r1)))
    assert err1 < 5e-2, err1

    # block 2: grouped, anisotropic kernel (3,3,1), dilation (1,1,1), groups=2
    Cout2, ks2, dil2, g2 = 8, (3, 3, 1), (1, 1, 1), 2
    fan2 = (Cin // g2) * ks2[0] * ks2[1] * ks2[2]
    w2 = jax.random.normal(kw2, (Cout2, Cin // g2) + ks2, jnp.float32) / np.sqrt(fan2)
    gamma2 = 1.0 + 0.1 * jax.random.normal(kg2, (Cin,), jnp.float32)
    beta2 = 0.3 + 0.2 * jax.random.normal(kb2, (Cin,), jnp.float32)

    fwd2 = jax.jit(functools.partial(dilated_conv3d_block,
                                     kernel_size=ks2, dilation=dil2, groups=g2))
    y2 = jax.block_until_ready(fwd2(x, gamma2, beta2, w2))
    r2 = jax.block_until_ready(jax.jit(functools.partial(
        reference_forward, kernel_size=ks2, dilation=dil2, groups=g2))(
            x, gamma2, beta2, w2))
    assert y2.shape == (N, Cout2, D, H, W), y2.shape
    assert bool(jnp.all(jnp.isfinite(y2)))
    err2 = float(jnp.max(jnp.abs(y2 - r2)))
    assert err2 < 5e-2, err2

    print("KERNEL_OK")
</pallas_src>

<mosaic_0001>
module attributes {stable_mosaic.version = 11 : i64} {
  func.func @_stacked_dconv_kernel(%arg0: i32, %arg1: i32, %arg2: memref<1x16x4096xbf16, #tpu.memory_space<vmem>>, %arg3: memref<1x16x2048xbf16, #tpu.memory_space<vmem>>, %arg4: memref<1x8x432xbf16, #tpu.memory_space<vmem>>, %arg5: memref<1x8x4096xf32, #tpu.memory_space<vmem>>) attributes {dimension_semantics = [#tpu.dimension_semantics<parallel>, #tpu.dimension_semantics<parallel>], iteration_bounds = array<i64: 1, 4>, scalar_prefetch = 0 : i64, scratch_operands = 0 : i64, tpu.core_type = #tpu.core_type<tc>, window_params = [{transform_indices = @transform_0, window_bounds = array<i64: 1, 16, 4096>}, {transform_indices = @transform_1, window_bounds = array<i64: 1, 16, 2048>}, {transform_indices = @transform_2, window_bounds = array<i64: 1, 8, 432>}, {transform_indices = @transform_3, window_bounds = array<i64: 1, 8, 4096>}]} {
    %c0 = arith.constant 0 : index
    %c0_0 = arith.constant 0 : index
    %c0_1 = arith.constant 0 : index
    %0 = vector.load %arg2[%c0, %c0_0, %c0_1] : memref<1x16x4096xbf16, #tpu.memory_space<vmem>>, vector<1x16x4096xbf16>
    %1 = vector.shape_cast %0 : vector<1x16x4096xbf16> to vector<16x4096xbf16>
    %c0_2 = arith.constant 0 : index
    %c0_3 = arith.constant 0 : index
    %c0_4 = arith.constant 0 : index
    %2 = vector.load %arg3[%c0_2, %c0_3, %c0_4] : memref<1x16x2048xbf16, #tpu.memory_space<vmem>>, vector<1x16x2048xbf16>
    %3 = vector.shape_cast %2 : vector<1x16x2048xbf16> to vector<16x2048xbf16>
    %4 = tpu.concatenate %1, %3 in 1 : vector<16x4096xbf16>, vector<16x2048xbf16> -> vector<16x6144xbf16>
    %5 = vector.extract_strided_slice %4 {offsets = [0, 0], sizes = [16, 4096], strides = [1, 1]} : vector<16x6144xbf16> to vector<16x4096xbf16>
    %6 = vector.extract_strided_slice %4 {offsets = [0, 2], sizes = [16, 4096], strides = [1, 1]} : vector<16x6144xbf16> to vector<16x4096xbf16>
    %7 = vector.extract_strided_slice %4 {offsets = [0, 4], sizes = [16, 4096], strides = [1, 1]} : vector<16x6144xbf16> to vector<16x4096xbf16>
    %8 = vector.extract_strided_slice %4 {offsets = [0, 40], sizes = [16, 4096], strides = [1, 1]} : vector<16x6144xbf16> to vector<16x4096xbf16>
    %9 = vector.extract_strided_slice %4 {offsets = [0, 42], sizes = [16, 4096], strides = [1, 1]} : vector<16x6144xbf16> to vector<16x4096xbf16>
    %10 = vector.extract_strided_slice %4 {offsets = [0, 44], sizes = [16, 4096], strides = [1, 1]} : vector<16x6144xbf16> to vector<16x4096xbf16>
    %11 = vector.extract_strided_slice %4 {offsets = [0, 80], sizes = [16, 4096], strides = [1, 1]} : vector<16x6144xbf16> to vector<16x4096xbf16>
    %12 = vector.extract_strided_slice %4 {offsets = [0, 82], sizes = [16, 4096], strides = [1, 1]} : vector<16x6144xbf16> to vector<16x4096xbf16>
    %13 = vector.extract_strided_slice %4 {offsets = [0, 84], sizes = [16, 4096], strides = [1, 1]} : vector<16x6144xbf16> to vector<16x4096xbf16>
    %14 = vector.extract_strided_slice %4 {offsets = [0, 800], sizes = [16, 4096], strides = [1, 1]} : vector<16x6144xbf16> to vector<16x4096xbf16>
    %15 = vector.extract_strided_slice %4 {offsets = [0, 802], sizes = [16, 4096], strides = [1, 1]} : vector<16x6144xbf16> to vector<16x4096xbf16>
    %16 = vector.extract_strided_slice %4 {offsets = [0, 804], sizes = [16, 4096], strides = [1, 1]} : vector<16x6144xbf16> to vector<16x4096xbf16>
    %17 = vector.extract_strided_slice %4 {offsets = [0, 840], sizes = [16, 4096], strides = [1, 1]} : vector<16x6144xbf16> to vector<16x4096xbf16>
    %18 = vector.extract_strided_slice %4 {offsets = [0, 842], sizes = [16, 4096], strides = [1, 1]} : vector<16x6144xbf16> to vector<16x4096xbf16>
    %19 = vector.extract_strided_slice %4 {offsets = [0, 844], sizes = [16, 4096], strides = [1, 1]} : vector<16x6144xbf16> to vector<16x4096xbf16>
    %20 = vector.extract_strided_slice %4 {offsets = [0, 880], sizes = [16, 4096], strides = [1, 1]} : vector<16x6144xbf16> to vector<16x4096xbf16>
    %21 = vector.extract_strided_slice %4 {offsets = [0, 882], sizes = [16, 4096], strides = [1, 1]} : vector<16x6144xbf16> to vector<16x4096xbf16>
    %22 = vector.extract_strided_slice %4 {offsets = [0, 884], sizes = [16, 4096], strides = [1, 1]} : vector<16x6144xbf16> to vector<16x4096xbf16>
    %23 = vector.extract_strided_slice %4 {offsets = [0, 1600], sizes = [16, 4096], strides = [1, 1]} : vector<16x6144xbf16> to vector<16x4096xbf16>
    %24 = vector.extract_strided_slice %4 {offsets = [0, 1602], sizes = [16, 4096], strides = [1, 1]} : vector<16x6144xbf16> to vector<16x4096xbf16>
    %25 = vector.extract_strided_slice %4 {offsets = [0, 1604], sizes = [16, 4096], strides = [1, 1]} : vector<16x6144xbf16> to vector<16x4096xbf16>
    %26 = vector.extract_strided_slice %4 {offsets = [0, 1640], sizes = [16, 4096], strides = [1, 1]} : vector<16x6144xbf16> to vector<16x4096xbf16>
    %27 = vector.extract_strided_slice %4 {offsets = [0, 1642], sizes = [16, 4096], strides = [1, 1]} : vector<16x6144xbf16> to vector<16x4096xbf16>
    %28 = vector.extract_strided_slice %4 {offsets = [0, 1644], sizes = [16, 4096], strides = [1, 1]} : vector<16x6144xbf16> to vector<16x4096xbf16>
    %29 = vector.extract_strided_slice %4 {offsets = [0, 1680], sizes = [16, 4096], strides = [1, 1]} : vector<16x6144xbf16> to vector<16x4096xbf16>
    %30 = vector.extract_strided_slice %4 {offsets = [0, 1682], sizes = [16, 4096], strides = [1, 1]} : vector<16x6144xbf16> to vector<16x4096xbf16>
    %31 = vector.extract_strided_slice %4 {offsets = [0, 1684], sizes = [16, 4096], strides = [1, 1]} : vector<16x6144xbf16> to vector<16x4096xbf16>
    %32 = tpu.concatenate %5, %6, %7, %8, %9, %10, %11, %12, %13, %14, %15, %16, %17, %18, %19, %20 in 0 : vector<16x4096xbf16>, vector<16x4096xbf16>, vector<16x4096xbf16>, vector<16x4096xbf16>, vector<16x4096xbf16>, vector<16x4096xbf16>, vector<16x4096xbf16>, vector<16x4096xbf16>, vector<16x4096xbf16>, vector<16x4096xbf16>, vector<16x4096xbf16>, vector<16x4096xbf16>, vector<16x4096xbf16>, vector<16x4096xbf16>, vector<16x4096xbf16>, vector<16x4096xbf16> -> vector<256x4096xbf16>
    %33 = tpu.concatenate %21, %22, %23, %24, %25, %26, %27, %28, %29, %30, %31 in 0 : vector<16x4096xbf16>, vector<16x4096xbf16>, vector<16x4096xbf16>, vector<16x4096xbf16>, vector<16x4096xbf16>, vector<16x4096xbf16>, vector<16x4096xbf16>, vector<16x4096xbf16>, vector<16x4096xbf16>, vector<16x4096xbf16>, vector<16x4096xbf16> -> vector<176x4096xbf16>
    %34 = tpu.concatenate %32, %33 in 0 : vector<256x4096xbf16>, vector<176x4096xbf16> -> vector<432x4096xbf16>
    %c0_5 = arith.constant 0 : index
    %c0_6 = arith.constant 0 : index
    %c0_7 = arith.constant 0 : index
    %35 = vector.load %arg4[%c0_5, %c0_6, %c0_7] : memref<1x8x432xbf16, #tpu.memory_space<vmem>>, vector<1x8x432xbf16>
    %36 = vector.shape_cast %35 : vector<1x8x432xbf16> to vector<8x432xbf16>
    %cst = arith.constant dense<0.000000e+00> : vector<8x4096xf32>
    %37 = tpu.matmul %36, %34, %cst {dimension_numbers = #tpu.dot_dimension_numbers<[1], [0], [0], [1], [0, 0, 1, 1], [], []>} : vector<8x432xbf16>, vector<432x4096xbf16>, vector<8x4096xf32> -> vector<8x4096xf32>
    %c0_8 = arith.constant 0 : index
    %c0_9 = arith.constant 0 : index
    %c0_10 = arith.constant 0 : index
    %38 = vector.load %arg5[%c0_8, %c0_9, %c0_10] : memref<1x8x4096xf32, #tpu.memory_space<vmem>>, vector<1x8x4096xf32>
    %39 = vector.shape_cast %38 : vector<1x8x4096xf32> to vector<8x4096xf32>
    %40 = vector.shape_cast %37 : vector<8x4096xf32> to vector<1x8x4096xf32>
    tpu.vector_store %arg5[%c0_8, %c0_9, %c0_10], %40 {strides = array<i32>} : memref<1x8x4096xf32, #tpu.memory_space<vmem>>, vector<1x8x4096xf32>,
    return
  }
  func.func @transform_0(%arg0: i32, %arg1: i32) -> (i32, i32, i32) {
    %c0_i32 = arith.constant 0 : i32
    %c0_i32_0 = arith.constant 0 : i32
    return %arg0, %c0_i32, %arg1 : i32, i32, i32
  }
  func.func @transform_1(%arg0: i32, %arg1: i32) -> (i32, i32, i32) {
    %c1_i32 = arith.constant 1 : i32
    %0 = arith.addi %arg1, %c1_i32 : i32
    %c2_i32 = arith.constant 2 : i32
    %1 = arith.muli %0, %c2_i32 : i32
    %c0_i32 = arith.constant 0 : i32
    %c0_i32_0 = arith.constant 0 : i32
    return %arg0, %c0_i32, %1 : i32, i32, i32
  }
  func.func @transform_2(%arg0: i32, %arg1: i32) -> (i32, i32, i32) {
    %c0_i32 = arith.constant 0 : i32
    %c0_i32_0 = arith.constant 0 : i32
    %c0_i32_1 = arith.constant 0 : i32
    return %arg0, %c0_i32, %c0_i32_0 : i32, i32, i32
  }
  func.func @transform_3(%arg0: i32, %arg1: i32) -> (i32, i32, i32) {
    %c0_i32 = arith.constant 0 : i32
    %c0_i32_0 = arith.constant 0 : i32
    return %arg0, %c0_i32, %arg1 : i32, i32, i32
  }
}

</mosaic_0001>

<llo_original>
// kernel: dilated_conv3d_block.1
$region0: #{dilated_conv3d_block.1}
  #allocation0 [shape = 'u32[]', space=smem, size = 0x4, offset = 0x4, fixed_abs, tag = 'smem constant byte address 0x4 - core index']
  #allocation1 [shape = 'u32[144,128]{1,0:T(1,128)}', space=vmem, size = 0x12000, scoped, tag = 'internal scratch']
  %s0 = inlined_call_operand.vmem [shape: bf16[1,16,18432], index: 0, kind: input, shape index: {}, may-alias: {0,1}]
  %s1 = inlined_call_operand.vmem [shape: bf16[1,16,18432], index: 1, kind: input, shape index: {}, may-alias: {0,1}]
  %s2 = inlined_call_operand.vmem [shape: bf16[1,8,432], index: 2, kind: input, shape index: {}]
  %s3 = inlined_call_operand.vmem [shape: f32[1,8,16384], index: 3, kind: output, shape index: {}]
  %s4 = sld [smem:[#allocation0]]
  $region134: #{dilated_conv3d_block.1} parent=0
    _
  %s6 = ssub.s32 1, %s4
  %s7 = scalar_select 0, %s6, %s4
  $region1: #{dilated_conv3d_block.1} parent=0
    #allocation2 [shape = 'u8[262144]{0}', space=vmem, size = 0x40000, scoped, tag = 'input window, operand 0']
    #allocation3 [shape = 'u8[131072]{0}', space=vmem, size = 0x20000, scoped, tag = 'input window, operand 1']
    loop: start=0, step=1, limit=6
    $region2: #{dilated_conv3d_block.1} parent=1 // loop_pre_header
      _
    $region3: #{dilated_conv3d_block.1} parent=1 // loop_header
      %s9 = sphi 0, %s13
      %p10 = scmp.ge.s32.totalorder %s9, 6
      %s16 = sphi 0, %s28
      %s17 = sphi 0, %s24
      %s18 = sphi 0, %s16
      %s19 = sphi 0, %s17
      %s20 = sphi 0, %s18
      %s21 = sphi 0, %s19
      %s33 = sphi 0, %s35
      %s36 = sphi 0, %s33
      %s37 = sphi 0, %s36
      %s53 = sphi 0, %s37
      %s65 = sphi 0, %s67
      %s68 = sphi 0, %s65
      %s69 = sphi 0, %s68
      %s85 = sphi 0, %s69
      %s91 = sphi 0, %s93
      %s94 = sphi 0, %s91
      %s95 = sphi 0, %s94
      %s111 = sphi 0, %s95
      %s119 = sphi 0, %s121
      %s122 = sphi 0, %s119
      %s123 = sphi 0, %s122
      %s139 = sphi 0, %s123
    $region4: #{dilated_conv3d_block.1} parent=1 // loop_header_branch
      %12 = sbr.rel (%p10) target = $region8
    $region5: #{dilated_conv3d_block.1} parent=1 // loop_body
      %s14 = ssub.s32 %s9, 1
      %s15 = ssub.s32 %s9, 2
      %s22 = sadd.s32 1, %s17
      %p23 = scmp.ge.s32.totalorder %s22, 4
      %s24 = scalar_select %p23, 0, %s22
      %s25 = sadd.s32 1, %s16
      %s26 = scalar_select %p23, %s25, %s16
      %p27 = scmp.ge.s32.totalorder %s26, 1
      %s28 = scalar_select %p27, 0, %s26
      %s29 = ssub.s32 %s16, %s28
      %s30 = ssub.s32 %s17, %s24
      %s31 = sor.u32 %s29, %s30
      %p32 = scmp.eq.s32.totalorder %s31, 0
      %s34 = sadd.s32 %s33, 1
      %s35 = scalar_select %p32, %s33, %s34
      %p38 = pneg %p32
      %p39 = scmp.eq.s32.totalorder %s9, 3
      %p40 = por %p38, %p39
      %p41 = scmp.ne.s32.totalorder %s33, %s36
      %p42 = scmp.eq.s32.totalorder %s9, 0
      %p43 = por %p41, %p42
      %p44 = scmp.ne.s32.totalorder %s33, %s36
      %p45 = scmp.eq.s32.totalorder %s14, 3
      %p46 = por %p44, %p45
      %p47 = scmp.ne.s32.totalorder %s36, %s37
      %p48 = scmp.eq.s32.totalorder %s14, 0
      %p49 = por %p47, %p48
      %p50 = scmp.ne.s32.totalorder %s36, %s37
      %p51 = scmp.eq.s32.totalorder %s15, 3
      %p52 = por %p50, %p51
      %p54 = scmp.ne.s32.totalorder %s37, %s53
      %p55 = scmp.eq.s32.totalorder %s15, 0
      %p56 = por %p54, %p55
      %s57 = sadd.s32 %s17, 1
      %s58 = smul.u32 %s57, 2
      %s59 = sadd.s32 %s24, 1
      %s60 = smul.u32 %s59, 2
      %s61 = ssub.s32 %s16, %s28
      %s62 = ssub.s32 %s58, %s60
      %s63 = sor.u32 %s61, %s62
      %p64 = scmp.eq.s32.totalorder %s63, 0
      %s66 = sadd.s32 %s65, 1
      %s67 = scalar_select %p64, %s65, %s66
      %p70 = pneg %p64
      %p71 = scmp.eq.s32.totalorder %s9, 3
      %p72 = por %p70, %p71
      %p73 = scmp.ne.s32.totalorder %s65, %s68
      %p74 = scmp.eq.s32.totalorder %s9, 0
      %p75 = por %p73, %p74
      %p76 = scmp.ne.s32.totalorder %s65, %s68
      %p77 = scmp.eq.s32.totalorder %s14, 3
      %p78 = por %p76, %p77
      %p79 = scmp.ne.s32.totalorder %s68, %s69
      %p80 = scmp.eq.s32.totalorder %s14, 0
      %p81 = por %p79, %p80
      %p82 = scmp.ne.s32.totalorder %s68, %s69
      %p83 = scmp.eq.s32.totalorder %s15, 3
      %p84 = por %p82, %p83
      %p86 = scmp.ne.s32.totalorder %s69, %s85
      %p87 = scmp.eq.s32.totalorder %s15, 0
      %p88 = por %p86, %p87
      %s89 = ssub.s32 %s16, %s28
      %p90 = scmp.eq.s32.totalorder %s89, 0
      %s92 = sadd.s32 %s91, 1
      %s93 = scalar_select %p90, %s91, %s92
      %p96 = pneg %p90
      %p97 = scmp.eq.s32.totalorder %s9, 3
      %p98 = por %p96, %p97
      %p99 = scmp.ne.s32.totalorder %s91, %s94
      %p100 = scmp.eq.s32.totalorder %s9, 0
      %p101 = por %p99, %p100
      %p102 = scmp.ne.s32.totalorder %s91, %s94
      %p103 = scmp.eq.s32.totalorder %s14, 3
      %p104 = por %p102, %p103
      %p105 = scmp.ne.s32.totalorder %s94, %s95
      %p106 = scmp.eq.s32.totalorder %s14, 0
      %p107 = por %p105, %p106
      %p108 = scmp.ne.s32.totalorder %s94, %s95
      %p109 = scmp.eq.s32.totalorder %s15, 3
      %p110 = por %p108, %p109
      %p112 = scmp.ne.s32.totalorder %s95, %s111
      %p113 = scmp.eq.s32.totalorder %s15, 0
      %p114 = por %p112, %p113
      %s115 = ssub.s32 %s16, %s28
      %s116 = ssub.s32 %s17, %s24
      %s117 = sor.u32 %s115, %s116
      %p118 = scmp.eq.s32.totalorder %s117, 0
      %s120 = sadd.s32 %s119, 1
      %s121 = scalar_select %p118, %s119, %s120
      %p124 = pneg %p118
      %p125 = scmp.eq.s32.totalorder %s9, 3
      %p126 = por %p124, %p125
      %p127 = scmp.ne.s32.totalorder %s119, %s122
      %p128 = scmp.eq.s32.totalorder %s9, 0
      %p129 = por %p127, %p128
      %p130 = scmp.ne.s32.totalorder %s119, %s122
      %p131 = scmp.eq.s32.totalorder %s14, 3
      %p132 = por %p130, %p131
      %p133 = scmp.ne.s32.totalorder %s122, %s123
      %p134 = scmp.eq.s32.totalorder %s14, 0
      %p135 = por %p133, %p134
      %p136 = scmp.ne.s32.totalorder %s122, %s123
      %p137 = scmp.eq.s32.totalorder %s15, 3
      %p138 = por %p136, %p137
      %p140 = scmp.ne.s32.totalorder %s123, %s139
      %p141 = scmp.eq.s32.totalorder %s15, 0
      %p142 = por %p140, %p141
      %p143 = scmp.le.s32.totalorder 1, %s9
      %p144 = scmp.lt.s32.totalorder %s9, 5
      %p145 = pnand %p143, %p144
      %p146 = pneg %p145
      // Predicated region
      $region9: #{dilated_conv3d_block.1} parent=5 // pred_check
        _
      $region10: #{dilated_conv3d_block.1} parent=5 // pred_check_branch
        %148 = sbr.rel (%p145) target = $region12
      $region11: #{dilated_conv3d_block.1} parent=5 // pred_region
        %s149 = ssub.s32 %s9, 1
        // Predicated region
        $region13: #{dilated_conv3d_block.1} parent=11 // pred_check
          %p150 = pneg %p107
        $region14: #{dilated_conv3d_block.1} parent=11 // pred_check_branch
          %152 = sbr.rel (%p150) target = $region16
        $region15: #{dilated_conv3d_block.1} parent=11 // pred_region
          %p153 = scmp.lt.s32.totalorder %s18, 0
          %s154 = scalar_select %p153, %s18, 0
          %s155 = smul.addr %s154, 4
          %s156 = smul.addr %s155, 4
          %s157 = scalar_lea.vmem %s2, %s156
        $region16: #{dilated_conv3d_block.1} parent=11 // pred_fallthru
          _
      $region12: #{dilated_conv3d_block.1} parent=5 // pred_fallthru
        _
      %p158 = scmp.lt.s32.totalorder %s9, 4
      // Predicated region
      $region17: #{dilated_conv3d_block.1} parent=5 // pred_check
        %p159 = pneg %p158
      $region18: #{dilated_conv3d_block.1} parent=5 // pred_check_branch
        %161 = sbr.rel (%p159) target = $region20
      $region19: #{dilated_conv3d_block.1} parent=5 // pred_region
        // Predicated region
        $region21: #{dilated_conv3d_block.1} parent=19 // pred_check
          %p162 = pneg %p43
        $region22: #{dilated_conv3d_block.1} parent=19 // pred_check_branch
          %164 = sbr.rel (%p162) target = $region24
        $region23: #{dilated_conv3d_block.1} parent=19 // pred_region
          %s165 = sand.u32 %s33, 1
          %s166 = sand.u32 %s33, 1
          %s167 = smul.addr %s166, 256
          %s168 = scalar_lea.vmem [#allocation2], %s167
          %s169 = smul.u32 32, %s17
          %s170 = ssub.s32 144, %s169
          %p171 = scmp.lt.s32.totalorder %s170, 32
          %s172 = scalar_select %p171, %s170, 32
          %s173 = smul.u32 128, %s172
          %p174 = scmp.ne.s32.totalorder 0, %s173
          %s175 = smul.addr %s16, 288
          %s176 = sadd.s32 %s169, %s175
          %s177 = smul.addr %s176, 4
          %s178 = scalar_lea.vmem %s0, %s177
          %s179 = smul.u32 %s172, 4
          // Predicated region
          $region25: #{dilated_conv3d_block.1} parent=23 // pred_check
            %p180 = pneg %p174
          $region26: #{dilated_conv3d_block.1} parent=23 // pred_check_branch
            %182 = sbr.rel (%p180) target = $region28
          $region27: #{dilated_conv3d_block.1} parent=23 // pred_region
            %p183 = scmp.lt.u32.totalorder %s179, 8
            %p184 = pneg %p183
            // Predicated region
            $region29: #{dilated_conv3d_block.1} parent=27 // pred_check
              _
            $region30: #{dilated_conv3d_block.1} parent=27 // pred_check_branch
              %186 = sbr.rel (%p183) target = $region32
            $region31: #{dilated_conv3d_block.1} parent=27 // pred_region
              %s203 = sand.u32 %s179, 7
              %p204 = scmp.eq.s32.totalorder %s203, 0
              // Predicated region
              $region44: #{dilated_conv3d_block.1} parent=31 // pred_check
                %p205 = pneg %p204
              $region45: #{dilated_conv3d_block.1} parent=31 // pred_check_branch
                %207 = sbr.rel (%p205) target = $region47
              $region46: #{dilated_conv3d_block.1} parent=31 // pred_region
                %s208 = sshrl.u32 %s179, 3
                %s209 = sshrl.u32 %s208, 5
                // While loop
                $region48: #{dilated_conv3d_block.1} parent=46 // loop_pre_header
                  _
                $region49: #{dilated_conv3d_block.1} parent=46 // loop_header
                  %s213 = sphi 0, %s215
                  %p214 = scmp.ge.s32.totalorder %s213, %s209
                  %s218 = sphi 0, %s351
                  %s219 = sphi %s178, %s354
                  %s220 = sphi %s168, %s355
                $region50: #{dilated_conv3d_block.1} parent=46 // loop_header_branch
                  %217 = sbr.rel (%p214) target = $region54
                $region51: #{dilated_conv3d_block.1} parent=46 // loop_body
                  %v221 = vld [vmem:[%s219] sm:$0xff]
                  %222 = vst [vmem:[%s220] sm:$0xff] %v221
                  %v223 = vld [vmem:[%s219 + $0x8] sm:$0xff]
                  %224 = vst [vmem:[%s220 + $0x8] sm:$0xff] %v223
                  %v225 = vld [vmem:[%s219 + $0x10] sm:$0xff]
                  %226 = vst [vmem:[%s220 + $0x10] sm:$0xff] %v225
                  %v227 = vld [vmem:[%s219 + $0x18] sm:$0xff]
                  %228 = vst [vmem:[%s220 + $0x18] sm:$0xff] %v227
                  %v229 = vld [vmem:[%s219 + $0x20] sm:$0xff]
                  %230 = vst [vmem:[%s220 + $0x20] sm:$0xff] %v229
                  %v231 = vld [vmem:[%s219 + $0x28] sm:$0xff]
                  %232 = vst [vmem:[%s220 + $0x28] sm:$0xff] %v231
                  %v233 = vld [vmem:[%s219 + $0x30] sm:$0xff]
                  %234 = vst [vmem:[%s220 + $0x30] sm:$0xff] %v233
                  %v235 = vld [vmem:[%s219 + $0x38] sm:$0xff]
                  %236 = vst [vmem:[%s220 + $0x38] sm:$0xff] %v235
                  %v237 = vld [vmem:[%s219 + $0x40] sm:$0xff]
                  %238 = vst [vmem:[%s220 + $0x40] sm:$0xff] %v237
                  %v239 = vld [vmem:[%s219 + $0x48] sm:$0xff]
                  %240 = vst [vmem:[%s220 + $0x48] sm:$0xff] %v239
                  %v241 = vld [vmem:[%s219 + $0x50] sm:$0xff]
                  %242 = vst [vmem:[%s220 + $0x50] sm:$0xff] %v241
                  %v243 = vld [vmem:[%s219 + $0x58] sm:$0xff]
                  %244 = vst [vmem:[%s220 + $0x58] sm:$0xff] %v243
                  %v245 = vld [vmem:[%s219 + $0x60] sm:$0xff]
                  %246 = vst [vmem:[%s220 + $0x60] sm:$0xff] %v245
                  %v247 = vld [vmem:[%s219 + $0x68] sm:$0xff]
                  %248 = vst [vmem:[%s220 + $0x68] sm:$0xff] %v247
                  %v249 = vld [vmem:[%s219 + $0x70] sm:$0xff]
                  %250 = vst [vmem:[%s220 + $0x70] sm:$0xff] %v249
                  %v251 = vld [vmem:[%s219 + $0x78] sm:$0xff]
                  %252 = vst [vmem:[%s220 + $0x78] sm:$0xff] %v251
                  %v253 = vld [vmem:[%s219 + $0x80] sm:$0xff]
                  %254 = vst [vmem:[%s220 + $0x80] sm:$0xff] %v253
                  %v255 = vld [vmem:[%s219 + $0x88] sm:$0xff]
                  %256 = vst [vmem:[%s220 + $0x88] sm:$0xff] %v255
                  %v257 = vld [vmem:[%s219 + $0x90] sm:$0xff]
                  %258 = vst [vmem:[%s220 + $0x90] sm:$0xff] %v257
                  %v259 = vld [vmem:[%s219 + $0x98] sm:$0xff]
                  %260 = vst [vmem:[%s220 + $0x98] sm:$0xff] %v259
                  %v261 = vld [vmem:[%s219 + $0xa0] sm:$0xff]
                  %262 = vst [vmem:[%s220 + $0xa0] sm:$0xff] %v261
                  %v263 = vld [vmem:[%s219 + $0xa8] sm:$0xff]
                  %264 = vst [vmem:[%s220 + $0xa8] sm:$0xff] %v263
                  %v265 = vld [vmem:[%s219 + $0xb0] sm:$0xff]
                  %266 = vst [vmem:[%s220 + $0xb0] sm:$0xff] %v265
                  %v267 = vld [vmem:[%s219 + $0xb8] sm:$0xff]
                  %268 = vst [vmem:[%s220 + $0xb8] sm:$0xff] %v267
                  %v269 = vld [vmem:[%s219 + $0xc0] sm:$0xff]
                  %270 = vst [vmem:[%s220 + $0xc0] sm:$0xff] %v269
                  %v271 = vld [vmem:[%s219 + $0xc8] sm:$0xff]
                  %272 = vst [vmem:[%s220 + $0xc8] sm:$0xff] %v271
                  %v273 = vld [vmem:[%s219 + $0xd0] sm:$0xff]
                  %274 = vst [vmem:[%s220 + $0xd0] sm:$0xff] %v273
                  %v275 = vld [vmem:[%s219 + $0xd8] sm:$0xff]
                  %276 = vst [vmem:[%s220 + $0xd8] sm:$0xff] %v275
                  %v277 = vld [vmem:[%s219 + $0xe0] sm:$0xff]
                  %278 = vst [vmem:[%s220 + $0xe0] sm:$0xff] %v277
                  %v279 = vld [vmem:[%s219 + $0xe8] sm:$0xff]
                  %280 = vst [vmem:[%s220 + $0xe8] sm:$0xff] %v279
                  %v281 = vld [vmem:[%s219 + $0xf0] sm:$0xff]
                  %282 = vst [vmem:[%s220 + $0xf0] sm:$0xff] %v281
                  %v283 = vld [vmem:[%s219 + $0xf8] sm:$0xff]
                  %284 = vst [vmem:[%s220 + $0xf8] sm:$0xff] %v283
                  %v285 = vld [vmem:[%s219 + $0x240] sm:$0xff]
                  %286 = vst [vmem:[%s220 + $0x80] sm:$0xff] %v285
                  %v287 = vld [vmem:[%s219 + $0x248] sm:$0xff]
                  %288 = vst [vmem:[%s220 + $0x88] sm:$0xff] %v287
                  %v289 = vld [vmem:[%s219 + $0x250] sm:$0xff]
                  %290 = vst [vmem:[%s220 + $0x90] sm:$0xff] %v289
                  %v291 = vld [vmem:[%s219 + $0x258] sm:$0xff]
                  %292 = vst [vmem:[%s220 + $0x98] sm:$0xff] %v291
                  %v293 = vld [vmem:[%s219 + $0x260] sm:$0xff]
                  %294 = vst [vmem:[%s220 + $0xa0] sm:$0xff] %v293
                  %v295 = vld [vmem:[%s219 + $0x268] sm:$0xff]
                  %296 = vst [vmem:[%s220 + $0xa8] sm:$0xff] %v295
                  %v297 = vld [vmem:[%s219 + $0x270] sm:$0xff]
                  %298 = vst [vmem:[%s220 + $0xb0] sm:$0xff] %v297
                  %v299 = vld [vmem:[%s219 + $0x278] sm:$0xff]
                  %300 = vst [vmem:[%s220 + $0xb8] sm:$0xff] %v299
                  %v301 = vld [vmem:[%s219 + $0x280] sm:$0xff]
                  %302 = vst [vmem:[%s220 + $0xc0] sm:$0xff] %v301
                  %v303 = vld [vmem:[%s219 + $0x288] sm:$0xff]
                  %304 = vst [vmem:[%s220 + $0xc8] sm:$0xff] %v303
                  %v305 = vld [vmem:[%s219 + $0x290] sm:$0xff]
                  %306 = vst [vmem:[%s220 + $0xd0] sm:$0xff] %v305
                  %v307 = vld [vmem:[%s219 + $0x298] sm:$0xff]
                  %308 = vst [vmem:[%s220 + $0xd8] sm:$0xff] %v307
                  %v309 = vld [vmem:[%s219 + $0x2a0] sm:$0xff]
                  %310 = vst [vmem:[%s220 + $0xe0] sm:$0xff] %v309
                  %v311 = vld [vmem:[%s219 + $0x2a8] sm:$0xff]
                  %312 = vst [vmem:[%s220 + $0xe8] sm:$0xff] %v311
                  %v313 = vld [vmem:[%s219 + $0x2b0] sm:$0xff]
                  %314 = vst [vmem:[%s220 + $0xf0] sm:$0xff] %v313
                  %v315 = vld [vmem:[%s219 + $0x2b8] sm:$0xff]
                  %316 = vst [vmem:[%s220 + $0xf8] sm:$0xff] %v315
                  %v317 = vld [vmem:[%s219 + $0x2c0] sm:$0xff]
                  %318 = vst [vmem:[%s220 + $0x100] sm:$0xff] %v317
                  %v319 = vld [vmem:[%s219 + $0x2c8] sm:$0xff]
                  %320 = vst [vmem:[%s220 + $0x108] sm:$0xff] %v319
                  %v321 = vld [vmem:[%s219 + $0x2d0] sm:$0xff]
                  %322 = vst [vmem:[%s220 + $0x110] sm:$0xff] %v321
                  %v323 = vld [vmem:[%s219 + $0x2d8] sm:$0xff]
                  %324 = vst [vmem:[%s220 + $0x118] sm:$0xff] %v323
                  %v325 = vld [vmem:[%s219 + $0x2e0] sm:$0xff]
                  %326 = vst [vmem:[%s220 + $0x120] sm:$0xff] %v325
                  %v327 = vld [vmem:[%s219 + $0x2e8] sm:$0xff]
                  %328 = vst [vmem:[%s220 + $0x128] sm:$0xff] %v327
                  %v329 = vld [vmem:[%s219 + $0x2f0] sm:$0xff]
                  %330 = vst [vmem:[%s220 + $0x130] sm:$0xff] %v329
                  %v331 = vld [vmem:[%s219 + $0x2f8] sm:$0xff]
                  %332 = vst [vmem:[%s220 + $0x138] sm:$0xff] %v331
                  %v333 = vld [vmem:[%s219 + $0x300] sm:$0xff]
                  %334 = vst [vmem:[%s220 + $0x140] sm:$0xff] %v333
                  %v335 = vld [vmem:[%s219 + $0x308] sm:$0xff]
                  %336 = vst [vmem:[%s220 + $0x148] sm:$0xff] %v335
                  %v337 = vld [vmem:[%s219 + $0x310] sm:$0xff]
                  %338 = vst [vmem:[%s220 + $0x150] sm:$0xff] %v337
                  %v339 = vld [vmem:[%s219 + $0x318] sm:$0xff]
                  %340 = vst [vmem:[%s220 + $0x158] sm:$0xff] %v339
                  %v341 = vld [vmem:[%s219 + $0x320] sm:$0xff]
                  %342 = vst [vmem:[%s220 + $0x160] sm:$0xff] %v341
                  %v343 = vld [vmem:[%s219 + $0x328] sm:$0xff]
                  %344 = vst [vmem:[%s220 + $0x168] sm:$0xff] %v343
                  %v345 = vld [vmem:[%s219 + $0x330] sm:$0xff]
                  %346 = vst [vmem:[%s220 + $0x170] sm:$0xff] %v345
                  %v347 = vld [vmem:[%s219 + $0x338] sm:$0xff]
                  %348 = vst [vmem:[%s220 + $0x178] sm:$0xff] %v347
                  %s349 = sadd.s32 1, %s218
                  %p350 = scmp.ge.s32.totalorder %s349, %s209
                  %s351 = scalar_select %p350, 0, %s349
                  %s352 = smul.u32 %s351, 256
                  %s353 = smul.u32 %s351, 256
                  %s354 = scalar_lea.vmem %s178, %s352
                  %s355 = scalar_lea.vmem %s168, %s353 [#allocation2]
                $region52: #{dilated_conv3d_block.1} parent=46 // loop_footer
                  %s215 = sadd.s32 %s213, 1
                $region53: #{dilated_conv3d_block.1} parent=46 // loop_footer_branch
                  %212 = sbr.rel target = $region49
                $region54: #{dilated_conv3d_block.1} parent=46 // loop_exit
                  _
                %s356 = sshrl.u32 %s208, 5
                %s357 = sand.u32 %s208, 31
                %s358 = smul.u32 %s356, 32
                %s359 = smul.u32 128, %s358
                %s360 = sshra.s32 %s359, 4
                %s361 = scalar_lea.vmem %s178, %s360
                %s362 = smul.u32 128, %s358
                %s363 = sshra.s32 %s362, 4
                %s364 = scalar_lea.vmem %s168, %s363 [#allocation2]
                // While loop
                $region55: #{dilated_conv3d_block.1} parent=46 // loop_pre_header
                  _
                $region56: #{dilated_conv3d_block.1} parent=46 // loop_header
                  %s368 = sphi 0, %s370
                  %p369 = scmp.ge.s32.totalorder %s368, %s357
                  %s373 = sphi 0, %s382
                  %s374 = sphi %s361, %s385
                  %s375 = sphi %s364, %s386
                $region57: #{dilated_conv3d_block.1} parent=46 // loop_header_branch
                  %372 = sbr.rel (%p369) target = $region61
                $region58: #{dilated_conv3d_block.1} parent=46 // loop_body
                  %v376 = vld [vmem:[%s374] sm:$0xff]
                  %377 = vst [vmem:[%s375] sm:$0xff] %v376
                  %v378 = vld [vmem:[%s374 + $0x240] sm:$0xff]
                  %379 = vst [vmem:[%s375 + $0x80] sm:$0xff] %v378
                  %s380 = sadd.s32 1, %s373
                  %p381 = scmp.ge.s32.totalorder %s380, %s357
                  %s382 = scalar_select %p381, 0, %s380
                  %s383 = smul.u32 %s382, 8
                  %s384 = smul.u32 %s382, 8
                  %s385 = scalar_lea.vmem %s361, %s383
                  %s386 = scalar_lea.vmem %s364, %s384 [#allocation2]
                $region59: #{dilated_conv3d_block.1} parent=46 // loop_footer
                  %s370 = sadd.s32 %s368, 1
                $region60: #{dilated_conv3d_block.1} parent=46 // loop_footer_branch
                  %367 = sbr.rel target = $region56
                $region61: #{dilated_conv3d_block.1} parent=46 // loop_exit
                  _
              $region47: #{dilated_conv3d_block.1} parent=31 // pred_fallthru
                _
              %p387 = pneg %p204
              // Predicated region
              $region62: #{dilated_conv3d_block.1} parent=31 // pred_check
                _
              $region63: #{dilated_conv3d_block.1} parent=31 // pred_check_branch
                %389 = sbr.rel (%p204) target = $region65
              $region64: #{dilated_conv3d_block.1} parent=31 // pred_region
                %s390 = sand.u32 %s179, 7
                %s391 = ssub.s32 %s179, %s390
                %s392 = scalar_lea.vmem %s178, %s391
                %s393 = ssub.s32 %s179, %s390
                %s394 = scalar_lea.vmem %s168, %s393 [#allocation2]
                %s395 = sshrl.u32 %s179, 3
                %s396 = sshrl.u32 %s395, 5
                // While loop
                $region66: #{dilated_conv3d_block.1} parent=64 // loop_pre_header
                  _
                $region67: #{dilated_conv3d_block.1} parent=64 // loop_header
                  %s400 = sphi 0, %s402
                  %p401 = scmp.ge.s32.totalorder %s400, %s396
                  %s405 = sphi 0, %s538
                  %s406 = sphi %s178, %s541
                  %s407 = sphi %s168, %s542
                $region68: #{dilated_conv3d_block.1} parent=64 // loop_header_branch
                  %404 = sbr.rel (%p401) target = $region72
                $region69: #{dilated_conv3d_block.1} parent=64 // loop_body
                  %v408 = vld [vmem:[%s406] sm:$0xff]
                  %409 = vst [vmem:[%s407] sm:$0xff] %v408
                  %v410 = vld [vmem:[%s406 + $0x8] sm:$0xff]
                  %411 = vst [vmem:[%s407 + $0x8] sm:$0xff] %v410
                  %v412 = vld [vmem:[%s406 + $0x10] sm:$0xff]
                  %413 = vst [vmem:[%s407 + $0x10] sm:$0xff] %v412
                  %v414 = vld [vmem:[%s406 + $0x18] sm:$0xff]
                  %415 = vst [vmem:[%s407 + $0x18] sm:$0xff] %v414
                  %v416 = vld [vmem:[%s406 + $0x20] sm:$0xff]
                  %417 = vst [vmem:[%s407 + $0x20] sm:$0xff] %v416
                  %v418 = vld [vmem:[%s406 + $0x28] sm:$0xff]
                  %419 = vst [vmem:[%s407 + $0x28] sm:$0xff] %v418
                  %v420 = vld [vmem:[%s406 + $0x30] sm:$0xff]
                  %421 = vst [vmem:[%s407 + $0x30] sm:$0xff] %v420
                  %v422 = vld [vmem:[%s406 + $0x38] sm:$0xff]
                  %423 = vst [vmem:[%s407 + $0x38] sm:$0xff] %v422
                  %v424 = vld [vmem:[%s406 + $0x40] sm:$0xff]
                  %425 = vst [vmem:[%s407 + $0x40] sm:$0xff] %v424
                  %v426 = vld [vmem:[%s406 + $0x48] sm:$0xff]
                  %427 = vst [vmem:[%s407 + $0x48] sm:$0xff] %v426
                  %v428 = vld [vmem:[%s406 + $0x50] sm:$0xff]
                  %429 = vst [vmem:[%s407 + $0x50] sm:$0xff] %v428
                  %v430 = vld [vmem:[%s406 + $0x58] sm:$0xff]
                  %431 = vst [vmem:[%s407 + $0x58] sm:$0xff] %v430
                  %v432 = vld [vmem:[%s406 + $0x60] sm:$0xff]
                  %433 = vst [vmem:[%s407 + $0x60] sm:$0xff] %v432
                  %v434 = vld [vmem:[%s406 + $0x68] sm:$0xff]
                  %435 = vst [vmem:[%s407 + $0x68] sm:$0xff] %v434
                  %v436 = vld [vmem:[%s406 + $0x70] sm:$0xff]
                  %437 = vst [vmem:[%s407 + $0x70] sm:$0xff] %v436
                  %v438 = vld [vmem:[%s406 + $0x78] sm:$0xff]
                  %439 = vst [vmem:[%s407 + $0x78] sm:$0xff] %v438
                  %v440 = vld [vmem:[%s406 + $0x80] sm:$0xff]
                  %441 = vst [vmem:[%s407 + $0x80] sm:$0xff] %v440
                  %v442 = vld [vmem:[%s406 + $0x88] sm:$0xff]
                  %443 = vst [vmem:[%s407 + $0x88] sm:$0xff] %v442
                  %v444 = vld [vmem:[%s406 + $0x90] sm:$0xff]
                  %445 = vst [vmem:[%s407 + $0x90] sm:$0xff] %v444
                  %v446 = vld [vmem:[%s406 + $0x98] sm:$0xff]
                  %447 = vst [vmem:[%s407 + $0x98] sm:$0xff] %v446
                  %v448 = vld [vmem:[%s406 + $0xa0] sm:$0xff]
                  %449 = vst [vmem:[%s407 + $0xa0] sm:$0xff] %v448
                  %v450 = vld [vmem:[%s406 + $0xa8] sm:$0xff]
                  %451 = vst [vmem:[%s407 + $0xa8] sm:$0xff] %v450
                  %v452 = vld [vmem:[%s406 + $0xb0] sm:$0xff]
                  %453 = vst [vmem:[%s407 + $0xb0] sm:$0xff] %v452
                  %v454 = vld [vmem:[%s406 + $0xb8] sm:$0xff]
                  %455 = vst [vmem:[%s407 + $0xb8] sm:$0xff] %v454
                  %v456 = vld [vmem:[%s406 + $0xc0] sm:$0xff]
                  %457 = vst [vmem:[%s407 + $0xc0] sm:$0xff] %v456
                  %v458 = vld [vmem:[%s406 + $0xc8] sm:$0xff]
                  %459 = vst [vmem:[%s407 + $0xc8] sm:$0xff] %v458
                  %v460 = vld [vmem:[%s406 + $0xd0] sm:$0xff]
                  %461 = vst [vmem:[%s407 + $0xd0] sm:$0xff] %v460
                  %v462 = vld [vmem:[%s406 + $0xd8] sm:$0xff]
                  %463 = vst [vmem:[%s407 + $0xd8] sm:$0xff] %v462
                  %v464 = vld [vmem:[%s406 + $0xe0] sm:$0xff]
                  %465 = vst [vmem:[%s407 + $0xe0] sm:$0xff] %v464
                  %v466 = vld [vmem:[%s406 + $0xe8] sm:$0xff]
                  %467 = vst [vmem:[%s407 + $0xe8] sm:$0xff] %v466
                  %v468 = vld [vmem:[%s406 + $0xf0] sm:$0xff]
                  %469 = vst [vmem:[%s407 + $0xf0] sm:$0xff] %v468
                  %v470 = vld [vmem:[%s406 + $0xf8] sm:$0xff]
                  %471 = vst [vmem:[%s407 + $0xf8] sm:$0xff] %v470
                  %v472 = vld [vmem:[%s406 + $0x240] sm:$0xff]
                  %473 = vst [vmem:[%s407 + $0x80] sm:$0xff] %v472
                  %v474 = vld [vmem:[%s406 + $0x248] sm:$0xff]
                  %475 = vst [vmem:[%s407 + $0x88] sm:$0xff] %v474
                  %v476 = vld [vmem:[%s406 + $0x250] sm:$0xff]
                  %477 = vst [vmem:[%s407 + $0x90] sm:$0xff] %v476
                  %v478 = vld [vmem:[%s406 + $0x258] sm:$0xff]
                  %479 = vst [vmem:[%s407 + $0x98] sm:$0xff] %v478
                  %v480 = vld [vmem:[%s406 + $0x260] sm:$0xff]
                  %481 = vst [vmem:[%s407 + $0xa0] sm:$0xff] %v480
                  %v482 = vld [vmem:[%s406 + $0x268] sm:$0xff]
                  %483 = vst [vmem:[%s407 + $0xa8] sm:$0xff] %v482
                  %v484 = vld [vmem:[%s406 + $0x270] sm:$0xff]
                  %485 = vst [vmem:[%s407 + $0xb0] sm:$0xff] %v484
                  %v486 = vld [vmem:[%s406 + $0x278] sm:$0xff]
                  %487 = vst [vmem:[%s407 + $0xb8] sm:$0xff] %v486
                  %v488 = vld [vmem:[%s406 + $0x280] sm:$0xff]
                  %489 = vst [vmem:[%s407 + $0xc0] sm:$0xff] %v488
                  %v490 = vld [vmem:[%s406 + $0x288] sm:$0xff]
                  %491 = vst [vmem:[%s407 + $0xc8] sm:$0xff] %v490
                  %v492 = vld [vmem:[%s406 + $0x290] sm:$0xff]
                  %493 = vst [vmem:[%s407 + $0xd0] sm:$0xff] %v492
                  %v494 = vld [vmem:[%s406 + $0x298] sm:$0xff]
                  %495 = vst [vmem:[%s407 + $0xd8] sm:$0xff] %v494
                  %v496 = vld [vmem:[%s406 + $0x2a0] sm:$0xff]
                  %497 = vst [vmem:[%s407 + $0xe0] sm:$0xff] %v496
                  %v498 = vld [vmem:[%s406 + $0x2a8] sm:$0xff]
                  %499 = vst [vmem:[%s407 + $0xe8] sm:$0xff] %v498
                  %v500 = vld [vmem:[%s406 + $0x2b0] sm:$0xff]
                  %501 = vst [vmem:[%s407 + $0xf0] sm:$0xff] %v500
                  %v502 = vld [vmem:[%s406 + $0x2b8] sm:$0xff]
                  %503 = vst [vmem:[%s407 + $0xf8] sm:$0xff] %v502
                  %v504 = vld [vmem:[%s406 + $0x2c0] sm:$0xff]
                  %505 = vst [vmem:[%s407 + $0x100] sm:$0xff] %v504
                  %v506 = vld [vmem:[%s406 + $0x2c8] sm:$0xff]
                  %507 = vst [vmem:[%s407 + $0x108] sm:$0xff] %v506
                  %v508 = vld [vmem:[%s406 + $0x2d0] sm:$0xff]
                  %509 = vst [vmem:[%s407 + $0x110] sm:$0xff] %v508
                  %v510 = vld [vmem:[%s406 + $0x2d8] sm:$0xff]
                  %511 = vst [vmem:[%s407 + $0x118] sm:$0xff] %v510
                  %v512 = vld [vmem:[%s406 + $0x2e0] sm:$0xff]
                  %513 = vst [vmem:[%s407 + $0x120] sm:$0xff] %v512
                  %v514 = vld [vmem:[%s406 + $0x2e8] sm:$0xff]
                  %515 = vst [vmem:[%s407 + $0x128] sm:$0xff] %v514
                  %v516 = vld [vmem:[%s406 + $0x2f0] sm:$0xff]
                  %517 = vst [vmem:[%s407 + $0x130] sm:$0xff] %v516
                  %v518 = vld [vmem:[%s406 + $0x2f8] sm:$0xff]
                  %519 = vst [vmem:[%s407 + $0x138] sm:$0xff] %v518
                  %v520 = vld [vmem:[%s406 + $0x300] sm:$0xff]
                  %521 = vst [vmem:[%s407 + $0x140] sm:$0xff] %v520
                  %v522 = vld [vmem:[%s406 + $0x308] sm:$0xff]
                  %523 = vst [vmem:[%s407 + $0x148] sm:$0xff] %v522
                  %v524 = vld [vmem:[%s406 + $0x310] sm:$0xff]
                  %525 = vst [vmem:[%s407 + $0x150] sm:$0xff] %v524
                  %v526 = vld [vmem:[%s406 + $0x318] sm:$0xff]
                  %527 = vst [vmem:[%s407 + $0x158] sm:$0xff] %v526
                  %v528 = vld [vmem:[%s406 + $0x320] sm:$0xff]
                  %529 = vst [vmem:[%s407 + $0x160] sm:$0xff] %v528
                  %v530 = vld [vmem:[%s406 + $0x328] sm:$0xff]
                  %531 = vst [vmem:[%s407 + $0x168] sm:$0xff] %v530
                  %v532 = vld [vmem:[%s406 + $0x330] sm:$0xff]
                  %533 = vst [vmem:[%s407 + $0x170] sm:$0xff] %v532
                  %v534 = vld [vmem:[%s406 + $0x338] sm:$0xff]
                  %535 = vst [vmem:[%s407 + $0x178] sm:$0xff] %v534
                  %s536 = sadd.s32 1, %s405
                  %p537 = scmp.ge.s32.totalorder %s536, %s396
                  %s538 = scalar_select %p537, 0, %s536
                  %s539 = smul.u32 %s538, 256
                  %s540 = smul.u32 %s538, 256
                  %s541 = scalar_lea.vmem %s178, %s539
                  %s542 = scalar_lea.vmem %s168, %s540 [#allocation2]
                $region70: #{dilated_conv3d_block.1} parent=64 // loop_footer
                  %s402 = sadd.s32 %s400, 1
                $region71: #{dilated_conv3d_block.1} parent=64 // loop_footer_branch
                  %399 = sbr.rel target = $region67
                $region72: #{dilated_conv3d_block.1} parent=64 // loop_exit
                  _
                %s543 = sshrl.u32 %s395, 5
                %s544 = sand.u32 %s395, 31
                %s545 = smul.u32 %s543, 32
                %s546 = smul.u32 128, %s545
                %s547 = sshra.s32 %s546, 4
                %s548 = scalar_lea.vmem %s178, %s547
                %s549 = smul.u32 128, %s545
                %s550 = sshra.s32 %s549, 4
                %s551 = scalar_lea.vmem %s168, %s550 [#allocation2]
                // While loop
                $region73: #{dilated_conv3d_block.1} parent=64 // loop_pre_header
                  _
                $region74: #{dilated_conv3d_block.1} parent=64 // loop_header
                  %s555 = sphi 0, %s557
                  %p556 = scmp.ge.s32.totalorder %s555, %s544
                  %s560 = sphi 0, %s569
                  %s561 = sphi %s548, %s572
                  %s562 = sphi %s551, %s573
                $region75: #{dilated_conv3d_block.1} parent=64 // loop_header_branch
                  %559 = sbr.rel (%p556) target = $region79
                $region76: #{dilated_conv3d_block.1} parent=64 // loop_body
                  %v563 = vld [vmem:[%s561] sm:$0xff]
                  %564 = vst [vmem:[%s562] sm:$0xff] %v563
                  %v565 = vld [vmem:[%s561 + $0x240] sm:$0xff]
                  %566 = vst [vmem:[%s562 + $0x80] sm:$0xff] %v565
                  %s567 = sadd.s32 1, %s560
                  %p568 = scmp.ge.s32.totalorder %s567, %s544
                  %s569 = scalar_select %p568, 0, %s567
                  %s570 = smul.u32 %s569, 8
                  %s571 = smul.u32 %s569, 8
                  %s572 = scalar_lea.vmem %s548, %s570
                  %s573 = scalar_lea.vmem %s551, %s571 [#allocation2]
                $region77: #{dilated_conv3d_block.1} parent=64 // loop_footer
                  %s557 = sadd.s32 %s555, 1
                $region78: #{dilated_conv3d_block.1} parent=64 // loop_footer_branch
                  %554 = sbr.rel target = $region74
                $region79: #{dilated_conv3d_block.1} parent=64 // loop_exit
                  _
                %s574 = sshllo.u32 0, %s390
                loop: start=0, step=1, limit=1
                $region80: #{dilated_conv3d_block.1} parent=64 // loop_pre_header
                  _
                $region81: #{dilated_conv3d_block.1} parent=64 // loop_header
                  %s576 = sphi 0, %s580
                  %p577 = scmp.ge.s32.totalorder %s576, 1
                  %s581 = sphi %s392, %s392
                  %s582 = sphi %s394, %s394
                $region82: #{dilated_conv3d_block.1} parent=64 // loop_header_branch
                  %579 = sbr.rel (%p577) target = $region86
                $region83: #{dilated_conv3d_block.1} parent=64 // loop_body
                  %v583 = vld [vmem:[%s581] sm:%s574]
                  %584 = vst [vmem:[%s582] sm:%s574] %v583
                  %v585 = vld [vmem:[%s581 + $0x240] sm:%s574]
                  %586 = vst [vmem:[%s582 + $0x80] sm:%s574] %v585
                $region84: #{dilated_conv3d_block.1} parent=64 // loop_footer
                  %s580 = sadd.s32 1, %s576
                $region85: #{dilated_conv3d_block.1} parent=64 // loop_footer_branch
                  %575 = sbr.rel target = $region81
                $region86: #{dilated_conv3d_block.1} parent=64 // loop_exit
                  _
              $region65: #{dilated_conv3d_block.1} parent=31 // pred_fallthru
                _
            $region32: #{dilated_conv3d_block.1} parent=27 // pred_fallthru
              _
            // Predicated region
            $region33: #{dilated_conv3d_block.1} parent=27 // pred_check
              %p187 = pneg %p183
            $region34: #{dilated_conv3d_block.1} parent=27 // pred_check_branch
              %189 = sbr.rel (%p187) target = $region36
            $region35: #{dilated_conv3d_block.1} parent=27 // pred_region
              %s190 = sshllo.u32 0, %s179
              loop: start=0, step=1, limit=1
              $region37: #{dilated_conv3d_block.1} parent=35 // loop_pre_header
                _
              $region38: #{dilated_conv3d_block.1} parent=35 // loop_header
                %s192 = sphi 0, %s196
                %p193 = scmp.ge.s32.totalorder %s192, 1
                %s197 = sphi %s178, %s178
                %s198 = sphi %s168, %s168
              $region39: #{dilated_conv3d_block.1} parent=35 // loop_header_branch
                %195 = sbr.rel (%p193) target = $region43
              $region40: #{dilated_conv3d_block.1} parent=35 // loop_body
                %v199 = vld [vmem:[%s197] sm:%s190]
                %200 = vst [vmem:[%s198] sm:%s190] %v199
                %v201 = vld [vmem:[%s197 + $0x240] sm:%s190]
                %202 = vst [vmem:[%s198 + $0x80] sm:%s190] %v201
              $region41: #{dilated_conv3d_block.1} parent=35 // loop_footer
                %s196 = sadd.s32 1, %s192
              $region42: #{dilated_conv3d_block.1} parent=35 // loop_footer_branch
                %191 = sbr.rel target = $region38
              $region43: #{dilated_conv3d_block.1} parent=35 // loop_exit
                _
            $region36: #{dilated_conv3d_block.1} parent=27 // pred_fallthru
              _
          $region28: #{dilated_conv3d_block.1} parent=23 // pred_fallthru
            _
          %587 = vnop
        $region24: #{dilated_conv3d_block.1} parent=19 // pred_fallthru
          _
        // Predicated region
        $region87: #{dilated_conv3d_block.1} parent=19 // pred_check
          %p588 = pneg %p75
        $region88: #{dilated_conv3d_block.1} parent=19 // pred_check_branch
          %590 = sbr.rel (%p588) target = $region90
        $region89: #{dilated_conv3d_block.1} parent=19 // pred_region
          %s591 = sand.u32 %s65, 1
          %s592 = sand.u32 %s65, 1
          %s593 = smul.addr %s592, 128
          %s594 = scalar_lea.vmem [#allocation3], %s593
          %s595 = sadd.s32 %s17, 1
          %s596 = smul.u32 %s595, 2
          %s597 = smul.u32 16, %s596
          %s598 = smul.addr %s16, 288
          %s599 = sadd.s32 %s597, %s598
          %s600 = smul.addr %s599, 4
          %s601 = scalar_lea.vmem %s1, %s600
          // Predicated region
          $region91: #{dilated_conv3d_block.1} parent=89 // pred_check
            _
          $region92: #{dilated_conv3d_block.1} parent=89 // pred_check_branch
            %603 = sbr.rel (0) target = $region94
          $region93: #{dilated_conv3d_block.1} parent=89 // pred_region
            // Predicated region
            $region95: #{dilated_conv3d_block.1} parent=93 // pred_check
              _
            $region96: #{dilated_conv3d_block.1} parent=93 // pred_check_branch
              %605 = sbr.rel (0) target = $region98
            $region97: #{dilated_conv3d_block.1} parent=93 // pred_region
              loop: start=0, step=1, limit=1
              $region99: #{dilated_conv3d_block.1} parent=97 // loop_pre_header
                _
              $region100: #{dilated_conv3d_block.1} parent=97 // loop_header
                %s607 = sphi 0, %s611
                %p608 = scmp.ge.s32.totalorder %s607, 1
                %s612 = sphi %s601, %s601
                %s613 = sphi %s594, %s594
              $region101: #{dilated_conv3d_block.1} parent=97 // loop_header_branch
                %610 = sbr.rel (%p608) target = $region105
              $region102: #{dilated_conv3d_block.1} parent=97 // loop_body
                %v614 = vld [vmem:[%s612] sm:$0xff]
                %615 = vst [vmem:[%s613] sm:$0xff] %v614
                %v616 = vld [vmem:[%s612 + $0x8] sm:$0xff]
                %617 = vst [vmem:[%s613 + $0x8] sm:$0xff] %v616
                %v618 = vld [vmem:[%s612 + $0x10] sm:$0xff]
                %619 = vst [vmem:[%s613 + $0x10] sm:$0xff] %v618
                %v620 = vld [vmem:[%s612 + $0x18] sm:$0xff]
                %621 = vst [vmem:[%s613 + $0x18] sm:$0xff] %v620
                %v622 = vld [vmem:[%s612 + $0x20] sm:$0xff]
                %623 = vst [vmem:[%s613 + $0x20] sm:$0xff] %v622
                %v624 = vld [vmem:[%s612 + $0x28] sm:$0xff]
                %625 = vst [vmem:[%s613 + $0x28] sm:$0xff] %v624
                %v626 = vld [vmem:[%s612 + $0x30] sm:$0xff]
                %627 = vst [vmem:[%s613 + $0x30] sm:$0xff] %v626
                %v628 = vld [vmem:[%s612 + $0x38] sm:$0xff]
                %629 = vst [vmem:[%s613 + $0x38] sm:$0xff] %v628
                %v630 = vld [vmem:[%s612 + $0x240] sm:$0xff]
                %631 = vst [vmem:[%s613 + $0x40] sm:$0xff] %v630
                %v632 = vld [vmem:[%s612 + $0x248] sm:$0xff]
                %633 = vst [vmem:[%s613 + $0x48] sm:$0xff] %v632
                %v634 = vld [vmem:[%s612 + $0x250] sm:$0xff]
                %635 = vst [vmem:[%s613 + $0x50] sm:$0xff] %v634
                %v636 = vld [vmem:[%s612 + $0x258] sm:$0xff]
                %637 = vst [vmem:[%s613 + $0x58] sm:$0xff] %v636
                %v638 = vld [vmem:[%s612 + $0x260] sm:$0xff]
                %639 = vst [vmem:[%s613 + $0x60] sm:$0xff] %v638
                %v640 = vld [vmem:[%s612 + $0x268] sm:$0xff]
                %641 = vst [vmem:[%s613 + $0x68] sm:$0xff] %v640
                %v642 = vld [vmem:[%s612 + $0x270] sm:$0xff]
                %643 = vst [vmem:[%s613 + $0x70] sm:$0xff] %v642
                %v644 = vld [vmem:[%s612 + $0x278] sm:$0xff]
                %645 = vst [vmem:[%s613 + $0x78] sm:$0xff] %v644
              $region103: #{dilated_conv3d_block.1} parent=97 // loop_footer
                %s611 = sadd.s32 1, %s607
              $region104: #{dilated_conv3d_block.1} parent=97 // loop_footer_branch
                %606 = sbr.rel target = $region100
              $region105: #{dilated_conv3d_block.1} parent=97 // loop_exit
                _
            $region98: #{dilated_conv3d_block.1} parent=93 // pred_fallthru
              _
            // Predicated region
            $region106: #{dilated_conv3d_block.1} parent=93 // pred_check
              _
            $region107: #{dilated_conv3d_block.1} parent=93 // pred_check_branch
              %647 = sbr.rel target = $region109
            $region108: #{dilated_conv3d_block.1} parent=93 // pred_region
              _
            $region109: #{dilated_conv3d_block.1} parent=93 // pred_fallthru
              _
          $region94: #{dilated_conv3d_block.1} parent=89 // pred_fallthru
            _
          %648 = vnop
        $region90: #{dilated_conv3d_block.1} parent=19 // pred_fallthru
          _
      $region20: #{dilated_conv3d_block.1} parent=5 // pred_fallthru
        _
      %p649 = scmp.le.s32.totalorder 1, %s9
      %p650 = scmp.lt.s32.totalorder %s9, 5
      %p651 = pnand %p649, %p650
      %p652 = pneg %p651
      // Predicated region
      $region110: #{dilated_conv3d_block.1} parent=5 // pred_check
        _
      $region111: #{dilated_conv3d_block.1} parent=5 // pred_check_branch
        %654 = sbr.rel (%p651) target = $region113
      $region112: #{dilated_conv3d_block.1} parent=5 // pred_region
        %s655 = ssub.s32 %s9, 1
        %s656 = sand.u32 %s36, 1
        %s657 = sand.u32 %s36, 1
        %s658 = smul.addr %s657, 256
        %s659 = scalar_lea.vmem [#allocation2], %s658
        // Predicated region
        $region114: #{dilated_conv3d_block.1} parent=112 // pred_check
          %p660 = pneg %p49
        $region115: #{dilated_conv3d_block.1} parent=112 // pred_check_branch
          %662 = sbr.rel (%p660) target = $region117
        $region116: #{dilated_conv3d_block.1} parent=112 // pred_region
          _
        $region117: #{dilated_conv3d_block.1} parent=112 // pred_fallthru
          _
        %s663 = sand.u32 %s68, 1
        %s664 = sand.u32 %s68, 1
        %s665 = smul.addr %s664, 128
        %s666 = scalar_lea.vmem [#allocation3], %s665
        // Predicated region
        $region118: #{dilated_conv3d_block.1} parent=112 // pred_check
          %p667 = pneg %p81
        $region119: #{dilated_conv3d_block.1} parent=112 // pred_check_branch
          %669 = sbr.rel (%p667) target = $region121
        $region120: #{dilated_conv3d_block.1} parent=112 // pred_region
          _
        $region121: #{dilated_conv3d_block.1} parent=112 // pred_fallthru
          _
        %s670 = sand.u32 %s36, 1
        %s671 = sand.u32 %s36, 1
        %s672 = smul.addr %s671, 256
        %s673 = scalar_lea.vmem [#allocation2], %s672
        %p674 = pneg %p49
        %p675 = pneg %p46
        %s676 = sand.u32 %s68, 1
        %s677 = sand.u32 %s68, 1
        %s678 = smul.addr %s677, 128
        %s679 = scalar_lea.vmem [#allocation3], %s678
        %p680 = pneg %p81
        %p681 = pneg %p78
        %p682 = scmp.lt.s32.totalorder %s18, 0
        %s683 = scalar_select %p682, %s18, 0
        %s684 = smul.addr %s683, 4
        %s685 = smul.addr %s684, 4
        %s686 = scalar_lea.vmem %s2, %s685
        %p687 = pneg %p107
        %p688 = pneg %p104
        %p689 = pneg %p135
        %p690 = pneg %p132
        %s691 = smul.u32 32, %s19
        %p692 = scmp.lt.s32.totalorder %s18, 0
        %s693 = scalar_select %p692, %s18, 0
        %p694 = scmp.lt.s32.totalorder %s691, 127
        %s695 = scalar_select %p694, %s691, 127
        %s696 = smul.addr %s693, 128
        %s697 = sadd.s32 %s695, %s696
        %s698 = smul.addr %s697, 8
        %s699 = scalar_lea.vmem %s3, %s698
        %s700 = smul.u32 32, %s19
        %s701 = ssub.s32 144, %s700
        %p702 = scmp.lt.s32.totalorder %s701, 32
        %s703 = scalar_select %p702, %s701, 32
        %s704 = smul.u32 128, %s703
        %s705 = sadd.s32 %s19, 1
        %s706 = smul.u32 %s705, 2
        %s707 = smul.u32 16, %s706
        %p708 = scmp.lt.s32.totalorder %s18, 0
        %s709 = scalar_select %p708, %s18, 0
        %s710 = smul.addr %s709, 4
        %s711 = smul.addr %s710, 4
        %s712 = scalar_lea.vmem %s2, %s711
        %s713 = smul.u32 32, %s19
        %p714 = scmp.lt.s32.totalorder %s18, 0
        %s715 = scalar_select %p714, %s18, 0
        %p716 = scmp.lt.s32.totalorder %s713, 127
        %s717 = scalar_select %p716, %s713, 127
        %s718 = smul.addr %s715, 128
        %s719 = sadd.s32 %s717, %s718
        %s720 = smul.addr %s719, 8
        %s721 = scalar_lea.vmem %s3, %s720
        %s722 = smul.u32 32, %s19
        %v724 = vld [vmem:[%s659] sm:$0xff]
        %v725 = vld [vmem:[%s659 + $0x8] sm:$0xff]
        %v726 = vld [vmem:[%s659 + $0x10] sm:$0xff]
        %v727 = vld [vmem:[%s659 + $0x18] sm:$0xff]
        %v728 = vld [vmem:[%s659 + $0x20] sm:$0xff]
        %v729 = vld [vmem:[%s659 + $0x28] sm:$0xff]
        %v730 = vld [vmem:[%s659 + $0x30] sm:$0xff]
        %v731 = vld [vmem:[%s659 + $0x38] sm:$0xff]
        %v732 = vld [vmem:[%s659 + $0x40] sm:$0xff]
        %v733 = vld [vmem:[%s659 + $0x48] sm:$0xff]
        %v734 = vld [vmem:[%s659 + $0x50] sm:$0xff]
        %v735 = vld [vmem:[%s659 + $0x58] sm:$0xff]
        %v736 = vld [vmem:[%s659 + $0x60] sm:$0xff]
        %v737 = vld [vmem:[%s659 + $0x68] sm:$0xff]
        %v738 = vld [vmem:[%s659 + $0x70] sm:$0xff]
        %v739 = vld [vmem:[%s659 + $0x78] sm:$0xff]
        %v740 = vld [vmem:[%s659 + $0x80] sm:$0xff]
        %v741 = vld [vmem:[%s659 + $0x88] sm:$0xff]
        %v742 = vld [vmem:[%s659 + $0x90] sm:$0xff]
        %v743 = vld [vmem:[%s659 + $0x98] sm:$0xff]
        %v744 = vld [vmem:[%s659 + $0xa0] sm:$0xff]
        %v745 = vld [vmem:[%s659 + $0xa8] sm:$0xff]
        %v746 = vld [vmem:[%s659 + $0xb0] sm:$0xff]
        %v747 = vld [vmem:[%s659 + $0xb8] sm:$0xff]
        %v748 = vld [vmem:[%s659 + $0xc0] sm:$0xff]
        %v749 = vld [vmem:[%s659 + $0xc8] sm:$0xff]
        %v750 = vld [vmem:[%s659 + $0xd0] sm:$0xff]
        %v751 = vld [vmem:[%s659 + $0xd8] sm:$0xff]
        %v752 = vld [vmem:[%s659 + $0xe0] sm:$0xff]
        %v753 = vld [vmem:[%s659 + $0xe8] sm:$0xff]
        %v754 = vld [vmem:[%s659 + $0xf0] sm:$0xff]
        %v755 = vld [vmem:[%s659 + $0xf8] sm:$0xff]
        %v756 = vld [vmem:[%s666] sm:$0xff]
        %v757 = vld [vmem:[%s666 + $0x8] sm:$0xff]
        %v758 = vld [vmem:[%s666 + $0x10] sm:$0xff]
        %v759 = vld [vmem:[%s666 + $0x18] sm:$0xff]
        %v760 = vld [vmem:[%s666 + $0x20] sm:$0xff]
        %v761 = vld [vmem:[%s666 + $0x28] sm:$0xff]
        %v762 = vld [vmem:[%s666 + $0x30] sm:$0xff]
        %v763 = vld [vmem:[%s666 + $0x40] sm:$0xff]
        %v764 = vld [vmem:[%s666 + $0x48] sm:$0xff]
        %v765 = vld [vmem:[%s666 + $0x50] sm:$0xff]
        %v766 = vld [vmem:[%s666 + $0x58] sm:$0xff]
        %v767 = vld [vmem:[%s666 + $0x60] sm:$0xff]
        %v768 = vld [vmem:[%s666 + $0x68] sm:$0xff]
        %v769 = vld [vmem:[%s666 + $0x70] sm:$0xff]
        %v802 = vunpack.c.l.b16 %v724
        %v803 = vunpack.c.h.b16 %v724
        %v804 = vunpack.c.l.b16 %v725
        %v805 = vunpack.c.h.b16 %v725
        %v806 = vunpack.c.l.b16 %v726
        %v807 = vunpack.c.h.b16 %v726
        %v808 = vunpack.c.l.b16 %v727
        %v809 = vunpack.c.h.b16 %v727
        %v810 = vunpack.c.l.b16 %v728
        %v811 = vunpack.c.h.b16 %v728
        %v812 = vunpack.c.l.b16 %v729
        %v813 = vunpack.c.h.b16 %v729
        %v814 = vunpack.c.l.b16 %v730
        %v815 = vunpack.c.h.b16 %v730
        %v816 = vunpack.c.l.b16 %v731
        %v817 = vunpack.c.h.b16 %v731
        %v818 = vunpack.c.l.b16 %v732
        %v819 = vunpack.c.h.b16 %v732
        %v820 = vunpack.c.l.b16 %v733
        %v821 = vunpack.c.h.b16 %v733
        %v822 = vunpack.c.l.b16 %v734
        %v823 = vunpack.c.h.b16 %v734
        %v824 = vunpack.c.l.b16 %v735
        %v825 = vunpack.c.h.b16 %v735
        %v826 = vunpack.c.l.b16 %v736
        %v827 = vunpack.c.h.b16 %v736
        %v828 = vunpack.c.l.b16 %v737
        %v829 = vunpack.c.h.b16 %v737
        %v830 = vunpack.c.l.b16 %v738
        %v831 = vunpack.c.h.b16 %v738
        %v832 = vunpack.c.l.b16 %v739
        %v833 = vunpack.c.h.b16 %v739
        %v834 = vunpack.c.l.b16 %v740
        %v835 = vunpack.c.h.b16 %v740
        %v836 = vunpack.c.l.b16 %v741
        %v837 = vunpack.c.h.b16 %v741
        %v838 = vunpack.c.l.b16 %v742
        %v839 = vunpack.c.h.b16 %v742
        %v840 = vunpack.c.l.b16 %v743
        %v841 = vunpack.c.h.b16 %v743
        %v842 = vunpack.c.l.b16 %v744
        %v843 = vunpack.c.h.b16 %v744
        %v844 = vunpack.c.l.b16 %v745
        %v845 = vunpack.c.h.b16 %v745
        %v846 = vunpack.c.l.b16 %v746
        %v847 = vunpack.c.h.b16 %v746
        %v848 = vunpack.c.l.b16 %v747
        %v849 = vunpack.c.h.b16 %v747
        %v850 = vunpack.c.l.b16 %v748
        %v851 = vunpack.c.h.b16 %v748
        %v852 = vunpack.c.l.b16 %v749
        %v853 = vunpack.c.h.b16 %v749
        %v854 = vunpack.c.l.b16 %v750
        %v855 = vunpack.c.h.b16 %v750
        %v856 = vunpack.c.l.b16 %v751
        %v857 = vunpack.c.h.b16 %v751
        %v858 = vunpack.c.l.b16 %v752
        %v859 = vunpack.c.h.b16 %v752
        %v860 = vunpack.c.l.b16 %v753
        %v861 = vunpack.c.h.b16 %v753
        %v862 = vunpack.c.l.b16 %v754
        %v863 = vunpack.c.h.b16 %v754
        %v864 = vunpack.c.l.b16 %v755
        %v865 = vunpack.c.h.b16 %v755
        %v866 = vpack.c.b16 %v834, %v802
        %v867 = vpack.c.b16 %v835, %v803
        %v868 = vpack.c.b16 %v836, %v804
        %v869 = vpack.c.b16 %v837, %v805
        %v870 = vpack.c.b16 %v838, %v806
        %v871 = vpack.c.b16 %v839, %v807
        %v872 = vpack.c.b16 %v840, %v808
        %v873 = vpack.c.b16 %v841, %v809
        %v874 = vpack.c.b16 %v842, %v810
        %v875 = vpack.c.b16 %v843, %v811
        %v876 = vpack.c.b16 %v844, %v812
        %v877 = vpack.c.b16 %v845, %v813
        %v878 = vpack.c.b16 %v846, %v814
        %v879 = vpack.c.b16 %v847, %v815
        %v880 = vpack.c.b16 %v848, %v816
        %v881 = vpack.c.b16 %v849, %v817
        %v882 = vpack.c.b16 %v850, %v818
        %v883 = vpack.c.b16 %v851, %v819
        %v884 = vpack.c.b16 %v852, %v820
        %v885 = vpack.c.b16 %v853, %v821
        %v886 = vpack.c.b16 %v854, %v822
        %v887 = vpack.c.b16 %v855, %v823
        %v888 = vpack.c.b16 %v856, %v824
        %v889 = vpack.c.b16 %v857, %v825
        %v890 = vpack.c.b16 %v858, %v826
        %v891 = vpack.c.b16 %v859, %v827
        %v892 = vpack.c.b16 %v860, %v828
        %v893 = vpack.c.b16 %v861, %v829
        %v894 = vpack.c.b16 %v862, %v830
        %v895 = vpack.c.b16 %v863, %v831
        %v896 = vpack.c.b16 %v864, %v832
        %v897 = vpack.c.b16 %v865, %v833
        %v944 = vunpack.c.l.b16 %v756
        %v945 = vunpack.c.h.b16 %v756
        %v946 = vunpack.c.l.b16 %v757
        %v947 = vunpack.c.h.b16 %v757
        %v948 = vunpack.c.l.b16 %v758
        %v949 = vunpack.c.h.b16 %v758
        %v950 = vunpack.c.l.b16 %v759
        %v951 = vunpack.c.h.b16 %v759
        %v952 = vunpack.c.l.b16 %v760
        %v953 = vunpack.c.h.b16 %v760
        %v954 = vunpack.c.l.b16 %v761
        %v955 = vunpack.c.h.b16 %v761
        %v956 = vunpack.c.l.b16 %v762
        %v957 = vunpack.c.h.b16 %v762
        %v958 = vunpack.c.l.b16 %v763
        %v959 = vunpack.c.h.b16 %v763
        %v960 = vunpack.c.l.b16 %v764
        %v961 = vunpack.c.h.b16 %v764
        %v962 = vunpack.c.l.b16 %v765
        %v963 = vunpack.c.h.b16 %v765
        %v964 = vunpack.c.l.b16 %v766
        %v965 = vunpack.c.h.b16 %v766
        %v966 = vunpack.c.l.b16 %v767
        %v967 = vunpack.c.h.b16 %v767
        %v968 = vunpack.c.l.b16 %v768
        %v969 = vunpack.c.h.b16 %v768
        %v970 = vunpack.c.l.b16 %v769
        %v971 = vunpack.c.h.b16 %v769
        %v972 = vpack.c.b16 %v958, %v944
        %v973 = vpack.c.b16 %v959, %v945
        %v974 = vpack.c.b16 %v960, %v946
        %v975 = vpack.c.b16 %v961, %v947
        %v976 = vpack.c.b16 %v962, %v948
        %v977 = vpack.c.b16 %v963, %v949
        %v978 = vpack.c.b16 %v964, %v950
        %v979 = vpack.c.b16 %v965, %v951
        %v980 = vpack.c.b16 %v966, %v952
        %v981 = vpack.c.b16 %v967, %v953
        %v982 = vpack.c.b16 %v968, %v954
        %v983 = vpack.c.b16 %v969, %v955
        %v984 = vpack.c.b16 %v970, %v956
        %v985 = vpack.c.b16 %v971, %v957
        %986 = vrot.lane.b32.xlu0 %v866, 126
        %v987 = vpop.permute.xlu0 %986
        %988 = vrot.lane.b32.xlu0 %v867, 126
        %v989 = vpop.permute.xlu0 %988
        %990 = vrot.lane.b32.xlu0 %v868, 126
        %v991 = vpop.permute.xlu0 %990
        %992 = vrot.lane.b32.xlu0 %v869, 126
        %v993 = vpop.permute.xlu0 %992
        %994 = vrot.lane.b32.xlu0 %v870, 126
        %v995 = vpop.permute.xlu0 %994
        %996 = vrot.lane.b32.xlu0 %v871, 126
        %v997 = vpop.permute.xlu0 %996
        %998 = vrot.lane.b32.xlu0 %v872, 126
        %v999 = vpop.permute.xlu0 %998
        %1000 = vrot.lane.b32.xlu0 %v873, 126
        %v1001 = vpop.permute.xlu0 %1000
        %1002 = vrot.lane.b32.xlu0 %v874, 126
        %v1003 = vpop.permute.xlu0 %1002
        %1004 = vrot.lane.b32.xlu0 %v875, 126
        %v1005 = vpop.permute.xlu0 %1004
        %1006 = vrot.lane.b32.xlu0 %v876, 126
        %v1007 = vpop.permute.xlu0 %1006
        %1008 = vrot.lane.b32.xlu0 %v877, 126
        %v1009 = vpop.permute.xlu0 %1008
        %1010 = vrot.lane.b32.xlu0 %v878, 126
        %v1011 = vpop.permute.xlu0 %1010
        %1012 = vrot.lane.b32.xlu0 %v879, 126
        %v1013 = vpop.permute.xlu0 %1012
        %1014 = vrot.lane.b32.xlu0 %v880, 126
        %v1015 = vpop.permute.xlu0 %1014
        %1016 = vrot.lane.b32.xlu0 %v881, 126
        %v1017 = vpop.permute.xlu0 %1016
        %1018 = vrot.lane.b32.xlu0 %v882, 126
        %v1019 = vpop.permute.xlu0 %1018
        %1020 = vrot.lane.b32.xlu0 %v883, 126
        %v1021 = vpop.permute.xlu0 %1020
        %1022 = vrot.lane.b32.xlu0 %v884, 126
        %v1023 = vpop.permute.xlu0 %1022
        %1024 = vrot.lane.b32.xlu0 %v885, 126
        %v1025 = vpop.permute.xlu0 %1024
        %1026 = vrot.lane.b32.xlu0 %v886, 126
        %v1027 = vpop.permute.xlu0 %1026
        %1028 = vrot.lane.b32.xlu0 %v887, 126
        %v1029 = vpop.permute.xlu0 %1028
        %1030 = vrot.lane.b32.xlu0 %v888, 126
        %v1031 = vpop.permute.xlu0 %1030
        %1032 = vrot.lane.b32.xlu0 %v889, 126
        %v1033 = vpop.permute.xlu0 %1032
        %1034 = vrot.lane.b32.xlu0 %v890, 126
        %v1035 = vpop.permute.xlu0 %1034
        %1036 = vrot.lane.b32.xlu0 %v891, 126
        %v1037 = vpop.permute.xlu0 %1036
        %1038 = vrot.lane.b32.xlu0 %v892, 126
        %v1039 = vpop.permute.xlu0 %1038
        %1040 = vrot.lane.b32.xlu0 %v893, 126
        %v1041 = vpop.permute.xlu0 %1040
        %1042 = vrot.lane.b32.xlu0 %v894, 126
        %v1043 = vpop.permute.xlu0 %1042
        %1044 = vrot.lane.b32.xlu0 %v895, 126
        %v1045 = vpop.permute.xlu0 %1044
        %1046 = vrot.lane.b32.xlu0 %v896, 126
        %v1047 = vpop.permute.xlu0 %1046
        %1048 = vrot.lane.b32.xlu0 %v897, 126
        %v1049 = vpop.permute.xlu0 %1048
        %1050 = vrot.lane.b32.xlu0 %v972, 126
        %v1051 = vpop.permute.xlu0 %1050
        %vm1052 = vcmask 1031168
        %v1053 = vsel %vm1052, %v987, %v989
        %v1054 = vsel %vm1052, %v989, %v991
        %v1055 = vsel %vm1052, %v991, %v993
        %v1056 = vsel %vm1052, %v993, %v995
        %v1057 = vsel %vm1052, %v995, %v997
        %v1058 = vsel %vm1052, %v997, %v999
        %v1059 = vsel %vm1052, %v999, %v1001
        %v1060 = vsel %vm1052, %v1001, %v1003
        %v1061 = vsel %vm1052, %v1003, %v1005
        %v1062 = vsel %vm1052, %v1005, %v1007
        %v1063 = vsel %vm1052, %v1007, %v1009
        %v1064 = vsel %vm1052, %v1009, %v1011
        %v1065 = vsel %vm1052, %v1011, %v1013
        %v1066 = vsel %vm1052, %v1013, %v1015
        %v1067 = vsel %vm1052, %v1015, %v1017
        %v1068 = vsel %vm1052, %v1017, %v1019
        %v1069 = vsel %vm1052, %v1019, %v1021
        %v1070 = vsel %vm1052, %v1021, %v1023
        %v1071 = vsel %vm1052, %v1023, %v1025
        %v1072 = vsel %vm1052, %v1025, %v1027
        %v1073 = vsel %vm1052, %v1027, %v1029
        %v1074 = vsel %vm1052, %v1029, %v1031
        %v1075 = vsel %vm1052, %v1031, %v1033
        %v1076 = vsel %vm1052, %v1033, %v1035
        %v1077 = vsel %vm1052, %v1035, %v1037
        %v1078 = vsel %vm1052, %v1037, %v1039
        %v1079 = vsel %vm1052, %v1039, %v1041
        %v1080 = vsel %vm1052, %v1041, %v1043
        %v1081 = vsel %vm1052, %v1043, %v1045
        %v1082 = vsel %vm1052, %v1045, %v1047
        %v1083 = vsel %vm1052, %v1047, %v1049
        %v1084 = vsel %vm1052, %v1049, %v1051
        %1117 = vrot.lane.b32.xlu0 %v866, 124
        %v1118 = vpop.permute.xlu0 %1117
        %1119 = vrot.lane.b32.xlu0 %v867, 124
        %v1120 = vpop.permute.xlu0 %1119
        %1121 = vrot.lane.b32.xlu0 %v868, 124
        %v1122 = vpop.permute.xlu0 %1121
        %1123 = vrot.lane.b32.xlu0 %v869, 124
        %v1124 = vpop.permute.xlu0 %1123
        %1125 = vrot.lane.b32.xlu0 %v870, 124
        %v1126 = vpop.permute.xlu0 %1125
        %1127 = vrot.lane.b32.xlu0 %v871, 124
        %v1128 = vpop.permute.xlu0 %1127
        %1129 = vrot.lane.b32.xlu0 %v872, 124
        %v1130 = vpop.permute.xlu0 %1129
        %1131 = vrot.lane.b32.xlu0 %v873, 124
        %v1132 = vpop.permute.xlu0 %1131
        %1133 = vrot.lane.b32.xlu0 %v874, 124
        %v1134 = vpop.permute.xlu0 %1133
        %1135 = vrot.lane.b32.xlu0 %v875, 124
        %v1136 = vpop.permute.xlu0 %1135
        %1137 = vrot.lane.b32.xlu0 %v876, 124
        %v1138 = vpop.permute.xlu0 %1137
        %1139 = vrot.lane.b32.xlu0 %v877, 124
        %v1140 = vpop.permute.xlu0 %1139
        %1141 = vrot.lane.b32.xlu0 %v878, 124
        %v1142 = vpop.permute.xlu0 %1141
        %1143 = vrot.lane.b32.xlu0 %v879, 124
        %v1144 = vpop.permute.xlu0 %1143
        %1145 = vrot.lane.b32.xlu0 %v880, 124
        %v1146 = vpop.permute.xlu0 %1145
        %1147 = vrot.lane.b32.xlu0 %v881, 124
        %v1148 = vpop.permute.xlu0 %1147
        %1149 = vrot.lane.b32.xlu0 %v882, 124
        %v1150 = vpop.permute.xlu0 %1149
        %1151 = vrot.lane.b32.xlu0 %v883, 124
        %v1152 = vpop.permute.xlu0 %1151
        %1153 = vrot.lane.b32.xlu0 %v884, 124
        %v1154 = vpop.permute.xlu0 %1153
        %1155 = vrot.lane.b32.xlu0 %v885, 124
        %v1156 = vpop.permute.xlu0 %1155
        %1157 = vrot.lane.b32.xlu0 %v886, 124
        %v1158 = vpop.permute.xlu0 %1157
        %1159 = vrot.lane.b32.xlu0 %v887, 124
        %v1160 = vpop.permute.xlu0 %1159
        %1161 = vrot.lane.b32.xlu0 %v888, 124
        %v1162 = vpop.permute.xlu0 %1161
        %1163 = vrot.lane.b32.xlu0 %v889, 124
        %v1164 = vpop.permute.xlu0 %1163
        %1165 = vrot.lane.b32.xlu0 %v890, 124
        %v1166 = vpop.permute.xlu0 %1165
        %1167 = vrot.lane.b32.xlu0 %v891, 124
        %v1168 = vpop.permute.xlu0 %1167
        %1169 = vrot.lane.b32.xlu0 %v892, 124
        %v1170 = vpop.permute.xlu0 %1169
        %1171 = vrot.lane.b32.xlu0 %v893, 124
        %v1172 = vpop.permute.xlu0 %1171
        %1173 = vrot.lane.b32.xlu0 %v894, 124
        %v1174 = vpop.permute.xlu0 %1173
        %1175 = vrot.lane.b32.xlu0 %v895, 124
        %v1176 = vpop.permute.xlu0 %1175
        %1177 = vrot.lane.b32.xlu0 %v896, 124
        %v1178 = vpop.permute.xlu0 %1177
        %1179 = vrot.lane.b32.xlu0 %v897, 124
        %v1180 = vpop.permute.xlu0 %1179
        %1181 = vrot.lane.b32.xlu0 %v972, 124
        %v1182 = vpop.permute.xlu0 %1181
        %vm1183 = vcmask 1014784
        %v1184 = vsel %vm1183, %v1118, %v1120
        %v1185 = vsel %vm1183, %v1120, %v1122
        %v1186 = vsel %vm1183, %v1122, %v1124
        %v1187 = vsel %vm1183, %v1124, %v1126
        %v1188 = vsel %vm1183, %v1126, %v1128
        %v1189 = vsel %vm1183, %v1128, %v1130
        %v1190 = vsel %vm1183, %v1130, %v1132
        %v1191 = vsel %vm1183, %v1132, %v1134
        %v1192 = vsel %vm1183, %v1134, %v1136
        %v1193 = vsel %vm1183, %v1136, %v1138
        %v1194 = vsel %vm1183, %v1138, %v1140
        %v1195 = vsel %vm1183, %v1140, %v1142
        %v1196 = vsel %vm1183, %v1142, %v1144
        %v1197 = vsel %vm1183, %v1144, %v1146
        %v1198 = vsel %vm1183, %v1146, %v1148
        %v1199 = vsel %vm1183, %v1148, %v1150
        %v1200 = vsel %vm1183, %v1150, %v1152
        %v1201 = vsel %vm1183, %v1152, %v1154
        %v1202 = vsel %vm1183, %v1154, %v1156
        %v1203 = vsel %vm1183, %v1156, %v1158
        %v1204 = vsel %vm1183, %v1158, %v1160
        %v1205 = vsel %vm1183, %v1160, %v1162
        %v1206 = vsel %vm1183, %v1162, %v1164
        %v1207 = vsel %vm1183, %v1164, %v1166
        %v1208 = vsel %vm1183, %v1166, %v1168
        %v1209 = vsel %vm1183, %v1168, %v1170
        %v1210 = vsel %vm1183, %v1170, %v1172
        %v1211 = vsel %vm1183, %v1172, %v1174
        %v1212 = vsel %vm1183, %v1174, %v1176
        %v1213 = vsel %vm1183, %v1176, %v1178
        %v1214 = vsel %vm1183, %v1178, %v1180
        %v1215 = vsel %vm1183, %v1180, %v1182
        %1248 = vrot.lane.b32.xlu0 %v866, 88
        %v1249 = vpop.permute.xlu0 %1248
        %1250 = vrot.lane.b32.xlu0 %v867, 88
        %v1251 = vpop.permute.xlu0 %1250
        %1252 = vrot.lane.b32.xlu0 %v868, 88
        %v1253 = vpop.permute.xlu0 %1252
        %1254 = vrot.lane.b32.xlu0 %v869, 88
        %v1255 = vpop.permute.xlu0 %1254
        %1256 = vrot.lane.b32.xlu0 %v870, 88
        %v1257 = vpop.permute.xlu0 %1256
        %1258 = vrot.lane.b32.xlu0 %v871, 88
        %v1259 = vpop.permute.xlu0 %1258
        %1260 = vrot.lane.b32.xlu0 %v872, 88
        %v1261 = vpop.permute.xlu0 %1260
        %1262 = vrot.lane.b32.xlu0 %v873, 88
        %v1263 = vpop.permute.xlu0 %1262
        %1264 = vrot.lane.b32.xlu0 %v874, 88
        %v1265 = vpop.permute.xlu0 %1264
        %1266 = vrot.lane.b32.xlu0 %v875, 88
        %v1267 = vpop.permute.xlu0 %1266
        %1268 = vrot.lane.b32.xlu0 %v876, 88
        %v1269 = vpop.permute.xlu0 %1268
        %1270 = vrot.lane.b32.xlu0 %v877, 88
        %v1271 = vpop.permute.xlu0 %1270
        %1272 = vrot.lane.b32.xlu0 %v878, 88
        %v1273 = vpop.permute.xlu0 %1272
        %1274 = vrot.lane.b32.xlu0 %v879, 88
        %v1275 = vpop.permute.xlu0 %1274
        %1276 = vrot.lane.b32.xlu0 %v880, 88
        %v1277 = vpop.permute.xlu0 %1276
        %1278 = vrot.lane.b32.xlu0 %v881, 88
        %v1279 = vpop.permute.xlu0 %1278
        %1280 = vrot.lane.b32.xlu0 %v882, 88
        %v1281 = vpop.permute.xlu0 %1280
        %1282 = vrot.lane.b32.xlu0 %v883, 88
        %v1283 = vpop.permute.xlu0 %1282
        %1284 = vrot.lane.b32.xlu0 %v884, 88
        %v1285 = vpop.permute.xlu0 %1284
        %1286 = vrot.lane.b32.xlu0 %v885, 88
        %v1287 = vpop.permute.xlu0 %1286
        %1288 = vrot.lane.b32.xlu0 %v886, 88
        %v1289 = vpop.permute.xlu0 %1288
        %1290 = vrot.lane.b32.xlu0 %v887, 88
        %v1291 = vpop.permute.xlu0 %1290
        %1292 = vrot.lane.b32.xlu0 %v888, 88
        %v1293 = vpop.permute.xlu0 %1292
        %1294 = vrot.lane.b32.xlu0 %v889, 88
        %v1295 = vpop.permute.xlu0 %1294
        %1296 = vrot.lane.b32.xlu0 %v890, 88
        %v1297 = vpop.permute.xlu0 %1296
        %1298 = vrot.lane.b32.xlu0 %v891, 88
        %v1299 = vpop.permute.xlu0 %1298
        %1300 = vrot.lane.b32.xlu0 %v892, 88
        %v1301 = vpop.permute.xlu0 %1300
        %1302 = vrot.lane.b32.xlu0 %v893, 88
        %v1303 = vpop.permute.xlu0 %1302
        %1304 = vrot.lane.b32.xlu0 %v894, 88
        %v1305 = vpop.permute.xlu0 %1304
        %1306 = vrot.lane.b32.xlu0 %v895, 88
        %v1307 = vpop.permute.xlu0 %1306
        %1308 = vrot.lane.b32.xlu0 %v896, 88
        %v1309 = vpop.permute.xlu0 %1308
        %1310 = vrot.lane.b32.xlu0 %v897, 88
        %v1311 = vpop.permute.xlu0 %1310
        %1312 = vrot.lane.b32.xlu0 %v972, 88
        %v1313 = vpop.permute.xlu0 %1312
        %vm1314 = vcmask 719872
        %v1315 = vsel %vm1314, %v1249, %v1251
        %v1316 = vsel %vm1314, %v1251, %v1253
        %v1317 = vsel %vm1314, %v1253, %v1255
        %v1318 = vsel %vm1314, %v1255, %v1257
        %v1319 = vsel %vm1314, %v1257, %v1259
        %v1320 = vsel %vm1314, %v1259, %v1261
        %v1321 = vsel %vm1314, %v1261, %v1263
        %v1322 = vsel %vm1314, %v1263, %v1265
        %v1323 = vsel %vm1314, %v1265, %v1267
        %v1324 = vsel %vm1314, %v1267, %v1269
        %v1325 = vsel %vm1314, %v1269, %v1271
        %v1326 = vsel %vm1314, %v1271, %v1273
        %v1327 = vsel %vm1314, %v1273, %v1275
        %v1328 = vsel %vm1314, %v1275, %v1277
        %v1329 = vsel %vm1314, %v1277, %v1279
        %v1330 = vsel %vm1314, %v1279, %v1281
        %v1331 = vsel %vm1314, %v1281, %v1283
        %v1332 = vsel %vm1314, %v1283, %v1285
        %v1333 = vsel %vm1314, %v1285, %v1287
        %v1334 = vsel %vm1314, %v1287, %v1289
        %v1335 = vsel %vm1314, %v1289, %v1291
        %v1336 = vsel %vm1314, %v1291, %v1293
        %v1337 = vsel %vm1314, %v1293, %v1295
        %v1338 = vsel %vm1314, %v1295, %v1297
        %v1339 = vsel %vm1314, %v1297, %v1299
        %v1340 = vsel %vm1314, %v1299, %v1301
        %v1341 = vsel %vm1314, %v1301, %v1303
        %v1342 = vsel %vm1314, %v1303, %v1305
        %v1343 = vsel %vm1314, %v1305, %v1307
        %v1344 = vsel %vm1314, %v1307, %v1309
        %v1345 = vsel %vm1314, %v1309, %v1311
        %v1346 = vsel %vm1314, %v1311, %v1313
        %1379 = vrot.lane.b32.xlu0 %v866, 86
        %v1380 = vpop.permute.xlu0 %1379
        %1381 = vrot.lane.b32.xlu0 %v867, 86
        %v1382 = vpop.permute.xlu0 %1381
        %1383 = vrot.lane.b32.xlu0 %v868, 86
        %v1384 = vpop.permute.xlu0 %1383
        %1385 = vrot.lane.b32.xlu0 %v869, 86
        %v1386 = vpop.permute.xlu0 %1385
        %1387 = vrot.lane.b32.xlu0 %v870, 86
        %v1388 = vpop.permute.xlu0 %1387
        %1389 = vrot.lane.b32.xlu0 %v871, 86
        %v1390 = vpop.permute.xlu0 %1389
        %1391 = vrot.lane.b32.xlu0 %v872, 86
        %v1392 = vpop.permute.xlu0 %1391
        %1393 = vrot.lane.b32.xlu0 %v873, 86
        %v1394 = vpop.permute.xlu0 %1393
        %1395 = vrot.lane.b32.xlu0 %v874, 86
        %v1396 = vpop.permute.xlu0 %1395
        %1397 = vrot.lane.b32.xlu0 %v875, 86
        %v1398 = vpop.permute.xlu0 %1397
        %1399 = vrot.lane.b32.xlu0 %v876, 86
        %v1400 = vpop.permute.xlu0 %1399
        %1401 = vrot.lane.b32.xlu0 %v877, 86
        %v1402 = vpop.permute.xlu0 %1401
        %1403 = vrot.lane.b32.xlu0 %v878, 86
        %v1404 = vpop.permute.xlu0 %1403
        %1405 = vrot.lane.b32.xlu0 %v879, 86
        %v1406 = vpop.permute.xlu0 %1405
        %1407 = vrot.lane.b32.xlu0 %v880, 86
        %v1408 = vpop.permute.xlu0 %1407
        %1409 = vrot.lane.b32.xlu0 %v881, 86
        %v1410 = vpop.permute.xlu0 %1409
        %1411 = vrot.lane.b32.xlu0 %v882, 86
        %v1412 = vpop.permute.xlu0 %1411
        %1413 = vrot.lane.b32.xlu0 %v883, 86
        %v1414 = vpop.permute.xlu0 %1413
        %1415 = vrot.lane.b32.xlu0 %v884, 86
        %v1416 = vpop.permute.xlu0 %1415
        %1417 = vrot.lane.b32.xlu0 %v885, 86
        %v1418 = vpop.permute.xlu0 %1417
        %1419 = vrot.lane.b32.xlu0 %v886, 86
        %v1420 = vpop.permute.xlu0 %1419
        %1421 = vrot.lane.b32.xlu0 %v887, 86
        %v1422 = vpop.permute.xlu0 %1421
        %1423 = vrot.lane.b32.xlu0 %v888, 86
        %v1424 = vpop.permute.xlu0 %1423
        %1425 = vrot.lane.b32.xlu0 %v889, 86
        %v1426 = vpop.permute.xlu0 %1425
        %1427 = vrot.lane.b32.xlu0 %v890, 86
        %v1428 = vpop.permute.xlu0 %1427
        %1429 = vrot.lane.b32.xlu0 %v891, 86
        %v1430 = vpop.permute.xlu0 %1429
        %1431 = vrot.lane.b32.xlu0 %v892, 86
        %v1432 = vpop.permute.xlu0 %1431
        %1433 = vrot.lane.b32.xlu0 %v893, 86
        %v1434 = vpop.permute.xlu0 %1433
        %1435 = vrot.lane.b32.xlu0 %v894, 86
        %v1436 = vpop.permute.xlu0 %1435
        %1437 = vrot.lane.b32.xlu0 %v895, 86
        %v1438 = vpop.permute.xlu0 %1437
        %1439 = vrot.lane.b32.xlu0 %v896, 86
        %v1440 = vpop.permute.xlu0 %1439
        %1441 = vrot.lane.b32.xlu0 %v897, 86
        %v1442 = vpop.permute.xlu0 %1441
        %1443 = vrot.lane.b32.xlu0 %v972, 86
        %v1444 = vpop.permute.xlu0 %1443
        %vm1445 = vcmask 703488
        %v1446 = vsel %vm1445, %v1380, %v1382
        %v1447 = vsel %vm1445, %v1382, %v1384
        %v1448 = vsel %vm1445, %v1384, %v1386
        %v1449 = vsel %vm1445, %v1386, %v1388
        %v1450 = vsel %vm1445, %v1388, %v1390
        %v1451 = vsel %vm1445, %v1390, %v1392
        %v1452 = vsel %vm1445, %v1392, %v1394
        %v1453 = vsel %vm1445, %v1394, %v1396
        %v1454 = vsel %vm1445, %v1396, %v1398
        %v1455 = vsel %vm1445, %v1398, %v1400
        %v1456 = vsel %vm1445, %v1400, %v1402
        %v1457 = vsel %vm1445, %v1402, %v1404
        %v1458 = vsel %vm1445, %v1404, %v1406
        %v1459 = vsel %vm1445, %v1406, %v1408
        %v1460 = vsel %vm1445, %v1408, %v1410
        %v1461 = vsel %vm1445, %v1410, %v1412
        %v1462 = vsel %vm1445, %v1412, %v1414
        %v1463 = vsel %vm1445, %v1414, %v1416
        %v1464 = vsel %vm1445, %v1416, %v1418
        %v1465 = vsel %vm1445, %v1418, %v1420
        %v1466 = vsel %vm1445, %v1420, %v1422
        %v1467 = vsel %vm1445, %v1422, %v1424
        %v1468 = vsel %vm1445, %v1424, %v1426
        %v1469 = vsel %vm1445, %v1426, %v1428
        %v1470 = vsel %vm1445, %v1428, %v1430
        %v1471 = vsel %vm1445, %v1430, %v1432
        %v1472 = vsel %vm1445, %v1432, %v1434
        %v1473 = vsel %vm1445, %v1434, %v1436
        %v1474 = vsel %vm1445, %v1436, %v1438
        %v1475 = vsel %vm1445, %v1438, %v1440
        %v1476 = vsel %vm1445, %v1440, %v1442
        %v1477 = vsel %vm1445, %v1442, %v1444
        %1510 = vrot.lane.b32.xlu0 %v866, 84
        %v1511 = vpop.permute.xlu0 %1510
        %1512 = vrot.lane.b32.xlu0 %v867, 84
        %v1513 = vpop.permute.xlu0 %1512
        %1514 = vrot.lane.b32.xlu0 %v868, 84
        %v1515 = vpop.permute.xlu0 %1514
        %1516 = vrot.lane.b32.xlu0 %v869, 84
        %v1517 = vpop.permute.xlu0 %1516
        %1518 = vrot.lane.b32.xlu0 %v870, 84
        %v1519 = vpop.permute.xlu0 %1518
        %1520 = vrot.lane.b32.xlu0 %v871, 84
        %v1521 = vpop.permute.xlu0 %1520
        %1522 = vrot.lane.b32.xlu0 %v872, 84
        %v1523 = vpop.permute.xlu0 %1522
        %1524 = vrot.lane.b32.xlu0 %v873, 84
        %v1525 = vpop.permute.xlu0 %1524
        %1526 = vrot.lane.b32.xlu0 %v874, 84
        %v1527 = vpop.permute.xlu0 %1526
        %1528 = vrot.lane.b32.xlu0 %v875, 84
        %v1529 = vpop.permute.xlu0 %1528
        %1530 = vrot.lane.b32.xlu0 %v876, 84
        %v1531 = vpop.permute.xlu0 %1530
        %1532 = vrot.lane.b32.xlu0 %v877, 84
        %v1533 = vpop.permute.xlu0 %1532
        %1534 = vrot.lane.b32.xlu0 %v878, 84
        %v1535 = vpop.permute.xlu0 %1534
        %1536 = vrot.lane.b32.xlu0 %v879, 84
        %v1537 = vpop.permute.xlu0 %1536
        %1538 = vrot.lane.b32.xlu0 %v880, 84
        %v1539 = vpop.permute.xlu0 %1538
        %1540 = vrot.lane.b32.xlu0 %v881, 84
        %v1541 = vpop.permute.xlu0 %1540
        %1542 = vrot.lane.b32.xlu0 %v882, 84
        %v1543 = vpop.permute.xlu0 %1542
        %1544 = vrot.lane.b32.xlu0 %v883, 84
        %v1545 = vpop.permute.xlu0 %1544
        %1546 = vrot.lane.b32.xlu0 %v884, 84
        %v1547 = vpop.permute.xlu0 %1546
        %1548 = vrot.lane.b32.xlu0 %v885, 84
        %v1549 = vpop.permute.xlu0 %1548
        %1550 = vrot.lane.b32.xlu0 %v886, 84
        %v1551 = vpop.permute.xlu0 %1550
        %1552 = vrot.lane.b32.xlu0 %v887, 84
        %v1553 = vpop.permute.xlu0 %1552
        %1554 = vrot.lane.b32.xlu0 %v888, 84
        %v1555 = vpop.permute.xlu0 %1554
        %1556 = vrot.lane.b32.xlu0 %v889, 84
        %v1557 = vpop.permute.xlu0 %1556
        %1558 = vrot.lane.b32.xlu0 %v890, 84
        %v1559 = vpop.permute.xlu0 %1558
        %1560 = vrot.lane.b32.xlu0 %v891, 84
        %v1561 = vpop.permute.xlu0 %1560
        %1562 = vrot.lane.b32.xlu0 %v892, 84
        %v1563 = vpop.permute.xlu0 %1562
        %1564 = vrot.lane.b32.xlu0 %v893, 84
        %v1565 = vpop.permute.xlu0 %1564
        %1566 = vrot.lane.b32.xlu0 %v894, 84
        %v1567 = vpop.permute.xlu0 %1566
        %1568 = vrot.lane.b32.xlu0 %v895, 84
        %v1569 = vpop.permute.xlu0 %1568
        %1570 = vrot.lane.b32.xlu0 %v896, 84
        %v1571 = vpop.permute.xlu0 %1570
        %1572 = vrot.lane.b32.xlu0 %v897, 84
        %v1573 = vpop.permute.xlu0 %1572
        %1574 = vrot.lane.b32.xlu0 %v972, 84
        %v1575 = vpop.permute.xlu0 %1574
        %vm1576 = vcmask 687104
        %v1577 = vsel %vm1576, %v1511, %v1513
        %v1578 = vsel %vm1576, %v1513, %v1515
        %v1579 = vsel %vm1576, %v1515, %v1517
        %v1580 = vsel %vm1576, %v1517, %v1519
        %v1581 = vsel %vm1576, %v1519, %v1521
        %v1582 = vsel %vm1576, %v1521, %v1523
        %v1583 = vsel %vm1576, %v1523, %v1525
        %v1584 = vsel %vm1576, %v1525, %v1527
        %v1585 = vsel %vm1576, %v1527, %v1529
        %v1586 = vsel %vm1576, %v1529, %v1531
        %v1587 = vsel %vm1576, %v1531, %v1533
        %v1588 = vsel %vm1576, %v1533, %v1535
        %v1589 = vsel %vm1576, %v1535, %v1537
        %v1590 = vsel %vm1576, %v1537, %v1539
        %v1591 = vsel %vm1576, %v1539, %v1541
        %v1592 = vsel %vm1576, %v1541, %v1543
        %v1593 = vsel %vm1576, %v1543, %v1545
        %v1594 = vsel %vm1576, %v1545, %v1547
        %v1595 = vsel %vm1576, %v1547, %v1549
        %v1596 = vsel %vm1576, %v1549, %v1551
        %v1597 = vsel %vm1576, %v1551, %v1553
        %v1598 = vsel %vm1576, %v1553, %v1555
        %v1599 = vsel %vm1576, %v1555, %v1557
        %v1600 = vsel %vm1576, %v1557, %v1559
        %v1601 = vsel %vm1576, %v1559, %v1561
        %v1602 = vsel %vm1576, %v1561, %v1563
        %v1603 = vsel %vm1576, %v1563, %v1565
        %v1604 = vsel %vm1576, %v1565, %v1567
        %v1605 = vsel %vm1576, %v1567, %v1569
        %v1606 = vsel %vm1576, %v1569, %v1571
        %v1607 = vsel %vm1576, %v1571, %v1573
        %v1608 = vsel %vm1576, %v1573, %v1575
        %1641 = vrot.lane.b32.xlu0 %v866, 48
        %v1642 = vpop.permute.xlu0 %1641
        %1643 = vrot.lane.b32.xlu0 %v867, 48
        %v1644 = vpop.permute.xlu0 %1643
        %1645 = vrot.lane.b32.xlu0 %v868, 48
        %v1646 = vpop.permute.xlu0 %1645
        %1647 = vrot.lane.b32.xlu0 %v869, 48
        %v1648 = vpop.permute.xlu0 %1647
        %1649 = vrot.lane.b32.xlu0 %v870, 48
        %v1650 = vpop.permute.xlu0 %1649
        %1651 = vrot.lane.b32.xlu0 %v871, 48
        %v1652 = vpop.permute.xlu0 %1651
        %1653 = vrot.lane.b32.xlu0 %v872, 48
        %v1654 = vpop.permute.xlu0 %1653
        %1655 = vrot.lane.b32.xlu0 %v873, 48
        %v1656 = vpop.permute.xlu0 %1655
        %1657 = vrot.lane.b32.xlu0 %v874, 48
        %v1658 = vpop.permute.xlu0 %1657
        %1659 = vrot.lane.b32.xlu0 %v875, 48
        %v1660 = vpop.permute.xlu0 %1659
        %1661 = vrot.lane.b32.xlu0 %v876, 48
        %v1662 = vpop.permute.xlu0 %1661
        %1663 = vrot.lane.b32.xlu0 %v877, 48
        %v1664 = vpop.permute.xlu0 %1663
        %1665 = vrot.lane.b32.xlu0 %v878, 48
        %v1666 = vpop.permute.xlu0 %1665
        %1667 = vrot.lane.b32.xlu0 %v879, 48
        %v1668 = vpop.permute.xlu0 %1667
        %1669 = vrot.lane.b32.xlu0 %v880, 48
        %v1670 = vpop.permute.xlu0 %1669
        %1671 = vrot.lane.b32.xlu0 %v881, 48
        %v1672 = vpop.permute.xlu0 %1671
        %1673 = vrot.lane.b32.xlu0 %v882, 48
        %v1674 = vpop.permute.xlu0 %1673
        %1675 = vrot.lane.b32.xlu0 %v883, 48
        %v1676 = vpop.permute.xlu0 %1675
        %1677 = vrot.lane.b32.xlu0 %v884, 48
        %v1678 = vpop.permute.xlu0 %1677
        %1679 = vrot.lane.b32.xlu0 %v885, 48
        %v1680 = vpop.permute.xlu0 %1679
        %1681 = vrot.lane.b32.xlu0 %v886, 48
        %v1682 = vpop.permute.xlu0 %1681
        %1683 = vrot.lane.b32.xlu0 %v887, 48
        %v1684 = vpop.permute.xlu0 %1683
        %1685 = vrot.lane.b32.xlu0 %v888, 48
        %v1686 = vpop.permute.xlu0 %1685
        %1687 = vrot.lane.b32.xlu0 %v889, 48
        %v1688 = vpop.permute.xlu0 %1687
        %1689 = vrot.lane.b32.xlu0 %v890, 48
        %v1690 = vpop.permute.xlu0 %1689
        %1691 = vrot.lane.b32.xlu0 %v891, 48
        %v1692 = vpop.permute.xlu0 %1691
        %1693 = vrot.lane.b32.xlu0 %v892, 48
        %v1694 = vpop.permute.xlu0 %1693
        %1695 = vrot.lane.b32.xlu0 %v893, 48
        %v1696 = vpop.permute.xlu0 %1695
        %1697 = vrot.lane.b32.xlu0 %v894, 48
        %v1698 = vpop.permute.xlu0 %1697
        %1699 = vrot.lane.b32.xlu0 %v895, 48
        %v1700 = vpop.permute.xlu0 %1699
        %1701 = vrot.lane.b32.xlu0 %v896, 48
        %v1702 = vpop.permute.xlu0 %1701
        %1703 = vrot.lane.b32.xlu0 %v897, 48
        %v1704 = vpop.permute.xlu0 %1703
        %1705 = vrot.lane.b32.xlu0 %v972, 48
        %v1706 = vpop.permute.xlu0 %1705
        %vm1707 = vcmask 392192
        %v1708 = vsel %vm1707, %v1642, %v1644
        %v1709 = vsel %vm1707, %v1644, %v1646
        %v1710 = vsel %vm1707, %v1646, %v1648
        %v1711 = vsel %vm1707, %v1648, %v1650
        %v1712 = vsel %vm1707, %v1650, %v1652
        %v1713 = vsel %vm1707, %v1652, %v1654
        %v1714 = vsel %vm1707, %v1654, %v1656
        %v1715 = vsel %vm1707, %v1656, %v1658
        %v1716 = vsel %vm1707, %v1658, %v1660
        %v1717 = vsel %vm1707, %v1660, %v1662
        %v1718 = vsel %vm1707, %v1662, %v1664
        %v1719 = vsel %vm1707, %v1664, %v1666
        %v1720 = vsel %vm1707, %v1666, %v1668
        %v1721 = vsel %vm1707, %v1668, %v1670
        %v1722 = vsel %vm1707, %v1670, %v1672
        %v1723 = vsel %vm1707, %v1672, %v1674
        %v1724 = vsel %vm1707, %v1674, %v1676
        %v1725 = vsel %vm1707, %v1676, %v1678
        %v1726 = vsel %vm1707, %v1678, %v1680
        %v1727 = vsel %vm1707, %v1680, %v1682
        %v1728 = vsel %vm1707, %v1682, %v1684
        %v1729 = vsel %vm1707, %v1684, %v1686
        %v1730 = vsel %vm1707, %v1686, %v1688
        %v1731 = vsel %vm1707, %v1688, %v1690
        %v1732 = vsel %vm1707, %v1690, %v1692
        %v1733 = vsel %vm1707, %v1692, %v1694
        %v1734 = vsel %vm1707, %v1694, %v1696
        %v1735 = vsel %vm1707, %v1696, %v1698
        %v1736 = vsel %vm1707, %v1698, %v1700
        %v1737 = vsel %vm1707, %v1700, %v1702
        %v1738 = vsel %vm1707, %v1702, %v1704
        %v1739 = vsel %vm1707, %v1704, %v1706
        %1772 = vrot.lane.b32.xlu0 %v866, 46
        %v1773 = vpop.permute.xlu0 %1772
        %1774 = vrot.lane.b32.xlu0 %v867, 46
        %v1775 = vpop.permute.xlu0 %1774
        %1776 = vrot.lane.b32.xlu0 %v868, 46
        %v1777 = vpop.permute.xlu0 %1776
        %1778 = vrot.lane.b32.xlu0 %v869, 46
        %v1779 = vpop.permute.xlu0 %1778
        %1780 = vrot.lane.b32.xlu0 %v870, 46
        %v1781 = vpop.permute.xlu0 %1780
        %1782 = vrot.lane.b32.xlu0 %v871, 46
        %v1783 = vpop.permute.xlu0 %1782
        %1784 = vrot.lane.b32.xlu0 %v872, 46
        %v1785 = vpop.permute.xlu0 %1784
        %1786 = vrot.lane.b32.xlu0 %v873, 46
        %v1787 = vpop.permute.xlu0 %1786
        %1788 = vrot.lane.b32.xlu0 %v874, 46
        %v1789 = vpop.permute.xlu0 %1788
        %1790 = vrot.lane.b32.xlu0 %v875, 46
        %v1791 = vpop.permute.xlu0 %1790
        %1792 = vrot.lane.b32.xlu0 %v876, 46
        %v1793 = vpop.permute.xlu0 %1792
        %1794 = vrot.lane.b32.xlu0 %v877, 46
        %v1795 = vpop.permute.xlu0 %1794
        %1796 = vrot.lane.b32.xlu0 %v878, 46
        %v1797 = vpop.permute.xlu0 %1796
        %1798 = vrot.lane.b32.xlu0 %v879, 46
        %v1799 = vpop.permute.xlu0 %1798
        %1800 = vrot.lane.b32.xlu0 %v880, 46
        %v1801 = vpop.permute.xlu0 %1800
        %1802 = vrot.lane.b32.xlu0 %v881, 46
        %v1803 = vpop.permute.xlu0 %1802
        %1804 = vrot.lane.b32.xlu0 %v882, 46
        %v1805 = vpop.permute.xlu0 %1804
        %1806 = vrot.lane.b32.xlu0 %v883, 46
        %v1807 = vpop.permute.xlu0 %1806
        %1808 = vrot.lane.b32.xlu0 %v884, 46
        %v1809 = vpop.permute.xlu0 %1808
        %1810 = vrot.lane.b32.xlu0 %v885, 46
        %v1811 = vpop.permute.xlu0 %1810
        %1812 = vrot.lane.b32.xlu0 %v886, 46
        %v1813 = vpop.permute.xlu0 %1812
        %1814 = vrot.lane.b32.xlu0 %v887, 46
        %v1815 = vpop.permute.xlu0 %1814
        %1816 = vrot.lane.b32.xlu0 %v888, 46
        %v1817 = vpop.permute.xlu0 %1816
        %1818 = vrot.lane.b32.xlu0 %v889, 46
        %v1819 = vpop.permute.xlu0 %1818
        %1820 = vrot.lane.b32.xlu0 %v890, 46
        %v1821 = vpop.permute.xlu0 %1820
        %1822 = vrot.lane.b32.xlu0 %v891, 46
        %v1823 = vpop.permute.xlu0 %1822
        %1824 = vrot.lane.b32.xlu0 %v892, 46
        %v1825 = vpop.permute.xlu0 %1824
        %1826 = vrot.lane.b32.xlu0 %v893, 46
        %v1827 = vpop.permute.xlu0 %1826
        %1828 = vrot.lane.b32.xlu0 %v894, 46
        %v1829 = vpop.permute.xlu0 %1828
        %1830 = vrot.lane.b32.xlu0 %v895, 46
        %v1831 = vpop.permute.xlu0 %1830
        %1832 = vrot.lane.b32.xlu0 %v896, 46
        %v1833 = vpop.permute.xlu0 %1832
        %1834 = vrot.lane.b32.xlu0 %v897, 46
        %v1835 = vpop.permute.xlu0 %1834
        %1836 = vrot.lane.b32.xlu0 %v972, 46
        %v1837 = vpop.permute.xlu0 %1836
        %vm1838 = vcmask 375808
        %v1839 = vsel %vm1838, %v1773, %v1775
        %v1840 = vsel %vm1838, %v1775, %v1777
        %v1841 = vsel %vm1838, %v1777, %v1779
        %v1842 = vsel %vm1838, %v1779, %v1781
        %v1843 = vsel %vm1838, %v1781, %v1783
        %v1844 = vsel %vm1838, %v1783, %v1785
        %v1845 = vsel %vm1838, %v1785, %v1787
        %v1846 = vsel %vm1838, %v1787, %v1789
        %v1847 = vsel %vm1838, %v1789, %v1791
        %v1848 = vsel %vm1838, %v1791, %v1793
        %v1849 = vsel %vm1838, %v1793, %v1795
        %v1850 = vsel %vm1838, %v1795, %v1797
        %v1851 = vsel %vm1838, %v1797, %v1799
        %v1852 = vsel %vm1838, %v1799, %v1801
        %v1853 = vsel %vm1838, %v1801, %v1803
        %v1854 = vsel %vm1838, %v1803, %v1805
        %v1855 = vsel %vm1838, %v1805, %v1807
        %v1856 = vsel %vm1838, %v1807, %v1809
        %v1857 = vsel %vm1838, %v1809, %v1811
        %v1858 = vsel %vm1838, %v1811, %v1813
        %v1859 = vsel %vm1838, %v1813, %v1815
        %v1860 = vsel %vm1838, %v1815, %v1817
        %v1861 = vsel %vm1838, %v1817, %v1819
        %v1862 = vsel %vm1838, %v1819, %v1821
        %v1863 = vsel %vm1838, %v1821, %v1823
        %v1864 = vsel %vm1838, %v1823, %v1825
        %v1865 = vsel %vm1838, %v1825, %v1827
        %v1866 = vsel %vm1838, %v1827, %v1829
        %v1867 = vsel %vm1838, %v1829, %v1831
        %v1868 = vsel %vm1838, %v1831, %v1833
        %v1869 = vsel %vm1838, %v1833, %v1835
        %v1870 = vsel %vm1838, %v1835, %v1837
        %1903 = vrot.lane.b32.xlu0 %v866, 44
        %v1904 = vpop.permute.xlu0 %1903
        %1905 = vrot.lane.b32.xlu0 %v867, 44
        %v1906 = vpop.permute.xlu0 %1905
        %1907 = vrot.lane.b32.xlu0 %v868, 44
        %v1908 = vpop.permute.xlu0 %1907
        %1909 = vrot.lane.b32.xlu0 %v869, 44
        %v1910 = vpop.permute.xlu0 %1909
        %1911 = vrot.lane.b32.xlu0 %v870, 44
        %v1912 = vpop.permute.xlu0 %1911
        %1913 = vrot.lane.b32.xlu0 %v871, 44
        %v1914 = vpop.permute.xlu0 %1913
        %1915 = vrot.lane.b32.xlu0 %v872, 44
        %v1916 = vpop.permute.xlu0 %1915
        %1917 = vrot.lane.b32.xlu0 %v873, 44
        %v1918 = vpop.permute.xlu0 %1917
        %1919 = vrot.lane.b32.xlu0 %v874, 44
        %v1920 = vpop.permute.xlu0 %1919
        %1921 = vrot.lane.b32.xlu0 %v875, 44
        %v1922 = vpop.permute.xlu0 %1921
        %1923 = vrot.lane.b32.xlu0 %v876, 44
        %v1924 = vpop.permute.xlu0 %1923
        %1925 = vrot.lane.b32.xlu0 %v877, 44
        %v1926 = vpop.permute.xlu0 %1925
        %1927 = vrot.lane.b32.xlu0 %v878, 44
        %v1928 = vpop.permute.xlu0 %1927
        %1929 = vrot.lane.b32.xlu0 %v879, 44
        %v1930 = vpop.permute.xlu0 %1929
        %1931 = vrot.lane.b32.xlu0 %v880, 44
        %v1932 = vpop.permute.xlu0 %1931
        %1933 = vrot.lane.b32.xlu0 %v881, 44
        %v1934 = vpop.permute.xlu0 %1933
        %1935 = vrot.lane.b32.xlu0 %v882, 44
        %v1936 = vpop.permute.xlu0 %1935
        %1937 = vrot.lane.b32.xlu0 %v883, 44
        %v1938 = vpop.permute.xlu0 %1937
        %1939 = vrot.lane.b32.xlu0 %v884, 44
        %v1940 = vpop.permute.xlu0 %1939
        %1941 = vrot.lane.b32.xlu0 %v885, 44
        %v1942 = vpop.permute.xlu0 %1941
        %1943 = vrot.lane.b32.xlu0 %v886, 44
        %v1944 = vpop.permute.xlu0 %1943
        %1945 = vrot.lane.b32.xlu0 %v887, 44
        %v1946 = vpop.permute.xlu0 %1945
        %1947 = vrot.lane.b32.xlu0 %v888, 44
        %v1948 = vpop.permute.xlu0 %1947
        %1949 = vrot.lane.b32.xlu0 %v889, 44
        %v1950 = vpop.permute.xlu0 %1949
        %1951 = vrot.lane.b32.xlu0 %v890, 44
        %v1952 = vpop.permute.xlu0 %1951
        %1953 = vrot.lane.b32.xlu0 %v891, 44
        %v1954 = vpop.permute.xlu0 %1953
        %1955 = vrot.lane.b32.xlu0 %v892, 44
        %v1956 = vpop.permute.xlu0 %1955
        %1957 = vrot.lane.b32.xlu0 %v893, 44
        %v1958 = vpop.permute.xlu0 %1957
        %1959 = vrot.lane.b32.xlu0 %v894, 44
        %v1960 = vpop.permute.xlu0 %1959
        %1961 = vrot.lane.b32.xlu0 %v895, 44
        %v1962 = vpop.permute.xlu0 %1961
        %1963 = vrot.lane.b32.xlu0 %v896, 44
        %v1964 = vpop.permute.xlu0 %1963
        %1965 = vrot.lane.b32.xlu0 %v897, 44
        %v1966 = vpop.permute.xlu0 %1965
        %1967 = vrot.lane.b32.xlu0 %v972, 44
        %v1968 = vpop.permute.xlu0 %1967
        %vm1969 = vcmask 359424
        %v1970 = vsel %vm1969, %v1904, %v1906
        %v1971 = vsel %vm1969, %v1906, %v1908
        %v1972 = vsel %vm1969, %v1908, %v1910
        %v1973 = vsel %vm1969, %v1910, %v1912
        %v1974 = vsel %vm1969, %v1912, %v1914
        %v1975 = vsel %vm1969, %v1914, %v1916
        %v1976 = vsel %vm1969, %v1916, %v1918
        %v1977 = vsel %vm1969, %v1918, %v1920
        %v1978 = vsel %vm1969, %v1920, %v1922
        %v1979 = vsel %vm1969, %v1922, %v1924
        %v1980 = vsel %vm1969, %v1924, %v1926
        %v1981 = vsel %vm1969, %v1926, %v1928
        %v1982 = vsel %vm1969, %v1928, %v1930
        %v1983 = vsel %vm1969, %v1930, %v1932
        %v1984 = vsel %vm1969, %v1932, %v1934
        %v1985 = vsel %vm1969, %v1934, %v1936
        %v1986 = vsel %vm1969, %v1936, %v1938
        %v1987 = vsel %vm1969, %v1938, %v1940
        %v1988 = vsel %vm1969, %v1940, %v1942
        %v1989 = vsel %vm1969, %v1942, %v1944
        %v1990 = vsel %vm1969, %v1944, %v1946
        %v1991 = vsel %vm1969, %v1946, %v1948
        %v1992 = vsel %vm1969, %v1948, %v1950
        %v1993 = vsel %vm1969, %v1950, %v1952
        %v1994 = vsel %vm1969, %v1952, %v1954
        %v1995 = vsel %vm1969, %v1954, %v1956
        %v1996 = vsel %vm1969, %v1956, %v1958
        %v1997 = vsel %vm1969, %v1958, %v1960
        %v1998 = vsel %vm1969, %v1960, %v1962
        %v1999 = vsel %vm1969, %v1962, %v1964
        %v2000 = vsel %vm1969, %v1964, %v1966
        %v2001 = vsel %vm1969, %v1966, %v1968
        %2034 = vrot.lane.b32.xlu0 %v872, 96
        %v2035 = vpop.permute.xlu0 %2034
        %2036 = vrot.lane.b32.xlu0 %v873, 96
        %v2037 = vpop.permute.xlu0 %2036
        %2038 = vrot.lane.b32.xlu0 %v874, 96
        %v2039 = vpop.permute.xlu0 %2038
        %2040 = vrot.lane.b32.xlu0 %v875, 96
        %v2041 = vpop.permute.xlu0 %2040
        %2042 = vrot.lane.b32.xlu0 %v876, 96
        %v2043 = vpop.permute.xlu0 %2042
        %2044 = vrot.lane.b32.xlu0 %v877, 96
        %v2045 = vpop.permute.xlu0 %2044
        %2046 = vrot.lane.b32.xlu0 %v878, 96
        %v2047 = vpop.permute.xlu0 %2046
        %2048 = vrot.lane.b32.xlu0 %v879, 96
        %v2049 = vpop.permute.xlu0 %2048
        %2050 = vrot.lane.b32.xlu0 %v880, 96
        %v2051 = vpop.permute.xlu0 %2050
        %2052 = vrot.lane.b32.xlu0 %v881, 96
        %v2053 = vpop.permute.xlu0 %2052
        %2054 = vrot.lane.b32.xlu0 %v882, 96
        %v2055 = vpop.permute.xlu0 %2054
        %2056 = vrot.lane.b32.xlu0 %v883, 96
        %v2057 = vpop.permute.xlu0 %2056
        %2058 = vrot.lane.b32.xlu0 %v884, 96
        %v2059 = vpop.permute.xlu0 %2058
        %2060 = vrot.lane.b32.xlu0 %v885, 96
        %v2061 = vpop.permute.xlu0 %2060
        %2062 = vrot.lane.b32.xlu0 %v886, 96
        %v2063 = vpop.permute.xlu0 %2062
        %2064 = vrot.lane.b32.xlu0 %v887, 96
        %v2065 = vpop.permute.xlu0 %2064
        %2066 = vrot.lane.b32.xlu0 %v888, 96
        %v2067 = vpop.permute.xlu0 %2066
        %2068 = vrot.lane.b32.xlu0 %v889, 96
        %v2069 = vpop.permute.xlu0 %2068
        %2070 = vrot.lane.b32.xlu0 %v890, 96
        %v2071 = vpop.permute.xlu0 %2070
        %2072 = vrot.lane.b32.xlu0 %v891, 96
        %v2073 = vpop.permute.xlu0 %2072
        %2074 = vrot.lane.b32.xlu0 %v892, 96
        %v2075 = vpop.permute.xlu0 %2074
        %2076 = vrot.lane.b32.xlu0 %v893, 96
        %v2077 = vpop.permute.xlu0 %2076
        %2078 = vrot.lane.b32.xlu0 %v894, 96
        %v2079 = vpop.permute.xlu0 %2078
        %2080 = vrot.lane.b32.xlu0 %v895, 96
        %v2081 = vpop.permute.xlu0 %2080
        %2082 = vrot.lane.b32.xlu0 %v896, 96
        %v2083 = vpop.permute.xlu0 %2082
        %2084 = vrot.lane.b32.xlu0 %v897, 96
        %v2085 = vpop.permute.xlu0 %2084
        %2086 = vrot.lane.b32.xlu0 %v972, 96
        %v2087 = vpop.permute.xlu0 %2086
        %2088 = vrot.lane.b32.xlu0 %v973, 96
        %v2089 = vpop.permute.xlu0 %2088
        %2090 = vrot.lane.b32.xlu0 %v974, 96
        %v2091 = vpop.permute.xlu0 %2090
        %2092 = vrot.lane.b32.xlu0 %v975, 96
        %v2093 = vpop.permute.xlu0 %2092
        %2094 = vrot.lane.b32.xlu0 %v976, 96
        %v2095 = vpop.permute.xlu0 %2094
        %2096 = vrot.lane.b32.xlu0 %v977, 96
        %v2097 = vpop.permute.xlu0 %2096
        %2098 = vrot.lane.b32.xlu0 %v978, 96
        %v2099 = vpop.permute.xlu0 %2098
        %vm2100 = vcmask 785408
        %v2101 = vsel %vm2100, %v2035, %v2037
        %v2102 = vsel %vm2100, %v2037, %v2039
        %v2103 = vsel %vm2100, %v2039, %v2041
        %v2104 = vsel %vm2100, %v2041, %v2043
        %v2105 = vsel %vm2100, %v2043, %v2045
        %v2106 = vsel %vm2100, %v2045, %v2047
        %v2107 = vsel %vm2100, %v2047, %v2049
        %v2108 = vsel %vm2100, %v2049, %v2051
        %v2109 = vsel %vm2100, %v2051, %v2053
        %v2110 = vsel %vm2100, %v2053, %v2055
        %v2111 = vsel %vm2100, %v2055, %v2057
        %v2112 = vsel %vm2100, %v2057, %v2059
        %v2113 = vsel %vm2100, %v2059, %v2061
        %v2114 = vsel %vm2100, %v2061, %v2063
        %v2115 = vsel %vm2100, %v2063, %v2065
        %v2116 = vsel %vm2100, %v2065, %v2067
        %v2117 = vsel %vm2100, %v2067, %v2069
        %v2118 = vsel %vm2100, %v2069, %v2071
        %v2119 = vsel %vm2100, %v2071, %v2073
        %v2120 = vsel %vm2100, %v2073, %v2075
        %v2121 = vsel %vm2100, %v2075, %v2077
        %v2122 = vsel %vm2100, %v2077, %v2079
        %v2123 = vsel %vm2100, %v2079, %v2081
        %v2124 = vsel %vm2100, %v2081, %v2083
        %v2125 = vsel %vm2100, %v2083, %v2085
        %v2126 = vsel %vm2100, %v2085, %v2087
        %v2127 = vsel %vm2100, %v2087, %v2089
        %v2128 = vsel %vm2100, %v2089, %v2091
        %v2129 = vsel %vm2100, %v2091, %v2093
        %v2130 = vsel %vm2100, %v2093, %v2095
        %v2131 = vsel %vm2100, %v2095, %v2097
        %v2132 = vsel %vm2100, %v2097, %v2099
        %2165 = vrot.lane.b32.xlu0 %v872, 94
        %v2166 = vpop.permute.xlu0 %2165
        %2167 = vrot.lane.b32.xlu0 %v873, 94
        %v2168 = vpop.permute.xlu0 %2167
        %2169 = vrot.lane.b32.xlu0 %v874, 94
        %v2170 = vpop.permute.xlu0 %2169
        %2171 = vrot.lane.b32.xlu0 %v875, 94
        %v2172 = vpop.permute.xlu0 %2171
        %2173 = vrot.lane.b32.xlu0 %v876, 94
        %v2174 = vpop.permute.xlu0 %2173
        %2175 = vrot.lane.b32.xlu0 %v877, 94
        %v2176 = vpop.permute.xlu0 %2175
        %2177 = vrot.lane.b32.xlu0 %v878, 94
        %v2178 = vpop.permute.xlu0 %2177
        %2179 = vrot.lane.b32.xlu0 %v879, 94
        %v2180 = vpop.permute.xlu0 %2179
        %2181 = vrot.lane.b32.xlu0 %v880, 94
        %v2182 = vpop.permute.xlu0 %2181
        %2183 = vrot.lane.b32.xlu0 %v881, 94
        %v2184 = vpop.permute.xlu0 %2183
        %2185 = vrot.lane.b32.xlu0 %v882, 94
        %v2186 = vpop.permute.xlu0 %2185
        %2187 = vrot.lane.b32.xlu0 %v883, 94
        %v2188 = vpop.permute.xlu0 %2187
        %2189 = vrot.lane.b32.xlu0 %v884, 94
        %v2190 = vpop.permute.xlu0 %2189
        %2191 = vrot.lane.b32.xlu0 %v885, 94
        %v2192 = vpop.permute.xlu0 %2191
        %2193 = vrot.lane.b32.xlu0 %v886, 94
        %v2194 = vpop.permute.xlu0 %2193
        %2195 = vrot.lane.b32.xlu0 %v887, 94
        %v2196 = vpop.permute.xlu0 %2195
        %2197 = vrot.lane.b32.xlu0 %v888, 94
        %v2198 = vpop.permute.xlu0 %2197
        %2199 = vrot.lane.b32.xlu0 %v889, 94
        %v2200 = vpop.permute.xlu0 %2199
        %2201 = vrot.lane.b32.xlu0 %v890, 94
        %v2202 = vpop.permute.xlu0 %2201
        %2203 = vrot.lane.b32.xlu0 %v891, 94
        %v2204 = vpop.permute.xlu0 %2203
        %2205 = vrot.lane.b32.xlu0 %v892, 94
        %v2206 = vpop.permute.xlu0 %2205
        %2207 = vrot.lane.b32.xlu0 %v893, 94
        %v2208 = vpop.permute.xlu0 %2207
        %2209 = vrot.lane.b32.xlu0 %v894, 94
        %v2210 = vpop.permute.xlu0 %2209
        %2211 = vrot.lane.b32.xlu0 %v895, 94
        %v2212 = vpop.permute.xlu0 %2211
        %2213 = vrot.lane.b32.xlu0 %v896, 94
        %v2214 = vpop.permute.xlu0 %2213
        %2215 = vrot.lane.b32.xlu0 %v897, 94
        %v2216 = vpop.permute.xlu0 %2215
        %2217 = vrot.lane.b32.xlu0 %v972, 94
        %v2218 = vpop.permute.xlu0 %2217
        %2219 = vrot.lane.b32.xlu0 %v973, 94
        %v2220 = vpop.permute.xlu0 %2219
        %2221 = vrot.lane.b32.xlu0 %v974, 94
        %v2222 = vpop.permute.xlu0 %2221
        %2223 = vrot.lane.b32.xlu0 %v975, 94
        %v2224 = vpop.permute.xlu0 %2223
        %2225 = vrot.lane.b32.xlu0 %v976, 94
        %v2226 = vpop.permute.xlu0 %2225
        %2227 = vrot.lane.b32.xlu0 %v977, 94
        %v2228 = vpop.permute.xlu0 %2227
        %2229 = vrot.lane.b32.xlu0 %v978, 94
        %v2230 = vpop.permute.xlu0 %2229
        %vm2231 = vcmask 769024
        %v2232 = vsel %vm2231, %v2166, %v2168
        %v2233 = vsel %vm2231, %v2168, %v2170
        %v2234 = vsel %vm2231, %v2170, %v2172
        %v2235 = vsel %vm2231, %v2172, %v2174
        %v2236 = vsel %vm2231, %v2174, %v2176
        %v2237 = vsel %vm2231, %v2176, %v2178
        %v2238 = vsel %vm2231, %v2178, %v2180
        %v2239 = vsel %vm2231, %v2180, %v2182
        %v2240 = vsel %vm2231, %v2182, %v2184
        %v2241 = vsel %vm2231, %v2184, %v2186
        %v2242 = vsel %vm2231, %v2186, %v2188
        %v2243 = vsel %vm2231, %v2188, %v2190
        %v2244 = vsel %vm2231, %v2190, %v2192
        %v2245 = vsel %vm2231, %v2192, %v2194
        %v2246 = vsel %vm2231, %v2194, %v2196
        %v2247 = vsel %vm2231, %v2196, %v2198
        %v2248 = vsel %vm2231, %v2198, %v2200
        %v2249 = vsel %vm2231, %v2200, %v2202
        %v2250 = vsel %vm2231, %v2202, %v2204
        %v2251 = vsel %vm2231, %v2204, %v2206
        %v2252 = vsel %vm2231, %v2206, %v2208
        %v2253 = vsel %vm2231, %v2208, %v2210
        %v2254 = vsel %vm2231, %v2210, %v2212
        %v2255 = vsel %vm2231, %v2212, %v2214
        %v2256 = vsel %vm2231, %v2214, %v2216
        %v2257 = vsel %vm2231, %v2216, %v2218
        %v2258 = vsel %vm2231, %v2218, %v2220
        %v2259 = vsel %vm2231, %v2220, %v2222
        %v2260 = vsel %vm2231, %v2222, %v2224
        %v2261 = vsel %vm2231, %v2224, %v2226
        %v2262 = vsel %vm2231, %v2226, %v2228
        %v2263 = vsel %vm2231, %v2228, %v2230
        %2296 = vrot.lane.b32.xlu0 %v872, 92
        %v2297 = vpop.permute.xlu0 %2296
        %2298 = vrot.lane.b32.xlu0 %v873, 92
        %v2299 = vpop.permute.xlu0 %2298
        %2300 = vrot.lane.b32.xlu0 %v874, 92
        %v2301 = vpop.permute.xlu0 %2300
        %2302 = vrot.lane.b32.xlu0 %v875, 92
        %v2303 = vpop.permute.xlu0 %2302
        %2304 = vrot.lane.b32.xlu0 %v876, 92
        %v2305 = vpop.permute.xlu0 %2304
        %2306 = vrot.lane.b32.xlu0 %v877, 92
        %v2307 = vpop.permute.xlu0 %2306
        %2308 = vrot.lane.b32.xlu0 %v878, 92
        %v2309 = vpop.permute.xlu0 %2308
        %2310 = vrot.lane.b32.xlu0 %v879, 92
        %v2311 = vpop.permute.xlu0 %2310
        %2312 = vrot.lane.b32.xlu0 %v880, 92
        %v2313 = vpop.permute.xlu0 %2312
        %2314 = vrot.lane.b32.xlu0 %v881, 92
        %v2315 = vpop.permute.xlu0 %2314
        %2316 = vrot.lane.b32.xlu0 %v882, 92
        %v2317 = vpop.permute.xlu0 %2316
        %2318 = vrot.lane.b32.xlu0 %v883, 92
        %v2319 = vpop.permute.xlu0 %2318
        %2320 = vrot.lane.b32.xlu0 %v884, 92
        %v2321 = vpop.permute.xlu0 %2320
        %2322 = vrot.lane.b32.xlu0 %v885, 92
        %v2323 = vpop.permute.xlu0 %2322
        %2324 = vrot.lane.b32.xlu0 %v886, 92
        %v2325 = vpop.permute.xlu0 %2324
        %2326 = vrot.lane.b32.xlu0 %v887, 92
        %v2327 = vpop.permute.xlu0 %2326
        %2328 = vrot.lane.b32.xlu0 %v888, 92
        %v2329 = vpop.permute.xlu0 %2328
        %2330 = vrot.lane.b32.xlu0 %v889, 92
        %v2331 = vpop.permute.xlu0 %2330
        %2332 = vrot.lane.b32.xlu0 %v890, 92
        %v2333 = vpop.permute.xlu0 %2332
        %2334 = vrot.lane.b32.xlu0 %v891, 92
        %v2335 = vpop.permute.xlu0 %2334
        %2336 = vrot.lane.b32.xlu0 %v892, 92
        %v2337 = vpop.permute.xlu0 %2336
        %2338 = vrot.lane.b32.xlu0 %v893, 92
        %v2339 = vpop.permute.xlu0 %2338
        %2340 = vrot.lane.b32.xlu0 %v894, 92
        %v2341 = vpop.permute.xlu0 %2340
        %2342 = vrot.lane.b32.xlu0 %v895, 92
        %v2343 = vpop.permute.xlu0 %2342
        %2344 = vrot.lane.b32.xlu0 %v896, 92
        %v2345 = vpop.permute.xlu0 %2344
        %2346 = vrot.lane.b32.xlu0 %v897, 92
        %v2347 = vpop.permute.xlu0 %2346
        %2348 = vrot.lane.b32.xlu0 %v972, 92
        %v2349 = vpop.permute.xlu0 %2348
        %2350 = vrot.lane.b32.xlu0 %v973, 92
        %v2351 = vpop.permute.xlu0 %2350
        %2352 = vrot.lane.b32.xlu0 %v974, 92
        %v2353 = vpop.permute.xlu0 %2352
        %2354 = vrot.lane.b32.xlu0 %v975, 92
        %v2355 = vpop.permute.xlu0 %2354
        %2356 = vrot.lane.b32.xlu0 %v976, 92
        %v2357 = vpop.permute.xlu0 %2356
        %2358 = vrot.lane.b32.xlu0 %v977, 92
        %v2359 = vpop.permute.xlu0 %2358
        %2360 = vrot.lane.b32.xlu0 %v978, 92
        %v2361 = vpop.permute.xlu0 %2360
        %vm2362 = vcmask 752640
        %v2363 = vsel %vm2362, %v2297, %v2299
        %v2364 = vsel %vm2362, %v2299, %v2301
        %v2365 = vsel %vm2362, %v2301, %v2303
        %v2366 = vsel %vm2362, %v2303, %v2305
        %v2367 = vsel %vm2362, %v2305, %v2307
        %v2368 = vsel %vm2362, %v2307, %v2309
        %v2369 = vsel %vm2362, %v2309, %v2311
        %v2370 = vsel %vm2362, %v2311, %v2313
        %v2371 = vsel %vm2362, %v2313, %v2315
        %v2372 = vsel %vm2362, %v2315, %v2317
        %v2373 = vsel %vm2362, %v2317, %v2319
        %v2374 = vsel %vm2362, %v2319, %v2321
        %v2375 = vsel %vm2362, %v2321, %v2323
        %v2376 = vsel %vm2362, %v2323, %v2325
        %v2377 = vsel %vm2362, %v2325, %v2327
        %v2378 = vsel %vm2362, %v2327, %v2329
        %v2379 = vsel %vm2362, %v2329, %v2331
        %v2380 = vsel %vm2362, %v2331, %v2333
        %v2381 = vsel %vm2362, %v2333, %v2335
        %v2382 = vsel %vm2362, %v2335, %v2337
        %v2383 = vsel %vm2362, %v2337, %v2339
        %v2384 = vsel %vm2362, %v2339, %v2341
        %v2385 = vsel %vm2362, %v2341, %v2343
        %v2386 = vsel %vm2362, %v2343, %v2345
        %v2387 = vsel %vm2362, %v2345, %v2347
        %v2388 = vsel %vm2362, %v2347, %v2349
        %v2389 = vsel %vm2362, %v2349, %v2351
        %v2390 = vsel %vm2362, %v2351, %v2353
        %v2391 = vsel %vm2362, %v2353, %v2355
        %v2392 = vsel %vm2362, %v2355, %v2357
        %v2393 = vsel %vm2362, %v2357, %v2359
        %v2394 = vsel %vm2362, %v2359, %v2361
        %2427 = vrot.lane.b32.xlu0 %v872, 56
        %v2428 = vpop.permute.xlu0 %2427
        %2429 = vrot.lane.b32.xlu0 %v873, 56
        %v2430 = vpop.permute.xlu0 %2429
        %2431 = vrot.lane.b32.xlu0 %v874, 56
        %v2432 = vpop.permute.xlu0 %2431
        %2433 = vrot.lane.b32.xlu0 %v875, 56
        %v2434 = vpop.permute.xlu0 %2433
        %2435 = vrot.lane.b32.xlu0 %v876, 56
        %v2436 = vpop.permute.xlu0 %2435
        %2437 = vrot.lane.b32.xlu0 %v877, 56
        %v2438 = vpop.permute.xlu0 %2437
        %2439 = vrot.lane.b32.xlu0 %v878, 56
        %v2440 = vpop.permute.xlu0 %2439
        %2441 = vrot.lane.b32.xlu0 %v879, 56
        %v2442 = vpop.permute.xlu0 %2441
        %2443 = vrot.lane.b32.xlu0 %v880, 56
        %v2444 = vpop.permute.xlu0 %2443
        %2445 = vrot.lane.b32.xlu0 %v881, 56
        %v2446 = vpop.permute.xlu0 %2445
        %2447 = vrot.lane.b32.xlu0 %v882, 56
        %v2448 = vpop.permute.xlu0 %2447
        %2449 = vrot.lane.b32.xlu0 %v883, 56
        %v2450 = vpop.permute.xlu0 %2449
        %2451 = vrot.lane.b32.xlu0 %v884, 56
        %v2452 = vpop.permute.xlu0 %2451
        %2453 = vrot.lane.b32.xlu0 %v885, 56
        %v2454 = vpop.permute.xlu0 %2453
        %2455 = vrot.lane.b32.xlu0 %v886, 56
        %v2456 = vpop.permute.xlu0 %2455
        %2457 = vrot.lane.b32.xlu0 %v887, 56
        %v2458 = vpop.permute.xlu0 %2457
        %2459 = vrot.lane.b32.xlu0 %v888, 56
        %v2460 = vpop.permute.xlu0 %2459
        %2461 = vrot.lane.b32.xlu0 %v889, 56
        %v2462 = vpop.permute.xlu0 %2461
        %2463 = vrot.lane.b32.xlu0 %v890, 56
        %v2464 = vpop.permute.xlu0 %2463
        %2465 = vrot.lane.b32.xlu0 %v891, 56
        %v2466 = vpop.permute.xlu0 %2465
        %2467 = vrot.lane.b32.xlu0 %v892, 56
        %v2468 = vpop.permute.xlu0 %2467
        %2469 = vrot.lane.b32.xlu0 %v893, 56
        %v2470 = vpop.permute.xlu0 %2469
        %2471 = vrot.lane.b32.xlu0 %v894, 56
        %v2472 = vpop.permute.xlu0 %2471
        %2473 = vrot.lane.b32.xlu0 %v895, 56
        %v2474 = vpop.permute.xlu0 %2473
        %2475 = vrot.lane.b32.xlu0 %v896, 56
        %v2476 = vpop.permute.xlu0 %2475
        %2477 = vrot.lane.b32.xlu0 %v897, 56
        %v2478 = vpop.permute.xlu0 %2477
        %2479 = vrot.lane.b32.xlu0 %v972, 56
        %v2480 = vpop.permute.xlu0 %2479
        %2481 = vrot.lane.b32.xlu0 %v973, 56
        %v2482 = vpop.permute.xlu0 %2481
        %2483 = vrot.lane.b32.xlu0 %v974, 56
        %v2484 = vpop.permute.xlu0 %2483
        %2485 = vrot.lane.b32.xlu0 %v975, 56
        %v2486 = vpop.permute.xlu0 %2485
        %2487 = vrot.lane.b32.xlu0 %v976, 56
        %v2488 = vpop.permute.xlu0 %2487
        %2489 = vrot.lane.b32.xlu0 %v977, 56
        %v2490 = vpop.permute.xlu0 %2489
        %2491 = vrot.lane.b32.xlu0 %v978, 56
        %v2492 = vpop.permute.xlu0 %2491
        %vm2493 = vcmask 457728
        %v2494 = vsel %vm2493, %v2428, %v2430
        %v2495 = vsel %vm2493, %v2430, %v2432
        %v2496 = vsel %vm2493, %v2432, %v2434
        %v2497 = vsel %vm2493, %v2434, %v2436
        %v2498 = vsel %vm2493, %v2436, %v2438
        %v2499 = vsel %vm2493, %v2438, %v2440
        %v2500 = vsel %vm2493, %v2440, %v2442
        %v2501 = vsel %vm2493, %v2442, %v2444
        %v2502 = vsel %vm2493, %v2444, %v2446
        %v2503 = vsel %vm2493, %v2446, %v2448
        %v2504 = vsel %vm2493, %v2448, %v2450
        %v2505 = vsel %vm2493, %v2450, %v2452
        %v2506 = vsel %vm2493, %v2452, %v2454
        %v2507 = vsel %vm2493, %v2454, %v2456
        %v2508 = vsel %vm2493, %v2456, %v2458
        %v2509 = vsel %vm2493, %v2458, %v2460
        %v2510 = vsel %vm2493, %v2460, %v2462
        %v2511 = vsel %vm2493, %v2462, %v2464
        %v2512 = vsel %vm2493, %v2464, %v2466
        %v2513 = vsel %vm2493, %v2466, %v2468
        %v2514 = vsel %vm2493, %v2468, %v2470
        %v2515 = vsel %vm2493, %v2470, %v2472
        %v2516 = vsel %vm2493, %v2472, %v2474
        %v2517 = vsel %vm2493, %v2474, %v2476
        %v2518 = vsel %vm2493, %v2476, %v2478
        %v2519 = vsel %vm2493, %v2478, %v2480
        %v2520 = vsel %vm2493, %v2480, %v2482
        %v2521 = vsel %vm2493, %v2482, %v2484
        %v2522 = vsel %vm2493, %v2484, %v2486
        %v2523 = vsel %vm2493, %v2486, %v2488
        %v2524 = vsel %vm2493, %v2488, %v2490
        %v2525 = vsel %vm2493, %v2490, %v2492
        %2558 = vrot.lane.b32.xlu0 %v872, 54
        %v2559 = vpop.permute.xlu0 %2558
        %2560 = vrot.lane.b32.xlu0 %v873, 54
        %v2561 = vpop.permute.xlu0 %2560
        %2562 = vrot.lane.b32.xlu0 %v874, 54
        %v2563 = vpop.permute.xlu0 %2562
        %2564 = vrot.lane.b32.xlu0 %v875, 54
        %v2565 = vpop.permute.xlu0 %2564
        %2566 = vrot.lane.b32.xlu0 %v876, 54
        %v2567 = vpop.permute.xlu0 %2566
        %2568 = vrot.lane.b32.xlu0 %v877, 54
        %v2569 = vpop.permute.xlu0 %2568
        %2570 = vrot.lane.b32.xlu0 %v878, 54
        %v2571 = vpop.permute.xlu0 %2570
        %2572 = vrot.lane.b32.xlu0 %v879, 54
        %v2573 = vpop.permute.xlu0 %2572
        %2574 = vrot.lane.b32.xlu0 %v880, 54
        %v2575 = vpop.permute.xlu0 %2574
        %2576 = vrot.lane.b32.xlu0 %v881, 54
        %v2577 = vpop.permute.xlu0 %2576
        %2578 = vrot.lane.b32.xlu0 %v882, 54
        %v2579 = vpop.permute.xlu0 %2578
        %2580 = vrot.lane.b32.xlu0 %v883, 54
        %v2581 = vpop.permute.xlu0 %2580
        %2582 = vrot.lane.b32.xlu0 %v884, 54
        %v2583 = vpop.permute.xlu0 %2582
        %2584 = vrot.lane.b32.xlu0 %v885, 54
        %v2585 = vpop.permute.xlu0 %2584
        %2586 = vrot.lane.b32.xlu0 %v886, 54
        %v2587 = vpop.permute.xlu0 %2586
        %2588 = vrot.lane.b32.xlu0 %v887, 54
        %v2589 = vpop.permute.xlu0 %2588
        %2590 = vrot.lane.b32.xlu0 %v888, 54
        %v2591 = vpop.permute.xlu0 %2590
        %2592 = vrot.lane.b32.xlu0 %v889, 54
        %v2593 = vpop.permute.xlu0 %2592
        %2594 = vrot.lane.b32.xlu0 %v890, 54
        %v2595 = vpop.permute.xlu0 %2594
        %2596 = vrot.lane.b32.xlu0 %v891, 54
        %v2597 = vpop.permute.xlu0 %2596
        %2598 = vrot.lane.b32.xlu0 %v892, 54
        %v2599 = vpop.permute.xlu0 %2598
        %2600 = vrot.lane.b32.xlu0 %v893, 54
        %v2601 = vpop.permute.xlu0 %2600
        %2602 = vrot.lane.b32.xlu0 %v894, 54
        %v2603 = vpop.permute.xlu0 %2602
        %2604 = vrot.lane.b32.xlu0 %v895, 54
        %v2605 = vpop.permute.xlu0 %2604
        %2606 = vrot.lane.b32.xlu0 %v896, 54
        %v2607 = vpop.permute.xlu0 %2606
        %2608 = vrot.lane.b32.xlu0 %v897, 54
        %v2609 = vpop.permute.xlu0 %2608
        %2610 = vrot.lane.b32.xlu0 %v972, 54
        %v2611 = vpop.permute.xlu0 %2610
        %2612 = vrot.lane.b32.xlu0 %v973, 54
        %v2613 = vpop.permute.xlu0 %2612
        %2614 = vrot.lane.b32.xlu0 %v974, 54
        %v2615 = vpop.permute.xlu0 %2614
        %2616 = vrot.lane.b32.xlu0 %v975, 54
        %v2617 = vpop.permute.xlu0 %2616
        %2618 = vrot.lane.b32.xlu0 %v976, 54
        %v2619 = vpop.permute.xlu0 %2618
        %2620 = vrot.lane.b32.xlu0 %v977, 54
        %v2621 = vpop.permute.xlu0 %2620
        %2622 = vrot.lane.b32.xlu0 %v978, 54
        %v2623 = vpop.permute.xlu0 %2622
        %vm2624 = vcmask 441344
        %v2625 = vsel %vm2624, %v2559, %v2561
        %v2626 = vsel %vm2624, %v2561, %v2563
        %v2627 = vsel %vm2624, %v2563, %v2565
        %v2628 = vsel %vm2624, %v2565, %v2567
        %v2629 = vsel %vm2624, %v2567, %v2569
        %v2630 = vsel %vm2624, %v2569, %v2571
        %v2631 = vsel %vm2624, %v2571, %v2573
        %v2632 = vsel %vm2624, %v2573, %v2575
        %v2633 = vsel %vm2624, %v2575, %v2577
        %v2634 = vsel %vm2624, %v2577, %v2579
        %v2635 = vsel %vm2624, %v2579, %v2581
        %v2636 = vsel %vm2624, %v2581, %v2583
        %v2637 = vsel %vm2624, %v2583, %v2585
        %v2638 = vsel %vm2624, %v2585, %v2587
        %v2639 = vsel %vm2624, %v2587, %v2589
        %v2640 = vsel %vm2624, %v2589, %v2591
        %v2641 = vsel %vm2624, %v2591, %v2593
        %v2642 = vsel %vm2624, %v2593, %v2595
        %v2643 = vsel %vm2624, %v2595, %v2597
        %v2644 = vsel %vm2624, %v2597, %v2599
        %v2645 = vsel %vm2624, %v2599, %v2601
        %v2646 = vsel %vm2624, %v2601, %v2603
        %v2647 = vsel %vm2624, %v2603, %v2605
        %v2648 = vsel %vm2624, %v2605, %v2607
        %v2649 = vsel %vm2624, %v2607, %v2609
        %v2650 = vsel %vm2624, %v2609, %v2611
        %v2651 = vsel %vm2624, %v2611, %v2613
        %v2652 = vsel %vm2624, %v2613, %v2615
        %v2653 = vsel %vm2624, %v2615, %v2617
        %v2654 = vsel %vm2624, %v2617, %v2619
        %v2655 = vsel %vm2624, %v2619, %v2621
        %v2656 = vsel %vm2624, %v2621, %v2623
        %2689 = vrot.lane.b32.xlu0 %v872, 52
        %v2690 = vpop.permute.xlu0 %2689
        %2691 = vrot.lane.b32.xlu0 %v873, 52
        %v2692 = vpop.permute.xlu0 %2691
        %2693 = vrot.lane.b32.xlu0 %v874, 52
        %v2694 = vpop.permute.xlu0 %2693
        %2695 = vrot.lane.b32.xlu0 %v875, 52
        %v2696 = vpop.permute.xlu0 %2695
        %2697 = vrot.lane.b32.xlu0 %v876, 52
        %v2698 = vpop.permute.xlu0 %2697
        %2699 = vrot.lane.b32.xlu0 %v877, 52
        %v2700 = vpop.permute.xlu0 %2699
        %2701 = vrot.lane.b32.xlu0 %v878, 52
        %v2702 = vpop.permute.xlu0 %2701
        %2703 = vrot.lane.b32.xlu0 %v879, 52
        %v2704 = vpop.permute.xlu0 %2703
        %2705 = vrot.lane.b32.xlu0 %v880, 52
        %v2706 = vpop.permute.xlu0 %2705
        %2707 = vrot.lane.b32.xlu0 %v881, 52
        %v2708 = vpop.permute.xlu0 %2707
        %2709 = vrot.lane.b32.xlu0 %v882, 52
        %v2710 = vpop.permute.xlu0 %2709
        %2711 = vrot.lane.b32.xlu0 %v883, 52
        %v2712 = vpop.permute.xlu0 %2711
        %2713 = vrot.lane.b32.xlu0 %v884, 52
        %v2714 = vpop.permute.xlu0 %2713
        %2715 = vrot.lane.b32.xlu0 %v885, 52
        %v2716 = vpop.permute.xlu0 %2715
        %2717 = vrot.lane.b32.xlu0 %v886, 52
        %v2718 = vpop.permute.xlu0 %2717
        %2719 = vrot.lane.b32.xlu0 %v887, 52
        %v2720 = vpop.permute.xlu0 %2719
        %2721 = vrot.lane.b32.xlu0 %v888, 52
        %v2722 = vpop.permute.xlu0 %2721
        %2723 = vrot.lane.b32.xlu0 %v889, 52
        %v2724 = vpop.permute.xlu0 %2723
        %2725 = vrot.lane.b32.xlu0 %v890, 52
        %v2726 = vpop.permute.xlu0 %2725
        %2727 = vrot.lane.b32.xlu0 %v891, 52
        %v2728 = vpop.permute.xlu0 %2727
        %2729 = vrot.lane.b32.xlu0 %v892, 52
        %v2730 = vpop.permute.xlu0 %2729
        %2731 = vrot.lane.b32.xlu0 %v893, 52
        %v2732 = vpop.permute.xlu0 %2731
        %2733 = vrot.lane.b32.xlu0 %v894, 52
        %v2734 = vpop.permute.xlu0 %2733
        %2735 = vrot.lane.b32.xlu0 %v895, 52
        %v2736 = vpop.permute.xlu0 %2735
        %2737 = vrot.lane.b32.xlu0 %v896, 52
        %v2738 = vpop.permute.xlu0 %2737
        %2739 = vrot.lane.b32.xlu0 %v897, 52
        %v2740 = vpop.permute.xlu0 %2739
        %2741 = vrot.lane.b32.xlu0 %v972, 52
        %v2742 = vpop.permute.xlu0 %2741
        %2743 = vrot.lane.b32.xlu0 %v973, 52
        %v2744 = vpop.permute.xlu0 %2743
        %2745 = vrot.lane.b32.xlu0 %v974, 52
        %v2746 = vpop.permute.xlu0 %2745
        %2747 = vrot.lane.b32.xlu0 %v975, 52
        %v2748 = vpop.permute.xlu0 %2747
        %2749 = vrot.lane.b32.xlu0 %v976, 52
        %v2750 = vpop.permute.xlu0 %2749
        %2751 = vrot.lane.b32.xlu0 %v977, 52
        %v2752 = vpop.permute.xlu0 %2751
        %2753 = vrot.lane.b32.xlu0 %v978, 52
        %v2754 = vpop.permute.xlu0 %2753
        %vm2755 = vcmask 424960
        %v2756 = vsel %vm2755, %v2690, %v2692
        %v2757 = vsel %vm2755, %v2692, %v2694
        %v2758 = vsel %vm2755, %v2694, %v2696
        %v2759 = vsel %vm2755, %v2696, %v2698
        %v2760 = vsel %vm2755, %v2698, %v2700
        %v2761 = vsel %vm2755, %v2700, %v2702
        %v2762 = vsel %vm2755, %v2702, %v2704
        %v2763 = vsel %vm2755, %v2704, %v2706
        %v2764 = vsel %vm2755, %v2706, %v2708
        %v2765 = vsel %vm2755, %v2708, %v2710
        %v2766 = vsel %vm2755, %v2710, %v2712
        %v2767 = vsel %vm2755, %v2712, %v2714
        %v2768 = vsel %vm2755, %v2714, %v2716
        %v2769 = vsel %vm2755, %v2716, %v2718
        %v2770 = vsel %vm2755, %v2718, %v2720
        %v2771 = vsel %vm2755, %v2720, %v2722
        %v2772 = vsel %vm2755, %v2722, %v2724
        %v2773 = vsel %vm2755, %v2724, %v2726
        %v2774 = vsel %vm2755, %v2726, %v2728
        %v2775 = vsel %vm2755, %v2728, %v2730
        %v2776 = vsel %vm2755, %v2730, %v2732
        %v2777 = vsel %vm2755, %v2732, %v2734
        %v2778 = vsel %vm2755, %v2734, %v2736
        %v2779 = vsel %vm2755, %v2736, %v2738
        %v2780 = vsel %vm2755, %v2738, %v2740
        %v2781 = vsel %vm2755, %v2740, %v2742
        %v2782 = vsel %vm2755, %v2742, %v2744
        %v2783 = vsel %vm2755, %v2744, %v2746
        %v2784 = vsel %vm2755, %v2746, %v2748
        %v2785 = vsel %vm2755, %v2748, %v2750
        %v2786 = vsel %vm2755, %v2750, %v2752
        %v2787 = vsel %vm2755, %v2752, %v2754
        %2820 = vrot.lane.b32.xlu0 %v872, 16
        %v2821 = vpop.permute.xlu0 %2820
        %2822 = vrot.lane.b32.xlu0 %v873, 16
        %v2823 = vpop.permute.xlu0 %2822
        %2824 = vrot.lane.b32.xlu0 %v874, 16
        %v2825 = vpop.permute.xlu0 %2824
        %2826 = vrot.lane.b32.xlu0 %v875, 16
        %v2827 = vpop.permute.xlu0 %2826
        %2828 = vrot.lane.b32.xlu0 %v876, 16
        %v2829 = vpop.permute.xlu0 %2828
        %2830 = vrot.lane.b32.xlu0 %v877, 16
        %v2831 = vpop.permute.xlu0 %2830
        %2832 = vrot.lane.b32.xlu0 %v878, 16
        %v2833 = vpop.permute.xlu0 %2832
        %2834 = vrot.lane.b32.xlu0 %v879, 16
        %v2835 = vpop.permute.xlu0 %2834
        %2836 = vrot.lane.b32.xlu0 %v880, 16
        %v2837 = vpop.permute.xlu0 %2836
        %2838 = vrot.lane.b32.xlu0 %v881, 16
        %v2839 = vpop.permute.xlu0 %2838
        %2840 = vrot.lane.b32.xlu0 %v882, 16
        %v2841 = vpop.permute.xlu0 %2840
        %2842 = vrot.lane.b32.xlu0 %v883, 16
        %v2843 = vpop.permute.xlu0 %2842
        %2844 = vrot.lane.b32.xlu0 %v884, 16
        %v2845 = vpop.permute.xlu0 %2844
        %2846 = vrot.lane.b32.xlu0 %v885, 16
        %v2847 = vpop.permute.xlu0 %2846
        %2848 = vrot.lane.b32.xlu0 %v886, 16
        %v2849 = vpop.permute.xlu0 %2848
        %2850 = vrot.lane.b32.xlu0 %v887, 16
        %v2851 = vpop.permute.xlu0 %2850
        %2852 = vrot.lane.b32.xlu0 %v888, 16
        %v2853 = vpop.permute.xlu0 %2852
        %2854 = vrot.lane.b32.xlu0 %v889, 16
        %v2855 = vpop.permute.xlu0 %2854
        %2856 = vrot.lane.b32.xlu0 %v890, 16
        %v2857 = vpop.permute.xlu0 %2856
        %2858 = vrot.lane.b32.xlu0 %v891, 16
        %v2859 = vpop.permute.xlu0 %2858
        %2860 = vrot.lane.b32.xlu0 %v892, 16
        %v2861 = vpop.permute.xlu0 %2860
        %2862 = vrot.lane.b32.xlu0 %v893, 16
        %v2863 = vpop.permute.xlu0 %2862
        %2864 = vrot.lane.b32.xlu0 %v894, 16
        %v2865 = vpop.permute.xlu0 %2864
        %2866 = vrot.lane.b32.xlu0 %v895, 16
        %v2867 = vpop.permute.xlu0 %2866
        %2868 = vrot.lane.b32.xlu0 %v896, 16
        %v2869 = vpop.permute.xlu0 %2868
        %2870 = vrot.lane.b32.xlu0 %v897, 16
        %v2871 = vpop.permute.xlu0 %2870
        %2872 = vrot.lane.b32.xlu0 %v972, 16
        %v2873 = vpop.permute.xlu0 %2872
        %2874 = vrot.lane.b32.xlu0 %v973, 16
        %v2875 = vpop.permute.xlu0 %2874
        %2876 = vrot.lane.b32.xlu0 %v974, 16
        %v2877 = vpop.permute.xlu0 %2876
        %2878 = vrot.lane.b32.xlu0 %v975, 16
        %v2879 = vpop.permute.xlu0 %2878
        %2880 = vrot.lane.b32.xlu0 %v976, 16
        %v2881 = vpop.permute.xlu0 %2880
        %2882 = vrot.lane.b32.xlu0 %v977, 16
        %v2883 = vpop.permute.xlu0 %2882
        %2884 = vrot.lane.b32.xlu0 %v978, 16
        %v2885 = vpop.permute.xlu0 %2884
        %vm2886 = vcmask 130048
        %v2887 = vsel %vm2886, %v2821, %v2823
        %v2888 = vsel %vm2886, %v2823, %v2825
        %v2889 = vsel %vm2886, %v2825, %v2827
        %v2890 = vsel %vm2886, %v2827, %v2829
        %v2891 = vsel %vm2886, %v2829, %v2831
        %v2892 = vsel %vm2886, %v2831, %v2833
        %v2893 = vsel %vm2886, %v2833, %v2835
        %v2894 = vsel %vm2886, %v2835, %v2837
        %v2895 = vsel %vm2886, %v2837, %v2839
        %v2896 = vsel %vm2886, %v2839, %v2841
        %v2897 = vsel %vm2886, %v2841, %v2843
        %v2898 = vsel %vm2886, %v2843, %v2845
        %v2899 = vsel %vm2886, %v2845, %v2847
        %v2900 = vsel %vm2886, %v2847, %v2849
        %v2901 = vsel %vm2886, %v2849, %v2851
        %v2902 = vsel %vm2886, %v2851, %v2853
        %v2903 = vsel %vm2886, %v2853, %v2855
        %v2904 = vsel %vm2886, %v2855, %v2857
        %v2905 = vsel %vm2886, %v2857, %v2859
        %v2906 = vsel %vm2886, %v2859, %v2861
        %v2907 = vsel %vm2886, %v2861, %v2863
        %v2908 = vsel %vm2886, %v2863, %v2865
        %v2909 = vsel %vm2886, %v2865, %v2867
        %v2910 = vsel %vm2886, %v2867, %v2869
        %v2911 = vsel %vm2886, %v2869, %v2871
        %v2912 = vsel %vm2886, %v2871, %v2873
        %v2913 = vsel %vm2886, %v2873, %v2875
        %v2914 = vsel %vm2886, %v2875, %v2877
        %v2915 = vsel %vm2886, %v2877, %v2879
        %v2916 = vsel %vm2886, %v2879, %v2881
        %v2917 = vsel %vm2886, %v2881, %v2883
        %v2918 = vsel %vm2886, %v2883, %v2885
        %2951 = vrot.lane.b32.xlu0 %v973, 126
        %v2952 = vpop.permute.xlu0 %2951
        %2953 = vrot.lane.b32.xlu0 %v974, 126
        %v2954 = vpop.permute.xlu0 %2953
        %2955 = vrot.lane.b32.xlu0 %v975, 126
        %v2956 = vpop.permute.xlu0 %2955
        %2957 = vrot.lane.b32.xlu0 %v976, 126
        %v2958 = vpop.permute.xlu0 %2957
        %2959 = vrot.lane.b32.xlu0 %v977, 126
        %v2960 = vpop.permute.xlu0 %2959
        %2961 = vrot.lane.b32.xlu0 %v978, 126
        %v2962 = vpop.permute.xlu0 %2961
        %v2963 = vsel %vm1052, %v1051, %v2952
        %v2964 = vsel %vm1052, %v2952, %v2954
        %v2965 = vsel %vm1052, %v2954, %v2956
        %v2966 = vsel %vm1052, %v2956, %v2958
        %v2967 = vsel %vm1052, %v2958, %v2960
        %v2968 = vsel %vm1052, %v2960, %v2962
        %2969 = vrot.lane.b32.xlu0 %v878, 50
        %v2970 = vpop.permute.xlu0 %2969
        %2971 = vrot.lane.b32.xlu0 %v879, 50
        %v2972 = vpop.permute.xlu0 %2971
        %2973 = vrot.lane.b32.xlu0 %v880, 50
        %v2974 = vpop.permute.xlu0 %2973
        %2975 = vrot.lane.b32.xlu0 %v881, 50
        %v2976 = vpop.permute.xlu0 %2975
        %2977 = vrot.lane.b32.xlu0 %v882, 50
        %v2978 = vpop.permute.xlu0 %2977
        %2979 = vrot.lane.b32.xlu0 %v883, 50
        %v2980 = vpop.permute.xlu0 %2979
        %2981 = vrot.lane.b32.xlu0 %v884, 50
        %v2982 = vpop.permute.xlu0 %2981
        %2983 = vrot.lane.b32.xlu0 %v885, 50
        %v2984 = vpop.permute.xlu0 %2983
        %2985 = vrot.lane.b32.xlu0 %v886, 50
        %v2986 = vpop.permute.xlu0 %2985
        %2987 = vrot.lane.b32.xlu0 %v887, 50
        %v2988 = vpop.permute.xlu0 %2987
        %2989 = vrot.lane.b32.xlu0 %v888, 50
        %v2990 = vpop.permute.xlu0 %2989
        %2991 = vrot.lane.b32.xlu0 %v889, 50
        %v2992 = vpop.permute.xlu0 %2991
        %2993 = vrot.lane.b32.xlu0 %v890, 50
        %v2994 = vpop.permute.xlu0 %2993
        %2995 = vrot.lane.b32.xlu0 %v891, 50
        %v2996 = vpop.permute.xlu0 %2995
        %2997 = vrot.lane.b32.xlu0 %v892, 50
        %v2998 = vpop.permute.xlu0 %2997
        %2999 = vrot.lane.b32.xlu0 %v893, 50
        %v3000 = vpop.permute.xlu0 %2999
        %3001 = vrot.lane.b32.xlu0 %v894, 50
        %v3002 = vpop.permute.xlu0 %3001
        %3003 = vrot.lane.b32.xlu0 %v895, 50
        %v3004 = vpop.permute.xlu0 %3003
        %3005 = vrot.lane.b32.xlu0 %v896, 50
        %v3006 = vpop.permute.xlu0 %3005
        %3007 = vrot.lane.b32.xlu0 %v897, 50
        %v3008 = vpop.permute.xlu0 %3007
        %3009 = vrot.lane.b32.xlu0 %v972, 50
        %v3010 = vpop.permute.xlu0 %3009
        %3011 = vrot.lane.b32.xlu0 %v973, 50
        %v3012 = vpop.permute.xlu0 %3011
        %3013 = vrot.lane.b32.xlu0 %v974, 50
        %v3014 = vpop.permute.xlu0 %3013
        %3015 = vrot.lane.b32.xlu0 %v975, 50
        %v3016 = vpop.permute.xlu0 %3015
        %3017 = vrot.lane.b32.xlu0 %v976, 50
        %v3018 = vpop.permute.xlu0 %3017
        %3019 = vrot.lane.b32.xlu0 %v977, 50
        %v3020 = vpop.permute.xlu0 %3019
        %3021 = vrot.lane.b32.xlu0 %v978, 50
        %v3022 = vpop.permute.xlu0 %3021
        %3023 = vrot.lane.b32.xlu0 %v979, 50
        %v3024 = vpop.permute.xlu0 %3023
        %3025 = vrot.lane.b32.xlu0 %v980, 50
        %v3026 = vpop.permute.xlu0 %3025
        %3027 = vrot.lane.b32.xlu0 %v981, 50
        %v3028 = vpop.permute.xlu0 %3027
        %3029 = vrot.lane.b32.xlu0 %v982, 50
        %v3030 = vpop.permute.xlu0 %3029
        %3031 = vrot.lane.b32.xlu0 %v983, 50
        %v3032 = vpop.permute.xlu0 %3031
        %3033 = vrot.lane.b32.xlu0 %v984, 50
        %v3034 = vpop.permute.xlu0 %3033
        %vm3035 = vcmask 408576
        %v3036 = vsel %vm3035, %v2970, %v2972
        %v3037 = vsel %vm3035, %v2972, %v2974
        %v3038 = vsel %vm3035, %v2974, %v2976
        %v3039 = vsel %vm3035, %v2976, %v2978
        %v3040 = vsel %vm3035, %v2978, %v2980
        %v3041 = vsel %vm3035, %v2980, %v2982
        %v3042 = vsel %vm3035, %v2982, %v2984
        %v3043 = vsel %vm3035, %v2984, %v2986
        %v3044 = vsel %vm3035, %v2986, %v2988
        %v3045 = vsel %vm3035, %v2988, %v2990
        %v3046 = vsel %vm3035, %v2990, %v2992
        %v3047 = vsel %vm3035, %v2992, %v2994
        %v3048 = vsel %vm3035, %v2994, %v2996
        %v3049 = vsel %vm3035, %v2996, %v2998
        %v3050 = vsel %vm3035, %v2998, %v3000
        %v3051 = vsel %vm3035, %v3000, %v3002
        %v3052 = vsel %vm3035, %v3002, %v3004
        %v3053 = vsel %vm3035, %v3004, %v3006
        %v3054 = vsel %vm3035, %v3006, %v3008
        %v3055 = vsel %vm3035, %v3008, %v3010
        %v3056 = vsel %vm3035, %v3010, %v3012
        %v3057 = vsel %vm3035, %v3012, %v3014
        %v3058 = vsel %vm3035, %v3014, %v3016
        %v3059 = vsel %vm3035, %v3016, %v3018
        %v3060 = vsel %vm3035, %v3018, %v3020
        %v3061 = vsel %vm3035, %v3020, %v3022
        %v3062 = vsel %vm3035, %v3022, %v3024
        %v3063 = vsel %vm3035, %v3024, %v3026
        %v3064 = vsel %vm3035, %v3026, %v3028
        %v3065 = vsel %vm3035, %v3028, %v3030
        %v3066 = vsel %vm3035, %v3030, %v3032
        %v3067 = vsel %vm3035, %v3032, %v3034
        %3068 = vrot.lane.b32.xlu0 %v973, 48
        %v3069 = vpop.permute.xlu0 %3068
        %3070 = vrot.lane.b32.xlu0 %v974, 48
        %v3071 = vpop.permute.xlu0 %3070
        %3072 = vrot.lane.b32.xlu0 %v975, 48
        %v3073 = vpop.permute.xlu0 %3072
        %3074 = vrot.lane.b32.xlu0 %v976, 48
        %v3075 = vpop.permute.xlu0 %3074
        %3076 = vrot.lane.b32.xlu0 %v977, 48
        %v3077 = vpop.permute.xlu0 %3076
        %3078 = vrot.lane.b32.xlu0 %v978, 48
        %v3079 = vpop.permute.xlu0 %3078
        %3080 = vrot.lane.b32.xlu0 %v979, 48
        %v3081 = vpop.permute.xlu0 %3080
        %3082 = vrot.lane.b32.xlu0 %v980, 48
        %v3083 = vpop.permute.xlu0 %3082
        %3084 = vrot.lane.b32.xlu0 %v981, 48
        %v3085 = vpop.permute.xlu0 %3084
        %3086 = vrot.lane.b32.xlu0 %v982, 48
        %v3087 = vpop.permute.xlu0 %3086
        %3088 = vrot.lane.b32.xlu0 %v983, 48
        %v3089 = vpop.permute.xlu0 %3088
        %3090 = vrot.lane.b32.xlu0 %v984, 48
        %v3091 = vpop.permute.xlu0 %3090
        %v3092 = vsel %vm1707, %v1706, %v3069
        %v3093 = vsel %vm1707, %v3069, %v3071
        %v3094 = vsel %vm1707, %v3071, %v3073
        %v3095 = vsel %vm1707, %v3073, %v3075
        %v3096 = vsel %vm1707, %v3075, %v3077
        %v3097 = vsel %vm1707, %v3077, %v3079
        %v3098 = vsel %vm1707, %v3079, %v3081
        %v3099 = vsel %vm1707, %v3081, %v3083
        %v3100 = vsel %vm1707, %v3083, %v3085
        %v3101 = vsel %vm1707, %v3085, %v3087
        %v3102 = vsel %vm1707, %v3087, %v3089
        %v3103 = vsel %vm1707, %v3089, %v3091
        %3104 = vrot.lane.b32.xlu0 %v973, 46
        %v3105 = vpop.permute.xlu0 %3104
        %3106 = vrot.lane.b32.xlu0 %v974, 46
        %v3107 = vpop.permute.xlu0 %3106
        %3108 = vrot.lane.b32.xlu0 %v975, 46
        %v3109 = vpop.permute.xlu0 %3108
        %3110 = vrot.lane.b32.xlu0 %v976, 46
        %v3111 = vpop.permute.xlu0 %3110
        %3112 = vrot.lane.b32.xlu0 %v977, 46
        %v3113 = vpop.permute.xlu0 %3112
        %3114 = vrot.lane.b32.xlu0 %v978, 46
        %v3115 = vpop.permute.xlu0 %3114
        %3116 = vrot.lane.b32.xlu0 %v979, 46
        %v3117 = vpop.permute.xlu0 %3116
        %3118 = vrot.lane.b32.xlu0 %v980, 46
        %v3119 = vpop.permute.xlu0 %3118
        %3120 = vrot.lane.b32.xlu0 %v981, 46
        %v3121 = vpop.permute.xlu0 %3120
        %3122 = vrot.lane.b32.xlu0 %v982, 46
        %v3123 = vpop.permute.xlu0 %3122
        %3124 = vrot.lane.b32.xlu0 %v983, 46
        %v3125 = vpop.permute.xlu0 %3124
        %3126 = vrot.lane.b32.xlu0 %v984, 46
        %v3127 = vpop.permute.xlu0 %3126
        %v3128 = vsel %vm1838, %v1837, %v3105
        %v3129 = vsel %vm1838, %v3105, %v3107
        %v3130 = vsel %vm1838, %v3107, %v3109
        %v3131 = vsel %vm1838, %v3109, %v3111
        %v3132 = vsel %vm1838, %v3111, %v3113
        %v3133 = vsel %vm1838, %v3113, %v3115
        %v3134 = vsel %vm1838, %v3115, %v3117
        %v3135 = vsel %vm1838, %v3117, %v3119
        %v3136 = vsel %vm1838, %v3119, %v3121
        %v3137 = vsel %vm1838, %v3121, %v3123
        %v3138 = vsel %vm1838, %v3123, %v3125
        %v3139 = vsel %vm1838, %v3125, %v3127
        %3140 = vrot.lane.b32.xlu0 %v878, 10
        %v3141 = vpop.permute.xlu0 %3140
        %3142 = vrot.lane.b32.xlu0 %v879, 10
        %v3143 = vpop.permute.xlu0 %3142
        %3144 = vrot.lane.b32.xlu0 %v880, 10
        %v3145 = vpop.permute.xlu0 %3144
        %3146 = vrot.lane.b32.xlu0 %v881, 10
        %v3147 = vpop.permute.xlu0 %3146
        %3148 = vrot.lane.b32.xlu0 %v882, 10
        %v3149 = vpop.permute.xlu0 %3148
        %3150 = vrot.lane.b32.xlu0 %v883, 10
        %v3151 = vpop.permute.xlu0 %3150
        %3152 = vrot.lane.b32.xlu0 %v884, 10
        %v3153 = vpop.permute.xlu0 %3152
        %3154 = vrot.lane.b32.xlu0 %v885, 10
        %v3155 = vpop.permute.xlu0 %3154
        %3156 = vrot.lane.b32.xlu0 %v886, 10
        %v3157 = vpop.permute.xlu0 %3156
        %3158 = vrot.lane.b32.xlu0 %v887, 10
        %v3159 = vpop.permute.xlu0 %3158
        %3160 = vrot.lane.b32.xlu0 %v888, 10
        %v3161 = vpop.permute.xlu0 %3160
        %3162 = vrot.lane.b32.xlu0 %v889, 10
        %v3163 = vpop.permute.xlu0 %3162
        %3164 = vrot.lane.b32.xlu0 %v890, 10
        %v3165 = vpop.permute.xlu0 %3164
        %3166 = vrot.lane.b32.xlu0 %v891, 10
        %v3167 = vpop.permute.xlu0 %3166
        %3168 = vrot.lane.b32.xlu0 %v892, 10
        %v3169 = vpop.permute.xlu0 %3168
        %3170 = vrot.lane.b32.xlu0 %v893, 10
        %v3171 = vpop.permute.xlu0 %3170
        %3172 = vrot.lane.b32.xlu0 %v894, 10
        %v3173 = vpop.permute.xlu0 %3172
        %3174 = vrot.lane.b32.xlu0 %v895, 10
        %v3175 = vpop.permute.xlu0 %3174
        %3176 = vrot.lane.b32.xlu0 %v896, 10
        %v3177 = vpop.permute.xlu0 %3176
        %3178 = vrot.lane.b32.xlu0 %v897, 10
        %v3179 = vpop.permute.xlu0 %3178
        %3180 = vrot.lane.b32.xlu0 %v972, 10
        %v3181 = vpop.permute.xlu0 %3180
        %3182 = vrot.lane.b32.xlu0 %v973, 10
        %v3183 = vpop.permute.xlu0 %3182
        %3184 = vrot.lane.b32.xlu0 %v974, 10
        %v3185 = vpop.permute.xlu0 %3184
        %3186 = vrot.lane.b32.xlu0 %v975, 10
        %v3187 = vpop.permute.xlu0 %3186
        %3188 = vrot.lane.b32.xlu0 %v976, 10
        %v3189 = vpop.permute.xlu0 %3188
        %3190 = vrot.lane.b32.xlu0 %v977, 10
        %v3191 = vpop.permute.xlu0 %3190
        %3192 = vrot.lane.b32.xlu0 %v978, 10
        %v3193 = vpop.permute.xlu0 %3192
        %3194 = vrot.lane.b32.xlu0 %v979, 10
        %v3195 = vpop.permute.xlu0 %3194
        %3196 = vrot.lane.b32.xlu0 %v980, 10
        %v3197 = vpop.permute.xlu0 %3196
        %3198 = vrot.lane.b32.xlu0 %v981, 10
        %v3199 = vpop.permute.xlu0 %3198
        %3200 = vrot.lane.b32.xlu0 %v982, 10
        %v3201 = vpop.permute.xlu0 %3200
        %3202 = vrot.lane.b32.xlu0 %v983, 10
        %v3203 = vpop.permute.xlu0 %3202
        %3204 = vrot.lane.b32.xlu0 %v984, 10
        %v3205 = vpop.permute.xlu0 %3204
        %vm3206 = vcmask 80896
        %v3207 = vsel %vm3206, %v3141, %v3143
        %v3208 = vsel %vm3206, %v3143, %v3145
        %v3209 = vsel %vm3206, %v3145, %v3147
        %v3210 = vsel %vm3206, %v3147, %v3149
        %v3211 = vsel %vm3206, %v3149, %v3151
        %v3212 = vsel %vm3206, %v3151, %v3153
        %v3213 = vsel %vm3206, %v3153, %v3155
        %v3214 = vsel %vm3206, %v3155, %v3157
        %v3215 = vsel %vm3206, %v3157, %v3159
        %v3216 = vsel %vm3206, %v3159, %v3161
        %v3217 = vsel %vm3206, %v3161, %v3163
        %v3218 = vsel %vm3206, %v3163, %v3165
        %v3219 = vsel %vm3206, %v3165, %v3167
        %v3220 = vsel %vm3206, %v3167, %v3169
        %v3221 = vsel %vm3206, %v3169, %v3171
        %v3222 = vsel %vm3206, %v3171, %v3173
        %v3223 = vsel %vm3206, %v3173, %v3175
        %v3224 = vsel %vm3206, %v3175, %v3177
        %v3225 = vsel %vm3206, %v3177, %v3179
        %v3226 = vsel %vm3206, %v3179, %v3181
        %v3227 = vsel %vm3206, %v3181, %v3183
        %v3228 = vsel %vm3206, %v3183, %v3185
        %v3229 = vsel %vm3206, %v3185, %v3187
        %v3230 = vsel %vm3206, %v3187, %v3189
        %v3231 = vsel %vm3206, %v3189, %v3191
        %v3232 = vsel %vm3206, %v3191, %v3193
        %v3233 = vsel %vm3206, %v3193, %v3195
        %v3234 = vsel %vm3206, %v3195, %v3197
        %v3235 = vsel %vm3206, %v3197, %v3199
        %v3236 = vsel %vm3206, %v3199, %v3201
        %v3237 = vsel %vm3206, %v3201, %v3203
        %v3238 = vsel %vm3206, %v3203, %v3205
        %3239 = vrot.lane.b32.xlu0 %v878, 8
        %v3240 = vpop.permute.xlu0 %3239
        %3241 = vrot.lane.b32.xlu0 %v879, 8
        %v3242 = vpop.permute.xlu0 %3241
        %3243 = vrot.lane.b32.xlu0 %v880, 8
        %v3244 = vpop.permute.xlu0 %3243
        %3245 = vrot.lane.b32.xlu0 %v881, 8
        %v3246 = vpop.permute.xlu0 %3245
        %3247 = vrot.lane.b32.xlu0 %v882, 8
        %v3248 = vpop.permute.xlu0 %3247
        %3249 = vrot.lane.b32.xlu0 %v883, 8
        %v3250 = vpop.permute.xlu0 %3249
        %3251 = vrot.lane.b32.xlu0 %v884, 8
        %v3252 = vpop.permute.xlu0 %3251
        %3253 = vrot.lane.b32.xlu0 %v885, 8
        %v3254 = vpop.permute.xlu0 %3253
        %3255 = vrot.lane.b32.xlu0 %v886, 8
        %v3256 = vpop.permute.xlu0 %3255
        %3257 = vrot.lane.b32.xlu0 %v887, 8
        %v3258 = vpop.permute.xlu0 %3257
        %3259 = vrot.lane.b32.xlu0 %v888, 8
        %v3260 = vpop.permute.xlu0 %3259
        %3261 = vrot.lane.b32.xlu0 %v889, 8
        %v3262 = vpop.permute.xlu0 %3261
        %3263 = vrot.lane.b32.xlu0 %v890, 8
        %v3264 = vpop.permute.xlu0 %3263
        %3265 = vrot.lane.b32.xlu0 %v891, 8
        %v3266 = vpop.permute.xlu0 %3265
        %3267 = vrot.lane.b32.xlu0 %v892, 8
        %v3268 = vpop.permute.xlu0 %3267
        %3269 = vrot.lane.b32.xlu0 %v893, 8
        %v3270 = vpop.permute.xlu0 %3269
        %3271 = vrot.lane.b32.xlu0 %v894, 8
        %v3272 = vpop.permute.xlu0 %3271
        %3273 = vrot.lane.b32.xlu0 %v895, 8
        %v3274 = vpop.permute.xlu0 %3273
        %3275 = vrot.lane.b32.xlu0 %v896, 8
        %v3276 = vpop.permute.xlu0 %3275
        %3277 = vrot.lane.b32.xlu0 %v897, 8
        %v3278 = vpop.permute.xlu0 %3277
        %3279 = vrot.lane.b32.xlu0 %v972, 8
        %v3280 = vpop.permute.xlu0 %3279
        %3281 = vrot.lane.b32.xlu0 %v973, 8
        %v3282 = vpop.permute.xlu0 %3281
        %3283 = vrot.lane.b32.xlu0 %v974, 8
        %v3284 = vpop.permute.xlu0 %3283
        %3285 = vrot.lane.b32.xlu0 %v975, 8
        %v3286 = vpop.permute.xlu0 %3285
        %3287 = vrot.lane.b32.xlu0 %v976, 8
        %v3288 = vpop.permute.xlu0 %3287
        %3289 = vrot.lane.b32.xlu0 %v977, 8
        %v3290 = vpop.permute.xlu0 %3289
        %3291 = vrot.lane.b32.xlu0 %v978, 8
        %v3292 = vpop.permute.xlu0 %3291
        %3293 = vrot.lane.b32.xlu0 %v979, 8
        %v3294 = vpop.permute.xlu0 %3293
        %3295 = vrot.lane.b32.xlu0 %v980, 8
        %v3296 = vpop.permute.xlu0 %3295
        %3297 = vrot.lane.b32.xlu0 %v981, 8
        %v3298 = vpop.permute.xlu0 %3297
        %3299 = vrot.lane.b32.xlu0 %v982, 8
        %v3300 = vpop.permute.xlu0 %3299
        %3301 = vrot.lane.b32.xlu0 %v983, 8
        %v3302 = vpop.permute.xlu0 %3301
        %3303 = vrot.lane.b32.xlu0 %v984, 8
        %v3304 = vpop.permute.xlu0 %3303
        %vm3305 = vcmask 64512
        %v3306 = vsel %vm3305, %v3240, %v3242
        %v3307 = vsel %vm3305, %v3242, %v3244
        %v3308 = vsel %vm3305, %v3244, %v3246
        %v3309 = vsel %vm3305, %v3246, %v3248
        %v3310 = vsel %vm3305, %v3248, %v3250
        %v3311 = vsel %vm3305, %v3250, %v3252
        %v3312 = vsel %vm3305, %v3252, %v3254
        %v3313 = vsel %vm3305, %v3254, %v3256
        %v3314 = vsel %vm3305, %v3256, %v3258
        %v3315 = vsel %vm3305, %v3258, %v3260
        %v3316 = vsel %vm3305, %v3260, %v3262
        %v3317 = vsel %vm3305, %v3262, %v3264
        %v3318 = vsel %vm3305, %v3264, %v3266
        %v3319 = vsel %vm3305, %v3266, %v3268
        %v3320 = vsel %vm3305, %v3268, %v3270
        %v3321 = vsel %vm3305, %v3270, %v3272
        %v3322 = vsel %vm3305, %v3272, %v3274
        %v3323 = vsel %vm3305, %v3274, %v3276
        %v3324 = vsel %vm3305, %v3276, %v3278
        %v3325 = vsel %vm3305, %v3278, %v3280
        %v3326 = vsel %vm3305, %v3280, %v3282
        %v3327 = vsel %vm3305, %v3282, %v3284
        %v3328 = vsel %vm3305, %v3284, %v3286
        %v3329 = vsel %vm3305, %v3286, %v3288
        %v3330 = vsel %vm3305, %v3288, %v3290
        %v3331 = vsel %vm3305, %v3290, %v3292
        %v3332 = vsel %vm3305, %v3292, %v3294
        %v3333 = vsel %vm3305, %v3294, %v3296
        %v3334 = vsel %vm3305, %v3296, %v3298
        %v3335 = vsel %vm3305, %v3298, %v3300
        %v3336 = vsel %vm3305, %v3300, %v3302
        %v3337 = vsel %vm3305, %v3302, %v3304
        %3338 = vrot.lane.b32.xlu0 %v878, 6
        %v3339 = vpop.permute.xlu0 %3338
        %3340 = vrot.lane.b32.xlu0 %v879, 6
        %v3341 = vpop.permute.xlu0 %3340
        %3342 = vrot.lane.b32.xlu0 %v880, 6
        %v3343 = vpop.permute.xlu0 %3342
        %3344 = vrot.lane.b32.xlu0 %v881, 6
        %v3345 = vpop.permute.xlu0 %3344
        %3346 = vrot.lane.b32.xlu0 %v882, 6
        %v3347 = vpop.permute.xlu0 %3346
        %3348 = vrot.lane.b32.xlu0 %v883, 6
        %v3349 = vpop.permute.xlu0 %3348
        %3350 = vrot.lane.b32.xlu0 %v884, 6
        %v3351 = vpop.permute.xlu0 %3350
        %3352 = vrot.lane.b32.xlu0 %v885, 6
        %v3353 = vpop.permute.xlu0 %3352
        %3354 = vrot.lane.b32.xlu0 %v886, 6
        %v3355 = vpop.permute.xlu0 %3354
        %3356 = vrot.lane.b32.xlu0 %v887, 6
        %v3357 = vpop.permute.xlu0 %3356
        %3358 = vrot.lane.b32.xlu0 %v888, 6
        %v3359 = vpop.permute.xlu0 %3358
        %3360 = vrot.lane.b32.xlu0 %v889, 6
        %v3361 = vpop.permute.xlu0 %3360
        %3362 = vrot.lane.b32.xlu0 %v890, 6
        %v3363 = vpop.permute.xlu0 %3362
        %3364 = vrot.lane.b32.xlu0 %v891, 6
        %v3365 = vpop.permute.xlu0 %3364
        %3366 = vrot.lane.b32.xlu0 %v892, 6
        %v3367 = vpop.permute.xlu0 %3366
        %3368 = vrot.lane.b32.xlu0 %v893, 6
        %v3369 = vpop.permute.xlu0 %3368
        %3370 = vrot.lane.b32.xlu0 %v894, 6
        %v3371 = vpop.permute.xlu0 %3370
        %3372 = vrot.lane.b32.xlu0 %v895, 6
        %v3373 = vpop.permute.xlu0 %3372
        %3374 = vrot.lane.b32.xlu0 %v896, 6
        %v3375 = vpop.permute.xlu0 %3374
        %3376 = vrot.lane.b32.xlu0 %v897, 6
        %v3377 = vpop.permute.xlu0 %3376
        %3378 = vrot.lane.b32.xlu0 %v972, 6
        %v3379 = vpop.permute.xlu0 %3378
        %3380 = vrot.lane.b32.xlu0 %v973, 6
        %v3381 = vpop.permute.xlu0 %3380
        %3382 = vrot.lane.b32.xlu0 %v974, 6
        %v3383 = vpop.permute.xlu0 %3382
        %3384 = vrot.lane.b32.xlu0 %v975, 6
        %v3385 = vpop.permute.xlu0 %3384
        %3386 = vrot.lane.b32.xlu0 %v976, 6
        %v3387 = vpop.permute.xlu0 %3386
        %3388 = vrot.lane.b32.xlu0 %v977, 6
        %v3389 = vpop.permute.xlu0 %3388
        %3390 = vrot.lane.b32.xlu0 %v978, 6
        %v3391 = vpop.permute.xlu0 %3390
        %3392 = vrot.lane.b32.xlu0 %v979, 6
        %v3393 = vpop.permute.xlu0 %3392
        %3394 = vrot.lane.b32.xlu0 %v980, 6
        %v3395 = vpop.permute.xlu0 %3394
        %3396 = vrot.lane.b32.xlu0 %v981, 6
        %v3397 = vpop.permute.xlu0 %3396
        %3398 = vrot.lane.b32.xlu0 %v982, 6
        %v3399 = vpop.permute.xlu0 %3398
        %3400 = vrot.lane.b32.xlu0 %v983, 6
        %v3401 = vpop.permute.xlu0 %3400
        %3402 = vrot.lane.b32.xlu0 %v984, 6
        %v3403 = vpop.permute.xlu0 %3402
        %vm3404 = vcmask 48128
        %v3405 = vsel %vm3404, %v3339, %v3341
        %v3406 = vsel %vm3404, %v3341, %v3343
        %v3407 = vsel %vm3404, %v3343, %v3345
        %v3408 = vsel %vm3404, %v3345, %v3347
        %v3409 = vsel %vm3404, %v3347, %v3349
        %v3410 = vsel %vm3404, %v3349, %v3351
        %v3411 = vsel %vm3404, %v3351, %v3353
        %v3412 = vsel %vm3404, %v3353, %v3355
        %v3413 = vsel %vm3404, %v3355, %v3357
        %v3414 = vsel %vm3404, %v3357, %v3359
        %v3415 = vsel %vm3404, %v3359, %v3361
        %v3416 = vsel %vm3404, %v3361, %v3363
        %v3417 = vsel %vm3404, %v3363, %v3365
        %v3418 = vsel %vm3404, %v3365, %v3367
        %v3419 = vsel %vm3404, %v3367, %v3369
        %v3420 = vsel %vm3404, %v3369, %v3371
        %v3421 = vsel %vm3404, %v3371, %v3373
        %v3422 = vsel %vm3404, %v3373, %v3375
        %v3423 = vsel %vm3404, %v3375, %v3377
        %v3424 = vsel %vm3404, %v3377, %v3379
        %v3425 = vsel %vm3404, %v3379, %v3381
        %v3426 = vsel %vm3404, %v3381, %v3383
        %v3427 = vsel %vm3404, %v3383, %v3385
        %v3428 = vsel %vm3404, %v3385, %v3387
        %v3429 = vsel %vm3404, %v3387, %v3389
        %v3430 = vsel %vm3404, %v3389, %v3391
        %v3431 = vsel %vm3404, %v3391, %v3393
        %v3432 = vsel %vm3404, %v3393, %v3395
        %v3433 = vsel %vm3404, %v3395, %v3397
        %v3434 = vsel %vm3404, %v3397, %v3399
        %v3435 = vsel %vm3404, %v3399, %v3401
        %v3436 = vsel %vm3404, %v3401, %v3403
        %3437 = vrot.lane.b32.xlu0 %v879, 98
        %v3438 = vpop.permute.xlu0 %3437
        %3439 = vrot.lane.b32.xlu0 %v880, 98
        %v3440 = vpop.permute.xlu0 %3439
        %3441 = vrot.lane.b32.xlu0 %v881, 98
        %v3442 = vpop.permute.xlu0 %3441
        %3443 = vrot.lane.b32.xlu0 %v882, 98
        %v3444 = vpop.permute.xlu0 %3443
        %3445 = vrot.lane.b32.xlu0 %v883, 98
        %v3446 = vpop.permute.xlu0 %3445
        %3447 = vrot.lane.b32.xlu0 %v884, 98
        %v3448 = vpop.permute.xlu0 %3447
        %3449 = vrot.lane.b32.xlu0 %v885, 98
        %v3450 = vpop.permute.xlu0 %3449
        %3451 = vrot.lane.b32.xlu0 %v886, 98
        %v3452 = vpop.permute.xlu0 %3451
        %3453 = vrot.lane.b32.xlu0 %v887, 98
        %v3454 = vpop.permute.xlu0 %3453
        %3455 = vrot.lane.b32.xlu0 %v888, 98
        %v3456 = vpop.permute.xlu0 %3455
        %3457 = vrot.lane.b32.xlu0 %v889, 98
        %v3458 = vpop.permute.xlu0 %3457
        %3459 = vrot.lane.b32.xlu0 %v890, 98
        %v3460 = vpop.permute.xlu0 %3459
        %3461 = vrot.lane.b32.xlu0 %v891, 98
        %v3462 = vpop.permute.xlu0 %3461
        %3463 = vrot.lane.b32.xlu0 %v892, 98
        %v3464 = vpop.permute.xlu0 %3463
        %3465 = vrot.lane.b32.xlu0 %v893, 98
        %v3466 = vpop.permute.xlu0 %3465
        %3467 = vrot.lane.b32.xlu0 %v894, 98
        %v3468 = vpop.permute.xlu0 %3467
        %3469 = vrot.lane.b32.xlu0 %v895, 98
        %v3470 = vpop.permute.xlu0 %3469
        %3471 = vrot.lane.b32.xlu0 %v896, 98
        %v3472 = vpop.permute.xlu0 %3471
        %3473 = vrot.lane.b32.xlu0 %v897, 98
        %v3474 = vpop.permute.xlu0 %3473
        %3475 = vrot.lane.b32.xlu0 %v972, 98
        %v3476 = vpop.permute.xlu0 %3475
        %3477 = vrot.lane.b32.xlu0 %v973, 98
        %v3478 = vpop.permute.xlu0 %3477
        %3479 = vrot.lane.b32.xlu0 %v974, 98
        %v3480 = vpop.permute.xlu0 %3479
        %3481 = vrot.lane.b32.xlu0 %v975, 98
        %v3482 = vpop.permute.xlu0 %3481
        %3483 = vrot.lane.b32.xlu0 %v976, 98
        %v3484 = vpop.permute.xlu0 %3483
        %3485 = vrot.lane.b32.xlu0 %v977, 98
        %v3486 = vpop.permute.xlu0 %3485
        %3487 = vrot.lane.b32.xlu0 %v978, 98
        %v3488 = vpop.permute.xlu0 %3487
        %3489 = vrot.lane.b32.xlu0 %v979, 98
        %v3490 = vpop.permute.xlu0 %3489
        %3491 = vrot.lane.b32.xlu0 %v980, 98
        %v3492 = vpop.permute.xlu0 %3491
        %3493 = vrot.lane.b32.xlu0 %v981, 98
        %v3494 = vpop.permute.xlu0 %3493
        %3495 = vrot.lane.b32.xlu0 %v982, 98
        %v3496 = vpop.permute.xlu0 %3495
        %3497 = vrot.lane.b32.xlu0 %v983, 98
        %v3498 = vpop.permute.xlu0 %3497
        %3499 = vrot.lane.b32.xlu0 %v984, 98
        %v3500 = vpop.permute.xlu0 %3499
        %3501 = vrot.lane.b32.xlu0 %v985, 98
        %v3502 = vpop.permute.xlu0 %3501
        %vm3503 = vcmask 801792
        %v3504 = vsel %vm3503, %v3438, %v3440
        %v3505 = vsel %vm3503, %v3440, %v3442
        %v3506 = vsel %vm3503, %v3442, %v3444
        %v3507 = vsel %vm3503, %v3444, %v3446
        %v3508 = vsel %vm3503, %v3446, %v3448
        %v3509 = vsel %vm3503, %v3448, %v3450
        %v3510 = vsel %vm3503, %v3450, %v3452
        %v3511 = vsel %vm3503, %v3452, %v3454
        %v3512 = vsel %vm3503, %v3454, %v3456
        %v3513 = vsel %vm3503, %v3456, %v3458
        %v3514 = vsel %vm3503, %v3458, %v3460
        %v3515 = vsel %vm3503, %v3460, %v3462
        %v3516 = vsel %vm3503, %v3462, %v3464
        %v3517 = vsel %vm3503, %v3464, %v3466
        %v3518 = vsel %vm3503, %v3466, %v3468
        %v3519 = vsel %vm3503, %v3468, %v3470
        %v3520 = vsel %vm3503, %v3470, %v3472
        %v3521 = vsel %vm3503, %v3472, %v3474
        %v3522 = vsel %vm3503, %v3474, %v3476
        %v3523 = vsel %vm3503, %v3476, %v3478
        %v3524 = vsel %vm3503, %v3478, %v3480
        %v3525 = vsel %vm3503, %v3480, %v3482
        %v3526 = vsel %vm3503, %v3482, %v3484
        %v3527 = vsel %vm3503, %v3484, %v3486
        %v3528 = vsel %vm3503, %v3486, %v3488
        %v3529 = vsel %vm3503, %v3488, %v3490
        %v3530 = vsel %vm3503, %v3490, %v3492
        %v3531 = vsel %vm3503, %v3492, %v3494
        %v3532 = vsel %vm3503, %v3494, %v3496
        %v3533 = vsel %vm3503, %v3496, %v3498
        %v3534 = vsel %vm3503, %v3498, %v3500
        %v3535 = vsel %vm3503, %v3500, %v3502
        %3536 = vrot.lane.b32.xlu0 %v979, 96
        %v3537 = vpop.permute.xlu0 %3536
        %3538 = vrot.lane.b32.xlu0 %v980, 96
        %v3539 = vpop.permute.xlu0 %3538
        %3540 = vrot.lane.b32.xlu0 %v981, 96
        %v3541 = vpop.permute.xlu0 %3540
        %3542 = vrot.lane.b32.xlu0 %v982, 96
        %v3543 = vpop.permute.xlu0 %3542
        %3544 = vrot.lane.b32.xlu0 %v983, 96
        %v3545 = vpop.permute.xlu0 %3544
        %3546 = vrot.lane.b32.xlu0 %v984, 96
        %v3547 = vpop.permute.xlu0 %3546
        %3548 = vrot.lane.b32.xlu0 %v985, 96
        %v3549 = vpop.permute.xlu0 %3548
        %v3550 = vsel %vm2100, %v2099, %v3537
        %v3551 = vsel %vm2100, %v3537, %v3539
        %v3552 = vsel %vm2100, %v3539, %v3541
        %v3553 = vsel %vm2100, %v3541, %v3543
        %v3554 = vsel %vm2100, %v3543, %v3545
        %v3555 = vsel %vm2100, %v3545, %v3547
        %v3556 = vsel %vm2100, %v3547, %v3549
        %3557 = vrot.lane.b32.xlu0 %v979, 94
        %v3558 = vpop.permute.xlu0 %3557
        %3559 = vrot.lane.b32.xlu0 %v980, 94
        %v3560 = vpop.permute.xlu0 %3559
        %3561 = vrot.lane.b32.xlu0 %v981, 94
        %v3562 = vpop.permute.xlu0 %3561
        %3563 = vrot.lane.b32.xlu0 %v982, 94
        %v3564 = vpop.permute.xlu0 %3563
        %3565 = vrot.lane.b32.xlu0 %v983, 94
        %v3566 = vpop.permute.xlu0 %3565
        %3567 = vrot.lane.b32.xlu0 %v984, 94
        %v3568 = vpop.permute.xlu0 %3567
        %3569 = vrot.lane.b32.xlu0 %v985, 94
        %v3570 = vpop.permute.xlu0 %3569
        %v3571 = vsel %vm2231, %v2230, %v3558
        %v3572 = vsel %vm2231, %v3558, %v3560
        %v3573 = vsel %vm2231, %v3560, %v3562
        %v3574 = vsel %vm2231, %v3562, %v3564
        %v3575 = vsel %vm2231, %v3564, %v3566
        %v3576 = vsel %vm2231, %v3566, %v3568
        %v3577 = vsel %vm2231, %v3568, %v3570
        %3578 = vrot.lane.b32.xlu0 %v872, 14
        %v3579 = vpop.permute.xlu0 %3578
        %3580 = vrot.lane.b32.xlu0 %v873, 14
        %v3581 = vpop.permute.xlu0 %3580
        %3582 = vrot.lane.b32.xlu0 %v874, 14
        %v3583 = vpop.permute.xlu0 %3582
        %3584 = vrot.lane.b32.xlu0 %v875, 14
        %v3585 = vpop.permute.xlu0 %3584
        %3586 = vrot.lane.b32.xlu0 %v876, 14
        %v3587 = vpop.permute.xlu0 %3586
        %3588 = vrot.lane.b32.xlu0 %v877, 14
        %v3589 = vpop.permute.xlu0 %3588
        %3590 = vrot.lane.b32.xlu0 %v878, 14
        %v3591 = vpop.permute.xlu0 %3590
        %3592 = vrot.lane.b32.xlu0 %v879, 14
        %v3593 = vpop.permute.xlu0 %3592
        %3594 = vrot.lane.b32.xlu0 %v880, 14
        %v3595 = vpop.permute.xlu0 %3594
        %3596 = vrot.lane.b32.xlu0 %v881, 14
        %v3597 = vpop.permute.xlu0 %3596
        %3598 = vrot.lane.b32.xlu0 %v882, 14
        %v3599 = vpop.permute.xlu0 %3598
        %3600 = vrot.lane.b32.xlu0 %v883, 14
        %v3601 = vpop.permute.xlu0 %3600
        %3602 = vrot.lane.b32.xlu0 %v884, 14
        %v3603 = vpop.permute.xlu0 %3602
        %3604 = vrot.lane.b32.xlu0 %v885, 14
        %v3605 = vpop.permute.xlu0 %3604
        %3606 = vrot.lane.b32.xlu0 %v886, 14
        %v3607 = vpop.permute.xlu0 %3606
        %3608 = vrot.lane.b32.xlu0 %v887, 14
        %v3609 = vpop.permute.xlu0 %3608
        %3610 = vrot.lane.b32.xlu0 %v888, 14
        %v3611 = vpop.permute.xlu0 %3610
        %3612 = vrot.lane.b32.xlu0 %v889, 14
        %v3613 = vpop.permute.xlu0 %3612
        %3614 = vrot.lane.b32.xlu0 %v890, 14
        %v3615 = vpop.permute.xlu0 %3614
        %3616 = vrot.lane.b32.xlu0 %v891, 14
        %v3617 = vpop.permute.xlu0 %3616
        %3618 = vrot.lane.b32.xlu0 %v892, 14
        %v3619 = vpop.permute.xlu0 %3618
        %3620 = vrot.lane.b32.xlu0 %v893, 14
        %v3621 = vpop.permute.xlu0 %3620
        %3622 = vrot.lane.b32.xlu0 %v894, 14
        %v3623 = vpop.permute.xlu0 %3622
        %3624 = vrot.lane.b32.xlu0 %v895, 14
        %v3625 = vpop.permute.xlu0 %3624
        %3626 = vrot.lane.b32.xlu0 %v896, 14
        %v3627 = vpop.permute.xlu0 %3626
        %3628 = vrot.lane.b32.xlu0 %v897, 14
        %v3629 = vpop.permute.xlu0 %3628
        %3630 = vrot.lane.b32.xlu0 %v972, 14
        %v3631 = vpop.permute.xlu0 %3630
        %3632 = vrot.lane.b32.xlu0 %v973, 14
        %v3633 = vpop.permute.xlu0 %3632
        %3634 = vrot.lane.b32.xlu0 %v974, 14
        %v3635 = vpop.permute.xlu0 %3634
        %3636 = vrot.lane.b32.xlu0 %v975, 14
        %v3637 = vpop.permute.xlu0 %3636
        %3638 = vrot.lane.b32.xlu0 %v976, 14
        %v3639 = vpop.permute.xlu0 %3638
        %3640 = vrot.lane.b32.xlu0 %v977, 14
        %v3641 = vpop.permute.xlu0 %3640
        %3642 = vrot.lane.b32.xlu0 %v978, 14
        %v3643 = vpop.permute.xlu0 %3642
        %3644 = vrot.lane.b32.xlu0 %v1059, 14
        %v3645 = vpop.permute.xlu0 %3644
        %3646 = vrot.lane.b32.xlu0 %v1060, 14
        %v3647 = vpop.permute.xlu0 %3646
        %3648 = vrot.lane.b32.xlu0 %v1061, 14
        %v3649 = vpop.permute.xlu0 %3648
        %3650 = vrot.lane.b32.xlu0 %v1062, 14
        %v3651 = vpop.permute.xlu0 %3650
        %3652 = vrot.lane.b32.xlu0 %v1063, 14
        %v3653 = vpop.permute.xlu0 %3652
        %3654 = vrot.lane.b32.xlu0 %v1064, 14
        %v3655 = vpop.permute.xlu0 %3654
        %3656 = vrot.lane.b32.xlu0 %v1065, 14
        %v3657 = vpop.permute.xlu0 %3656
        %3658 = vrot.lane.b32.xlu0 %v1066, 14
        %v3659 = vpop.permute.xlu0 %3658
        %3660 = vrot.lane.b32.xlu0 %v1067, 14
        %v3661 = vpop.permute.xlu0 %3660
        %3662 = vrot.lane.b32.xlu0 %v1068, 14
        %v3663 = vpop.permute.xlu0 %3662
        %3664 = vrot.lane.b32.xlu0 %v1069, 14
        %v3665 = vpop.permute.xlu0 %3664
        %3666 = vrot.lane.b32.xlu0 %v1070, 14
        %v3667 = vpop.permute.xlu0 %3666
        %3668 = vrot.lane.b32.xlu0 %v1071, 14
        %v3669 = vpop.permute.xlu0 %3668
        %3670 = vrot.lane.b32.xlu0 %v1072, 14
        %v3671 = vpop.permute.xlu0 %3670
        %3672 = vrot.lane.b32.xlu0 %v1073, 14
        %v3673 = vpop.permute.xlu0 %3672
        %3674 = vrot.lane.b32.xlu0 %v1074, 14
        %v3675 = vpop.permute.xlu0 %3674
        %3676 = vrot.lane.b32.xlu0 %v1075, 14
        %v3677 = vpop.permute.xlu0 %3676
        %3678 = vrot.lane.b32.xlu0 %v1076, 14
        %v3679 = vpop.permute.xlu0 %3678
        %3680 = vrot.lane.b32.xlu0 %v1077, 14
        %v3681 = vpop.permute.xlu0 %3680
        %3682 = vrot.lane.b32.xlu0 %v1078, 14
        %v3683 = vpop.permute.xlu0 %3682
        %3684 = vrot.lane.b32.xlu0 %v1079, 14
        %v3685 = vpop.permute.xlu0 %3684
        %3686 = vrot.lane.b32.xlu0 %v1080, 14
        %v3687 = vpop.permute.xlu0 %3686
        %3688 = vrot.lane.b32.xlu0 %v1081, 14
        %v3689 = vpop.permute.xlu0 %3688
        %3690 = vrot.lane.b32.xlu0 %v1082, 14
        %v3691 = vpop.permute.xlu0 %3690
        %3692 = vrot.lane.b32.xlu0 %v1083, 14
        %v3693 = vpop.permute.xlu0 %3692
        %3694 = vrot.lane.b32.xlu0 %v1084, 14
        %v3695 = vpop.permute.xlu0 %3694
        %3696 = vrot.lane.b32.xlu0 %v2963, 14
        %v3697 = vpop.permute.xlu0 %3696
        %3698 = vrot.lane.b32.xlu0 %v2964, 14
        %v3699 = vpop.permute.xlu0 %3698
        %3700 = vrot.lane.b32.xlu0 %v2965, 14
        %v3701 = vpop.permute.xlu0 %3700
        %3702 = vrot.lane.b32.xlu0 %v2966, 14
        %v3703 = vpop.permute.xlu0 %3702
        %3704 = vrot.lane.b32.xlu0 %v2967, 14
        %v3705 = vpop.permute.xlu0 %3704
        %3706 = vrot.lane.b32.xlu0 %v2968, 14
        %v3707 = vpop.permute.xlu0 %3706
        %3708 = vrot.lane.b32.xlu0 %v2962, 14
        %v3709 = vpop.permute.xlu0 %3708
        %3710 = vrot.lane.b32.xlu0 %v2970, 14
        %v3711 = vpop.permute.xlu0 %3710
        %3712 = vrot.lane.b32.xlu0 %v3036, 14
        %v3713 = vpop.permute.xlu0 %3712
        %3714 = vrot.lane.b32.xlu0 %v3037, 14
        %v3715 = vpop.permute.xlu0 %3714
        %3716 = vrot.lane.b32.xlu0 %v3038, 14
        %v3717 = vpop.permute.xlu0 %3716
        %3718 = vrot.lane.b32.xlu0 %v3039, 14
        %v3719 = vpop.permute.xlu0 %3718
        %3720 = vrot.lane.b32.xlu0 %v3040, 14
        %v3721 = vpop.permute.xlu0 %3720
        %3722 = vrot.lane.b32.xlu0 %v3041, 14
        %v3723 = vpop.permute.xlu0 %3722
        %3724 = vrot.lane.b32.xlu0 %v3042, 14
        %v3725 = vpop.permute.xlu0 %3724
        %3726 = vrot.lane.b32.xlu0 %v3043, 14
        %v3727 = vpop.permute.xlu0 %3726
        %3728 = vrot.lane.b32.xlu0 %v3044, 14
        %v3729 = vpop.permute.xlu0 %3728
        %3730 = vrot.lane.b32.xlu0 %v3045, 14
        %v3731 = vpop.permute.xlu0 %3730
        %3732 = vrot.lane.b32.xlu0 %v3046, 14
        %v3733 = vpop.permute.xlu0 %3732
        %3734 = vrot.lane.b32.xlu0 %v3047, 14
        %v3735 = vpop.permute.xlu0 %3734
        %3736 = vrot.lane.b32.xlu0 %v3048, 14
        %v3737 = vpop.permute.xlu0 %3736
        %3738 = vrot.lane.b32.xlu0 %v3049, 14
        %v3739 = vpop.permute.xlu0 %3738
        %3740 = vrot.lane.b32.xlu0 %v3050, 14
        %v3741 = vpop.permute.xlu0 %3740
        %3742 = vrot.lane.b32.xlu0 %v3051, 14
        %v3743 = vpop.permute.xlu0 %3742
        %3744 = vrot.lane.b32.xlu0 %v3052, 14
        %v3745 = vpop.permute.xlu0 %3744
        %3746 = vrot.lane.b32.xlu0 %v3053, 14
        %v3747 = vpop.permute.xlu0 %3746
        %3748 = vrot.lane.b32.xlu0 %v3054, 14
        %v3749 = vpop.permute.xlu0 %3748
        %3750 = vrot.lane.b32.xlu0 %v3055, 14
        %v3751 = vpop.permute.xlu0 %3750
        %3752 = vrot.lane.b32.xlu0 %v3056, 14
        %v3753 = vpop.permute.xlu0 %3752
        %3754 = vrot.lane.b32.xlu0 %v3057, 14
        %v3755 = vpop.permute.xlu0 %3754
        %3756 = vrot.lane.b32.xlu0 %v3058, 14
        %v3757 = vpop.permute.xlu0 %3756
        %3758 = vrot.lane.b32.xlu0 %v3059, 14
        %v3759 = vpop.permute.xlu0 %3758
        %3760 = vrot.lane.b32.xlu0 %v3060, 14
        %v3761 = vpop.permute.xlu0 %3760
        %3762 = vrot.lane.b32.xlu0 %v3061, 14
        %v3763 = vpop.permute.xlu0 %3762
        %3764 = vrot.lane.b32.xlu0 %v3062, 14
        %v3765 = vpop.permute.xlu0 %3764
        %3766 = vrot.lane.b32.xlu0 %v3063, 14
        %v3767 = vpop.permute.xlu0 %3766
        %3768 = vrot.lane.b32.xlu0 %v3064, 14
        %v3769 = vpop.permute.xlu0 %3768
        %3770 = vrot.lane.b32.xlu0 %v3065, 14
        %v3771 = vpop.permute.xlu0 %3770
        %3772 = vrot.lane.b32.xlu0 %v3066, 14
        %v3773 = vpop.permute.xlu0 %3772
        %3774 = vrot.lane.b32.xlu0 %v3067, 14
        %v3775 = vpop.permute.xlu0 %3774
        %3776 = vrot.lane.b32.xlu0 %v1666, 14
        %v3777 = vpop.permute.xlu0 %3776
        %3778 = vrot.lane.b32.xlu0 %v1720, 14
        %v3779 = vpop.permute.xlu0 %3778
        %3780 = vrot.lane.b32.xlu0 %v1721, 14
        %v3781 = vpop.permute.xlu0 %3780
        %3782 = vrot.lane.b32.xlu0 %v1722, 14
        %v3783 = vpop.permute.xlu0 %3782
        %3784 = vrot.lane.b32.xlu0 %v1723, 14
        %v3785 = vpop.permute.xlu0 %3784
        %3786 = vrot.lane.b32.xlu0 %v1724, 14
        %v3787 = vpop.permute.xlu0 %3786
        %3788 = vrot.lane.b32.xlu0 %v1725, 14
        %v3789 = vpop.permute.xlu0 %3788
        %3790 = vrot.lane.b32.xlu0 %v1726, 14
        %v3791 = vpop.permute.xlu0 %3790
        %3792 = vrot.lane.b32.xlu0 %v1727, 14
        %v3793 = vpop.permute.xlu0 %3792
        %3794 = vrot.lane.b32.xlu0 %v1728, 14
        %v3795 = vpop.permute.xlu0 %3794
        %3796 = vrot.lane.b32.xlu0 %v1729, 14
        %v3797 = vpop.permute.xlu0 %3796
        %3798 = vrot.lane.b32.xlu0 %v1730, 14
        %v3799 = vpop.permute.xlu0 %3798
        %3800 = vrot.lane.b32.xlu0 %v1731, 14
        %v3801 = vpop.permute.xlu0 %3800
        %3802 = vrot.lane.b32.xlu0 %v1732, 14
        %v3803 = vpop.permute.xlu0 %3802
        %3804 = vrot.lane.b32.xlu0 %v1733, 14
        %v3805 = vpop.permute.xlu0 %3804
        %3806 = vrot.lane.b32.xlu0 %v1734, 14
        %v3807 = vpop.permute.xlu0 %3806
        %3808 = vrot.lane.b32.xlu0 %v1735, 14
        %v3809 = vpop.permute.xlu0 %3808
        %3810 = vrot.lane.b32.xlu0 %v1736, 14
        %v3811 = vpop.permute.xlu0 %3810
        %3812 = vrot.lane.b32.xlu0 %v1737, 14
        %v3813 = vpop.permute.xlu0 %3812
        %3814 = vrot.lane.b32.xlu0 %v1738, 14
        %v3815 = vpop.permute.xlu0 %3814
        %3816 = vrot.lane.b32.xlu0 %v1739, 14
        %v3817 = vpop.permute.xlu0 %3816
        %3818 = vrot.lane.b32.xlu0 %v3092, 14
        %v3819 = vpop.permute.xlu0 %3818
        %3820 = vrot.lane.b32.xlu0 %v3093, 14
        %v3821 = vpop.permute.xlu0 %3820
        %3822 = vrot.lane.b32.xlu0 %v3094, 14
        %v3823 = vpop.permute.xlu0 %3822
        %3824 = vrot.lane.b32.xlu0 %v3095, 14
        %v3825 = vpop.permute.xlu0 %3824
        %3826 = vrot.lane.b32.xlu0 %v3096, 14
        %v3827 = vpop.permute.xlu0 %3826
        %3828 = vrot.lane.b32.xlu0 %v3097, 14
        %v3829 = vpop.permute.xlu0 %3828
        %3830 = vrot.lane.b32.xlu0 %v3098, 14
        %v3831 = vpop.permute.xlu0 %3830
        %3832 = vrot.lane.b32.xlu0 %v3099, 14
        %v3833 = vpop.permute.xlu0 %3832
        %3834 = vrot.lane.b32.xlu0 %v3100, 14
        %v3835 = vpop.permute.xlu0 %3834
        %3836 = vrot.lane.b32.xlu0 %v3101, 14
        %v3837 = vpop.permute.xlu0 %3836
        %3838 = vrot.lane.b32.xlu0 %v3102, 14
        %v3839 = vpop.permute.xlu0 %3838
        %3840 = vrot.lane.b32.xlu0 %v3103, 14
        %v3841 = vpop.permute.xlu0 %3840
        %3842 = vrot.lane.b32.xlu0 %v1797, 14
        %v3843 = vpop.permute.xlu0 %3842
        %3844 = vrot.lane.b32.xlu0 %v1851, 14
        %v3845 = vpop.permute.xlu0 %3844
        %3846 = vrot.lane.b32.xlu0 %v1852, 14
        %v3847 = vpop.permute.xlu0 %3846
        %3848 = vrot.lane.b32.xlu0 %v1853, 14
        %v3849 = vpop.permute.xlu0 %3848
        %3850 = vrot.lane.b32.xlu0 %v1854, 14
        %v3851 = vpop.permute.xlu0 %3850
        %3852 = vrot.lane.b32.xlu0 %v1855, 14
        %v3853 = vpop.permute.xlu0 %3852
        %3854 = vrot.lane.b32.xlu0 %v1856, 14
        %v3855 = vpop.permute.xlu0 %3854
        %3856 = vrot.lane.b32.xlu0 %v1857, 14
        %v3857 = vpop.permute.xlu0 %3856
        %3858 = vrot.lane.b32.xlu0 %v1858, 14
        %v3859 = vpop.permute.xlu0 %3858
        %3860 = vrot.lane.b32.xlu0 %v1859, 14
        %v3861 = vpop.permute.xlu0 %3860
        %3862 = vrot.lane.b32.xlu0 %v1860, 14
        %v3863 = vpop.permute.xlu0 %3862
        %3864 = vrot.lane.b32.xlu0 %v1861, 14
        %v3865 = vpop.permute.xlu0 %3864
        %3866 = vrot.lane.b32.xlu0 %v1862, 14
        %v3867 = vpop.permute.xlu0 %3866
        %3868 = vrot.lane.b32.xlu0 %v1863, 14
        %v3869 = vpop.permute.xlu0 %3868
        %3870 = vrot.lane.b32.xlu0 %v1864, 14
        %v3871 = vpop.permute.xlu0 %3870
        %3872 = vrot.lane.b32.xlu0 %v1865, 14
        %v3873 = vpop.permute.xlu0 %3872
        %3874 = vrot.lane.b32.xlu0 %v1866, 14
        %v3875 = vpop.permute.xlu0 %3874
        %3876 = vrot.lane.b32.xlu0 %v1867, 14
        %v3877 = vpop.permute.xlu0 %3876
        %3878 = vrot.lane.b32.xlu0 %v1868, 14
        %v3879 = vpop.permute.xlu0 %3878
        %3880 = vrot.lane.b32.xlu0 %v1869, 14
        %v3881 = vpop.permute.xlu0 %3880
        %3882 = vrot.lane.b32.xlu0 %v1870, 14
        %v3883 = vpop.permute.xlu0 %3882
        %3884 = vrot.lane.b32.xlu0 %v3128, 14
        %v3885 = vpop.permute.xlu0 %3884
        %3886 = vrot.lane.b32.xlu0 %v3129, 14
        %v3887 = vpop.permute.xlu0 %3886
        %3888 = vrot.lane.b32.xlu0 %v3130, 14
        %v3889 = vpop.permute.xlu0 %3888
        %3890 = vrot.lane.b32.xlu0 %v3131, 14
        %v3891 = vpop.permute.xlu0 %3890
        %3892 = vrot.lane.b32.xlu0 %v3132, 14
        %v3893 = vpop.permute.xlu0 %3892
        %3894 = vrot.lane.b32.xlu0 %v3133, 14
        %v3895 = vpop.permute.xlu0 %3894
        %3896 = vrot.lane.b32.xlu0 %v3134, 14
        %v3897 = vpop.permute.xlu0 %3896
        %3898 = vrot.lane.b32.xlu0 %v3135, 14
        %v3899 = vpop.permute.xlu0 %3898
        %3900 = vrot.lane.b32.xlu0 %v3136, 14
        %v3901 = vpop.permute.xlu0 %3900
        %3902 = vrot.lane.b32.xlu0 %v3137, 14
        %v3903 = vpop.permute.xlu0 %3902
        %3904 = vrot.lane.b32.xlu0 %v3138, 14
        %v3905 = vpop.permute.xlu0 %3904
        %3906 = vrot.lane.b32.xlu0 %v3139, 14
        %v3907 = vpop.permute.xlu0 %3906
        %3908 = vrot.lane.b32.xlu0 %v3141, 14
        %v3909 = vpop.permute.xlu0 %3908
        %3910 = vrot.lane.b32.xlu0 %v3207, 14
        %v3911 = vpop.permute.xlu0 %3910
        %3912 = vrot.lane.b32.xlu0 %v3208, 14
        %v3913 = vpop.permute.xlu0 %3912
        %3914 = vrot.lane.b32.xlu0 %v3209, 14
        %v3915 = vpop.permute.xlu0 %3914
        %3916 = vrot.lane.b32.xlu0 %v3210, 14
        %v3917 = vpop.permute.xlu0 %3916
        %3918 = vrot.lane.b32.xlu0 %v3211, 14
        %v3919 = vpop.permute.xlu0 %3918
        %3920 = vrot.lane.b32.xlu0 %v3212, 14
        %v3921 = vpop.permute.xlu0 %3920
        %3922 = vrot.lane.b32.xlu0 %v3213, 14
        %v3923 = vpop.permute.xlu0 %3922
        %3924 = vrot.lane.b32.xlu0 %v3214, 14
        %v3925 = vpop.permute.xlu0 %3924
        %3926 = vrot.lane.b32.xlu0 %v3215, 14
        %v3927 = vpop.permute.xlu0 %3926
        %3928 = vrot.lane.b32.xlu0 %v3216, 14
        %v3929 = vpop.permute.xlu0 %3928
        %3930 = vrot.lane.b32.xlu0 %v3217, 14
        %v3931 = vpop.permute.xlu0 %3930
        %3932 = vrot.lane.b32.xlu0 %v3218, 14
        %v3933 = vpop.permute.xlu0 %3932
        %3934 = vrot.lane.b32.xlu0 %v3219, 14
        %v3935 = vpop.permute.xlu0 %3934
        %3936 = vrot.lane.b32.xlu0 %v3220, 14
        %v3937 = vpop.permute.xlu0 %3936
        %3938 = vrot.lane.b32.xlu0 %v3221, 14
        %v3939 = vpop.permute.xlu0 %3938
        %3940 = vrot.lane.b32.xlu0 %v3222, 14
        %v3941 = vpop.permute.xlu0 %3940
        %3942 = vrot.lane.b32.xlu0 %v3223, 14
        %v3943 = vpop.permute.xlu0 %3942
        %3944 = vrot.lane.b32.xlu0 %v3224, 14
        %v3945 = vpop.permute.xlu0 %3944
        %3946 = vrot.lane.b32.xlu0 %v3225, 14
        %v3947 = vpop.permute.xlu0 %3946
        %3948 = vrot.lane.b32.xlu0 %v3226, 14
        %v3949 = vpop.permute.xlu0 %3948
        %3950 = vrot.lane.b32.xlu0 %v3227, 14
        %v3951 = vpop.permute.xlu0 %3950
        %3952 = vrot.lane.b32.xlu0 %v3228, 14
        %v3953 = vpop.permute.xlu0 %3952
        %3954 = vrot.lane.b32.xlu0 %v3229, 14
        %v3955 = vpop.permute.xlu0 %3954
        %3956 = vrot.lane.b32.xlu0 %v3230, 14
        %v3957 = vpop.permute.xlu0 %3956
        %3958 = vrot.lane.b32.xlu0 %v3231, 14
        %v3959 = vpop.permute.xlu0 %3958
        %3960 = vrot.lane.b32.xlu0 %v3232, 14
        %v3961 = vpop.permute.xlu0 %3960
        %3962 = vrot.lane.b32.xlu0 %v3233, 14
        %v3963 = vpop.permute.xlu0 %3962
        %3964 = vrot.lane.b32.xlu0 %v3234, 14
        %v3965 = vpop.permute.xlu0 %3964
        %3966 = vrot.lane.b32.xlu0 %v3235, 14
        %v3967 = vpop.permute.xlu0 %3966
        %3968 = vrot.lane.b32.xlu0 %v3236, 14
        %v3969 = vpop.permute.xlu0 %3968
        %3970 = vrot.lane.b32.xlu0 %v3237, 14
        %v3971 = vpop.permute.xlu0 %3970
        %3972 = vrot.lane.b32.xlu0 %v3238, 14
        %v3973 = vpop.permute.xlu0 %3972
        %3974 = vrot.lane.b32.xlu0 %v3240, 14
        %v3975 = vpop.permute.xlu0 %3974
        %3976 = vrot.lane.b32.xlu0 %v3306, 14
        %v3977 = vpop.permute.xlu0 %3976
        %3978 = vrot.lane.b32.xlu0 %v3307, 14
        %v3979 = vpop.permute.xlu0 %3978
        %3980 = vrot.lane.b32.xlu0 %v3308, 14
        %v3981 = vpop.permute.xlu0 %3980
        %3982 = vrot.lane.b32.xlu0 %v3309, 14
        %v3983 = vpop.permute.xlu0 %3982
        %3984 = vrot.lane.b32.xlu0 %v3310, 14
        %v3985 = vpop.permute.xlu0 %3984
        %3986 = vrot.lane.b32.xlu0 %v3311, 14
        %v3987 = vpop.permute.xlu0 %3986
        %3988 = vrot.lane.b32.xlu0 %v3312, 14
        %v3989 = vpop.permute.xlu0 %3988
        %3990 = vrot.lane.b32.xlu0 %v3313, 14
        %v3991 = vpop.permute.xlu0 %3990
        %3992 = vrot.lane.b32.xlu0 %v3314, 14
        %v3993 = vpop.permute.xlu0 %3992
        %3994 = vrot.lane.b32.xlu0 %v3315, 14
        %v3995 = vpop.permute.xlu0 %3994
        %3996 = vrot.lane.b32.xlu0 %v3316, 14
        %v3997 = vpop.permute.xlu0 %3996
        %3998 = vrot.lane.b32.xlu0 %v3317, 14
        %v3999 = vpop.permute.xlu0 %3998
        %4000 = vrot.lane.b32.xlu0 %v3318, 14
        %v4001 = vpop.permute.xlu0 %4000
        %4002 = vrot.lane.b32.xlu0 %v3319, 14
        %v4003 = vpop.permute.xlu0 %4002
        %4004 = vrot.lane.b32.xlu0 %v3320, 14
        %v4005 = vpop.permute.xlu0 %4004
        %4006 = vrot.lane.b32.xlu0 %v3321, 14
        %v4007 = vpop.permute.xlu0 %4006
        %4008 = vrot.lane.b32.xlu0 %v3322, 14
        %v4009 = vpop.permute.xlu0 %4008
        %4010 = vrot.lane.b32.xlu0 %v3323, 14
        %v4011 = vpop.permute.xlu0 %4010
        %4012 = vrot.lane.b32.xlu0 %v3324, 14
        %v4013 = vpop.permute.xlu0 %4012
        %4014 = vrot.lane.b32.xlu0 %v3325, 14
        %v4015 = vpop.permute.xlu0 %4014
        %4016 = vrot.lane.b32.xlu0 %v3326, 14
        %v4017 = vpop.permute.xlu0 %4016
        %4018 = vrot.lane.b32.xlu0 %v3327, 14
        %v4019 = vpop.permute.xlu0 %4018
        %4020 = vrot.lane.b32.xlu0 %v3328, 14
        %v4021 = vpop.permute.xlu0 %4020
        %4022 = vrot.lane.b32.xlu0 %v3329, 14
        %v4023 = vpop.permute.xlu0 %4022
        %4024 = vrot.lane.b32.xlu0 %v3330, 14
        %v4025 = vpop.permute.xlu0 %4024
        %4026 = vrot.lane.b32.xlu0 %v3331, 14
        %v4027 = vpop.permute.xlu0 %4026
        %4028 = vrot.lane.b32.xlu0 %v3332, 14
        %v4029 = vpop.permute.xlu0 %4028
        %4030 = vrot.lane.b32.xlu0 %v3333, 14
        %v4031 = vpop.permute.xlu0 %4030
        %4032 = vrot.lane.b32.xlu0 %v3334, 14
        %v4033 = vpop.permute.xlu0 %4032
        %4034 = vrot.lane.b32.xlu0 %v3335, 14
        %v4035 = vpop.permute.xlu0 %4034
        %4036 = vrot.lane.b32.xlu0 %v3336, 14
        %v4037 = vpop.permute.xlu0 %4036
        %4038 = vrot.lane.b32.xlu0 %v3337, 14
        %v4039 = vpop.permute.xlu0 %4038
        %4040 = vrot.lane.b32.xlu0 %v3339, 14
        %v4041 = vpop.permute.xlu0 %4040
        %4042 = vrot.lane.b32.xlu0 %v3405, 14
        %v4043 = vpop.permute.xlu0 %4042
        %4044 = vrot.lane.b32.xlu0 %v3406, 14
        %v4045 = vpop.permute.xlu0 %4044
        %4046 = vrot.lane.b32.xlu0 %v3407, 14
        %v4047 = vpop.permute.xlu0 %4046
        %4048 = vrot.lane.b32.xlu0 %v3408, 14
        %v4049 = vpop.permute.xlu0 %4048
        %4050 = vrot.lane.b32.xlu0 %v3409, 14
        %v4051 = vpop.permute.xlu0 %4050
        %4052 = vrot.lane.b32.xlu0 %v3410, 14
        %v4053 = vpop.permute.xlu0 %4052
        %4054 = vrot.lane.b32.xlu0 %v3411, 14
        %v4055 = vpop.permute.xlu0 %4054
        %4056 = vrot.lane.b32.xlu0 %v3412, 14
        %v4057 = vpop.permute.xlu0 %4056
        %4058 = vrot.lane.b32.xlu0 %v3413, 14
        %v4059 = vpop.permute.xlu0 %4058
        %4060 = vrot.lane.b32.xlu0 %v3414, 14
        %v4061 = vpop.permute.xlu0 %4060
        %4062 = vrot.lane.b32.xlu0 %v3415, 14
        %v4063 = vpop.permute.xlu0 %4062
        %4064 = vrot.lane.b32.xlu0 %v3416, 14
        %v4065 = vpop.permute.xlu0 %4064
        %4066 = vrot.lane.b32.xlu0 %v3417, 14
        %v4067 = vpop.permute.xlu0 %4066
        %4068 = vrot.lane.b32.xlu0 %v3418, 14
        %v4069 = vpop.permute.xlu0 %4068
        %4070 = vrot.lane.b32.xlu0 %v3419, 14
        %v4071 = vpop.permute.xlu0 %4070
        %4072 = vrot.lane.b32.xlu0 %v3420, 14
        %v4073 = vpop.permute.xlu0 %4072
        %4074 = vrot.lane.b32.xlu0 %v3421, 14
        %v4075 = vpop.permute.xlu0 %4074
        %4076 = vrot.lane.b32.xlu0 %v3422, 14
        %v4077 = vpop.permute.xlu0 %4076
        %4078 = vrot.lane.b32.xlu0 %v3423, 14
        %v4079 = vpop.permute.xlu0 %4078
        %4080 = vrot.lane.b32.xlu0 %v3424, 14
        %v4081 = vpop.permute.xlu0 %4080
        %4082 = vrot.lane.b32.xlu0 %v3425, 14
        %v4083 = vpop.permute.xlu0 %4082
        %4084 = vrot.lane.b32.xlu0 %v3426, 14
        %v4085 = vpop.permute.xlu0 %4084
        %4086 = vrot.lane.b32.xlu0 %v3427, 14
        %v4087 = vpop.permute.xlu0 %4086
        %4088 = vrot.lane.b32.xlu0 %v3428, 14
        %v4089 = vpop.permute.xlu0 %4088
        %4090 = vrot.lane.b32.xlu0 %v3429, 14
        %v4091 = vpop.permute.xlu0 %4090
        %4092 = vrot.lane.b32.xlu0 %v3430, 14
        %v4093 = vpop.permute.xlu0 %4092
        %4094 = vrot.lane.b32.xlu0 %v3431, 14
        %v4095 = vpop.permute.xlu0 %4094
        %4096 = vrot.lane.b32.xlu0 %v3432, 14
        %v4097 = vpop.permute.xlu0 %4096
        %4098 = vrot.lane.b32.xlu0 %v3433, 14
        %v4099 = vpop.permute.xlu0 %4098
        %4100 = vrot.lane.b32.xlu0 %v3434, 14
        %v4101 = vpop.permute.xlu0 %4100
        %4102 = vrot.lane.b32.xlu0 %v3435, 14
        %v4103 = vpop.permute.xlu0 %4102
        %4104 = vrot.lane.b32.xlu0 %v3436, 14
        %v4105 = vpop.permute.xlu0 %4104
        %4106 = vrot.lane.b32.xlu0 %v3438, 14
        %v4107 = vpop.permute.xlu0 %4106
        %4108 = vrot.lane.b32.xlu0 %v3504, 14
        %v4109 = vpop.permute.xlu0 %4108
        %4110 = vrot.lane.b32.xlu0 %v3505, 14
        %v4111 = vpop.permute.xlu0 %4110
        %4112 = vrot.lane.b32.xlu0 %v3506, 14
        %v4113 = vpop.permute.xlu0 %4112
        %4114 = vrot.lane.b32.xlu0 %v3507, 14
        %v4115 = vpop.permute.xlu0 %4114
        %4116 = vrot.lane.b32.xlu0 %v3508, 14
        %v4117 = vpop.permute.xlu0 %4116
        %4118 = vrot.lane.b32.xlu0 %v3509, 14
        %v4119 = vpop.permute.xlu0 %4118
        %4120 = vrot.lane.b32.xlu0 %v3510, 14
        %v4121 = vpop.permute.xlu0 %4120
        %4122 = vrot.lane.b32.xlu0 %v3511, 14
        %v4123 = vpop.permute.xlu0 %4122
        %4124 = vrot.lane.b32.xlu0 %v3512, 14
        %v4125 = vpop.permute.xlu0 %4124
        %4126 = vrot.lane.b32.xlu0 %v3513, 14
        %v4127 = vpop.permute.xlu0 %4126
        %4128 = vrot.lane.b32.xlu0 %v3514, 14
        %v4129 = vpop.permute.xlu0 %4128
        %4130 = vrot.lane.b32.xlu0 %v3515, 14
        %v4131 = vpop.permute.xlu0 %4130
        %4132 = vrot.lane.b32.xlu0 %v3516, 14
        %v4133 = vpop.permute.xlu0 %4132
        %4134 = vrot.lane.b32.xlu0 %v3517, 14
        %v4135 = vpop.permute.xlu0 %4134
        %4136 = vrot.lane.b32.xlu0 %v3518, 14
        %v4137 = vpop.permute.xlu0 %4136
        %4138 = vrot.lane.b32.xlu0 %v3519, 14
        %v4139 = vpop.permute.xlu0 %4138
        %4140 = vrot.lane.b32.xlu0 %v3520, 14
        %v4141 = vpop.permute.xlu0 %4140
        %4142 = vrot.lane.b32.xlu0 %v3521, 14
        %v4143 = vpop.permute.xlu0 %4142
        %4144 = vrot.lane.b32.xlu0 %v3522, 14
        %v4145 = vpop.permute.xlu0 %4144
        %4146 = vrot.lane.b32.xlu0 %v3523, 14
        %v4147 = vpop.permute.xlu0 %4146
        %4148 = vrot.lane.b32.xlu0 %v3524, 14
        %v4149 = vpop.permute.xlu0 %4148
        %4150 = vrot.lane.b32.xlu0 %v3525, 14
        %v4151 = vpop.permute.xlu0 %4150
        %4152 = vrot.lane.b32.xlu0 %v3526, 14
        %v4153 = vpop.permute.xlu0 %4152
        %4154 = vrot.lane.b32.xlu0 %v3527, 14
        %v4155 = vpop.permute.xlu0 %4154
        %4156 = vrot.lane.b32.xlu0 %v3528, 14
        %v4157 = vpop.permute.xlu0 %4156
        %4158 = vrot.lane.b32.xlu0 %v3529, 14
        %v4159 = vpop.permute.xlu0 %4158
        %4160 = vrot.lane.b32.xlu0 %v3530, 14
        %v4161 = vpop.permute.xlu0 %4160
        %4162 = vrot.lane.b32.xlu0 %v3531, 14
        %v4163 = vpop.permute.xlu0 %4162
        %4164 = vrot.lane.b32.xlu0 %v3532, 14
        %v4165 = vpop.permute.xlu0 %4164
        %4166 = vrot.lane.b32.xlu0 %v3533, 14
        %v4167 = vpop.permute.xlu0 %4166
        %4168 = vrot.lane.b32.xlu0 %v3534, 14
        %v4169 = vpop.permute.xlu0 %4168
        %4170 = vrot.lane.b32.xlu0 %v3535, 14
        %v4171 = vpop.permute.xlu0 %4170
        %4172 = vrot.lane.b32.xlu0 %v2049, 14
        %v4173 = vpop.permute.xlu0 %4172
        %4174 = vrot.lane.b32.xlu0 %v2108, 14
        %v4175 = vpop.permute.xlu0 %4174
        %4176 = vrot.lane.b32.xlu0 %v2109, 14
        %v4177 = vpop.permute.xlu0 %4176
        %4178 = vrot.lane.b32.xlu0 %v2110, 14
        %v4179 = vpop.permute.xlu0 %4178
        %4180 = vrot.lane.b32.xlu0 %v2111, 14
        %v4181 = vpop.permute.xlu0 %4180
        %4182 = vrot.lane.b32.xlu0 %v2112, 14
        %v4183 = vpop.permute.xlu0 %4182
        %4184 = vrot.lane.b32.xlu0 %v2113, 14
        %v4185 = vpop.permute.xlu0 %4184
        %4186 = vrot.lane.b32.xlu0 %v2114, 14
        %v4187 = vpop.permute.xlu0 %4186
        %4188 = vrot.lane.b32.xlu0 %v2115, 14
        %v4189 = vpop.permute.xlu0 %4188
        %4190 = vrot.lane.b32.xlu0 %v2116, 14
        %v4191 = vpop.permute.xlu0 %4190
        %4192 = vrot.lane.b32.xlu0 %v2117, 14
        %v4193 = vpop.permute.xlu0 %4192
        %4194 = vrot.lane.b32.xlu0 %v2118, 14
        %v4195 = vpop.permute.xlu0 %4194
        %4196 = vrot.lane.b32.xlu0 %v2119, 14
        %v4197 = vpop.permute.xlu0 %4196
        %4198 = vrot.lane.b32.xlu0 %v2120, 14
        %v4199 = vpop.permute.xlu0 %4198
        %4200 = vrot.lane.b32.xlu0 %v2121, 14
        %v4201 = vpop.permute.xlu0 %4200
        %4202 = vrot.lane.b32.xlu0 %v2122, 14
        %v4203 = vpop.permute.xlu0 %4202
        %4204 = vrot.lane.b32.xlu0 %v2123, 14
        %v4205 = vpop.permute.xlu0 %4204
        %4206 = vrot.lane.b32.xlu0 %v2124, 14
        %v4207 = vpop.permute.xlu0 %4206
        %4208 = vrot.lane.b32.xlu0 %v2125, 14
        %v4209 = vpop.permute.xlu0 %4208
        %4210 = vrot.lane.b32.xlu0 %v2126, 14
        %v4211 = vpop.permute.xlu0 %4210
        %4212 = vrot.lane.b32.xlu0 %v2127, 14
        %v4213 = vpop.permute.xlu0 %4212
        %4214 = vrot.lane.b32.xlu0 %v2128, 14
        %v4215 = vpop.permute.xlu0 %4214
        %4216 = vrot.lane.b32.xlu0 %v2129, 14
        %v4217 = vpop.permute.xlu0 %4216
        %4218 = vrot.lane.b32.xlu0 %v2130, 14
        %v4219 = vpop.permute.xlu0 %4218
        %4220 = vrot.lane.b32.xlu0 %v2131, 14
        %v4221 = vpop.permute.xlu0 %4220
        %4222 = vrot.lane.b32.xlu0 %v2132, 14
        %v4223 = vpop.permute.xlu0 %4222
        %4224 = vrot.lane.b32.xlu0 %v3550, 14
        %v4225 = vpop.permute.xlu0 %4224
        %4226 = vrot.lane.b32.xlu0 %v3551, 14
        %v4227 = vpop.permute.xlu0 %4226
        %4228 = vrot.lane.b32.xlu0 %v3552, 14
        %v4229 = vpop.permute.xlu0 %4228
        %4230 = vrot.lane.b32.xlu0 %v3553, 14
        %v4231 = vpop.permute.xlu0 %4230
        %4232 = vrot.lane.b32.xlu0 %v3554, 14
        %v4233 = vpop.permute.xlu0 %4232
        %4234 = vrot.lane.b32.xlu0 %v3555, 14
        %v4235 = vpop.permute.xlu0 %4234
        %4236 = vrot.lane.b32.xlu0 %v3556, 14
        %v4237 = vpop.permute.xlu0 %4236
        %4238 = vrot.lane.b32.xlu0 %v2180, 14
        %v4239 = vpop.permute.xlu0 %4238
        %4240 = vrot.lane.b32.xlu0 %v2239, 14
        %v4241 = vpop.permute.xlu0 %4240
        %4242 = vrot.lane.b32.xlu0 %v2240, 14
        %v4243 = vpop.permute.xlu0 %4242
        %4244 = vrot.lane.b32.xlu0 %v2241, 14
        %v4245 = vpop.permute.xlu0 %4244
        %4246 = vrot.lane.b32.xlu0 %v2242, 14
        %v4247 = vpop.permute.xlu0 %4246
        %4248 = vrot.lane.b32.xlu0 %v2243, 14
        %v4249 = vpop.permute.xlu0 %4248
        %4250 = vrot.lane.b32.xlu0 %v2244, 14
        %v4251 = vpop.permute.xlu0 %4250
        %4252 = vrot.lane.b32.xlu0 %v2245, 14
        %v4253 = vpop.permute.xlu0 %4252
        %4254 = vrot.lane.b32.xlu0 %v2246, 14
        %v4255 = vpop.permute.xlu0 %4254
        %4256 = vrot.lane.b32.xlu0 %v2247, 14
        %v4257 = vpop.permute.xlu0 %4256
        %4258 = vrot.lane.b32.xlu0 %v2248, 14
        %v4259 = vpop.permute.xlu0 %4258
        %4260 = vrot.lane.b32.xlu0 %v2249, 14
        %v4261 = vpop.permute.xlu0 %4260
        %4262 = vrot.lane.b32.xlu0 %v2250, 14
        %v4263 = vpop.permute.xlu0 %4262
        %4264 = vrot.lane.b32.xlu0 %v2251, 14
        %v4265 = vpop.permute.xlu0 %4264
        %4266 = vrot.lane.b32.xlu0 %v2252, 14
        %v4267 = vpop.permute.xlu0 %4266
        %4268 = vrot.lane.b32.xlu0 %v2253, 14
        %v4269 = vpop.permute.xlu0 %4268
        %4270 = vrot.lane.b32.xlu0 %v2254, 14
        %v4271 = vpop.permute.xlu0 %4270
        %4272 = vrot.lane.b32.xlu0 %v2255, 14
        %v4273 = vpop.permute.xlu0 %4272
        %4274 = vrot.lane.b32.xlu0 %v2256, 14
        %v4275 = vpop.permute.xlu0 %4274
        %4276 = vrot.lane.b32.xlu0 %v2257, 14
        %v4277 = vpop.permute.xlu0 %4276
        %4278 = vrot.lane.b32.xlu0 %v2258, 14
        %v4279 = vpop.permute.xlu0 %4278
        %4280 = vrot.lane.b32.xlu0 %v2259, 14
        %v4281 = vpop.permute.xlu0 %4280
        %4282 = vrot.lane.b32.xlu0 %v2260, 14
        %v4283 = vpop.permute.xlu0 %4282
        %4284 = vrot.lane.b32.xlu0 %v2261, 14
        %v4285 = vpop.permute.xlu0 %4284
        %4286 = vrot.lane.b32.xlu0 %v2262, 14
        %v4287 = vpop.permute.xlu0 %4286
        %4288 = vrot.lane.b32.xlu0 %v2263, 14
        %v4289 = vpop.permute.xlu0 %4288
        %4290 = vrot.lane.b32.xlu0 %v3571, 14
        %v4291 = vpop.permute.xlu0 %4290
        %4292 = vrot.lane.b32.xlu0 %v3572, 14
        %v4293 = vpop.permute.xlu0 %4292
        %4294 = vrot.lane.b32.xlu0 %v3573, 14
        %v4295 = vpop.permute.xlu0 %4294
        %4296 = vrot.lane.b32.xlu0 %v3574, 14
        %v4297 = vpop.permute.xlu0 %4296
        %4298 = vrot.lane.b32.xlu0 %v3575, 14
        %v4299 = vpop.permute.xlu0 %4298
        %4300 = vrot.lane.b32.xlu0 %v3576, 14
        %v4301 = vpop.permute.xlu0 %4300
        %4302 = vrot.lane.b32.xlu0 %v3577, 14
        %v4303 = vpop.permute.xlu0 %4302
        %vm4304 = vcmask 113664
        %v4305 = vsel %vm4304, %v3579, %v3581
        %v4306 = vsel %vm4304, %v3581, %v3583
        %v4307 = vsel %vm4304, %v3583, %v3585
        %v4308 = vsel %vm4304, %v3585, %v3587
        %v4309 = vsel %vm4304, %v3587, %v3589
        %v4310 = vsel %vm4304, %v3589, %v3591
        %v4311 = vsel %vm4304, %v3591, %v3593
        %v4312 = vsel %vm4304, %v3593, %v3595
        %v4313 = vsel %vm4304, %v3595, %v3597
        %v4314 = vsel %vm4304, %v3597, %v3599
        %v4315 = vsel %vm4304, %v3599, %v3601
        %v4316 = vsel %vm4304, %v3601, %v3603
        %v4317 = vsel %vm4304, %v3603, %v3605
        %v4318 = vsel %vm4304, %v3605, %v3607
        %v4319 = vsel %vm4304, %v3607, %v3609
        %v4320 = vsel %vm4304, %v3609, %v3611
        %v4321 = vsel %vm4304, %v3611, %v3613
        %v4322 = vsel %vm4304, %v3613, %v3615
        %v4323 = vsel %vm4304, %v3615, %v3617
        %v4324 = vsel %vm4304, %v3617, %v3619
        %v4325 = vsel %vm4304, %v3619, %v3621
        %v4326 = vsel %vm4304, %v3621, %v3623
        %v4327 = vsel %vm4304, %v3623, %v3625
        %v4328 = vsel %vm4304, %v3625, %v3627
        %v4329 = vsel %vm4304, %v3627, %v3629
        %v4330 = vsel %vm4304, %v3629, %v3631
        %v4331 = vsel %vm4304, %v3631, %v3633
        %v4332 = vsel %vm4304, %v3633, %v3635
        %v4333 = vsel %vm4304, %v3635, %v3637
        %v4334 = vsel %vm4304, %v3637, %v3639
        %v4335 = vsel %vm4304, %v3639, %v3641
        %v4336 = vsel %vm4304, %v3641, %v3643
        %v4337 = vsel %vm4304, %v3645, %v3647
        %v4338 = vsel %vm4304, %v3647, %v3649
        %v4339 = vsel %vm4304, %v3649, %v3651
        %v4340 = vsel %vm4304, %v3651, %v3653
        %v4341 = vsel %vm4304, %v3653, %v3655
        %v4342 = vsel %vm4304, %v3655, %v3657
        %v4343 = vsel %vm4304, %v3657, %v3659
        %v4344 = vsel %vm4304, %v3659, %v3661
        %v4345 = vsel %vm4304, %v3661, %v3663
        %v4346 = vsel %vm4304, %v3663, %v3665
        %v4347 = vsel %vm4304, %v3665, %v3667
        %v4348 = vsel %vm4304, %v3667, %v3669
        %v4349 = vsel %vm4304, %v3669, %v3671
        %v4350 = vsel %vm4304, %v3671, %v3673
        %v4351 = vsel %vm4304, %v3673, %v3675
        %v4352 = vsel %vm4304, %v3675, %v3677
        %v4353 = vsel %vm4304, %v3677, %v3679
        %v4354 = vsel %vm4304, %v3679, %v3681
        %v4355 = vsel %vm4304, %v3681, %v3683
        %v4356 = vsel %vm4304, %v3683, %v3685
        %v4357 = vsel %vm4304, %v3685, %v3687
        %v4358 = vsel %vm4304, %v3687, %v3689
        %v4359 = vsel %vm4304, %v3689, %v3691
        %v4360 = vsel %vm4304, %v3691, %v3693
        %v4361 = vsel %vm4304, %v3693, %v3695
        %v4362 = vsel %vm4304, %v3695, %v3697
        %v4363 = vsel %vm4304, %v3697, %v3699
        %v4364 = vsel %vm4304, %v3699, %v3701
        %v4365 = vsel %vm4304, %v3701, %v3703
        %v4366 = vsel %vm4304, %v3703, %v3705
        %v4367 = vsel %vm4304, %v3705, %v3707
        %v4368 = vsel %vm4304, %v3707, %v3709
        %v4369 = vsel %vm4304, %v3711, %v3713
        %v4370 = vsel %vm4304, %v3713, %v3715
        %v4371 = vsel %vm4304, %v3715, %v3717
        %v4372 = vsel %vm4304, %v3717, %v3719
        %v4373 = vsel %vm4304, %v3719, %v3721
        %v4374 = vsel %vm4304, %v3721, %v3723
        %v4375 = vsel %vm4304, %v3723, %v3725
        %v4376 = vsel %vm4304, %v3725, %v3727
        %v4377 = vsel %vm4304, %v3727, %v3729
        %v4378 = vsel %vm4304, %v3729, %v3731
        %v4379 = vsel %vm4304, %v3731, %v3733
        %v4380 = vsel %vm4304, %v3733, %v3735
        %v4381 = vsel %vm4304, %v3735, %v3737
        %v4382 = vsel %vm4304, %v3737, %v3739
        %v4383 = vsel %vm4304, %v3739, %v3741
        %v4384 = vsel %vm4304, %v3741, %v3743
        %v4385 = vsel %vm4304, %v3743, %v3745
        %v4386 = vsel %vm4304, %v3745, %v3747
        %v4387 = vsel %vm4304, %v3747, %v3749
        %v4388 = vsel %vm4304, %v3749, %v3751
        %v4389 = vsel %vm4304, %v3751, %v3753
        %v4390 = vsel %vm4304, %v3753, %v3755
        %v4391 = vsel %vm4304, %v3755, %v3757
        %v4392 = vsel %vm4304, %v3757, %v3759
        %v4393 = vsel %vm4304, %v3759, %v3761
        %v4394 = vsel %vm4304, %v3761, %v3763
        %v4395 = vsel %vm4304, %v3763, %v3765
        %v4396 = vsel %vm4304, %v3765, %v3767
        %v4397 = vsel %vm4304, %v3767, %v3769
        %v4398 = vsel %vm4304, %v3769, %v3771
        %v4399 = vsel %vm4304, %v3771, %v3773
        %v4400 = vsel %vm4304, %v3773, %v3775
        %v4401 = vsel %vm4304, %v3777, %v3779
        %v4402 = vsel %vm4304, %v3779, %v3781
        %v4403 = vsel %vm4304, %v3781, %v3783
        %v4404 = vsel %vm4304, %v3783, %v3785
        %v4405 = vsel %vm4304, %v3785, %v3787
        %v4406 = vsel %vm4304, %v3787, %v3789
        %v4407 = vsel %vm4304, %v3789, %v3791
        %v4408 = vsel %vm4304, %v3791, %v3793
        %v4409 = vsel %vm4304, %v3793, %v3795
        %v4410 = vsel %vm4304, %v3795, %v3797
        %v4411 = vsel %vm4304, %v3797, %v3799
        %v4412 = vsel %vm4304, %v3799, %v3801
        %v4413 = vsel %vm4304, %v3801, %v3803
        %v4414 = vsel %vm4304, %v3803, %v3805
        %v4415 = vsel %vm4304, %v3805, %v3807
        %v4416 = vsel %vm4304, %v3807, %v3809
        %v4417 = vsel %vm4304, %v3809, %v3811
        %v4418 = vsel %vm4304, %v3811, %v3813
        %v4419 = vsel %vm4304, %v3813, %v3815
        %v4420 = vsel %vm4304, %v3815, %v3817
        %v4421 = vsel %vm4304, %v3817, %v3819
        %v4422 = vsel %vm4304, %v3819, %v3821
        %v4423 = vsel %vm4304, %v3821, %v3823
        %v4424 = vsel %vm4304, %v3823, %v3825
        %v4425 = vsel %vm4304, %v3825, %v3827
        %v4426 = vsel %vm4304, %v3827, %v3829
        %v4427 = vsel %vm4304, %v3829, %v3831
        %v4428 = vsel %vm4304, %v3831, %v3833
        %v4429 = vsel %vm4304, %v3833, %v3835
        %v4430 = vsel %vm4304, %v3835, %v3837
        %v4431 = vsel %vm4304, %v3837, %v3839
        %v4432 = vsel %vm4304, %v3839, %v3841
        %v4433 = vsel %vm4304, %v3843, %v3845
        %v4434 = vsel %vm4304, %v3845, %v3847
        %v4435 = vsel %vm4304, %v3847, %v3849
        %v4436 = vsel %vm4304, %v3849, %v3851
        %v4437 = vsel %vm4304, %v3851, %v3853
        %v4438 = vsel %vm4304, %v3853, %v3855
        %v4439 = vsel %vm4304, %v3855, %v3857
        %v4440 = vsel %vm4304, %v3857, %v3859
        %v4441 = vsel %vm4304, %v3859, %v3861
        %v4442 = vsel %vm4304, %v3861, %v3863
        %v4443 = vsel %vm4304, %v3863, %v3865
        %v4444 = vsel %vm4304, %v3865, %v3867
        %v4445 = vsel %vm4304, %v3867, %v3869
        %v4446 = vsel %vm4304, %v3869, %v3871
        %v4447 = vsel %vm4304, %v3871, %v3873
        %v4448 = vsel %vm4304, %v3873, %v3875
        %v4449 = vsel %vm4304, %v3875, %v3877
        %v4450 = vsel %vm4304, %v3877, %v3879
        %v4451 = vsel %vm4304, %v3879, %v3881
        %v4452 = vsel %vm4304, %v3881, %v3883
        %v4453 = vsel %vm4304, %v3883, %v3885
        %v4454 = vsel %vm4304, %v3885, %v3887
        %v4455 = vsel %vm4304, %v3887, %v3889
        %v4456 = vsel %vm4304, %v3889, %v3891
        %v4457 = vsel %vm4304, %v3891, %v3893
        %v4458 = vsel %vm4304, %v3893, %v3895
        %v4459 = vsel %vm4304, %v3895, %v3897
        %v4460 = vsel %vm4304, %v3897, %v3899
        %v4461 = vsel %vm4304, %v3899, %v3901
        %v4462 = vsel %vm4304, %v3901, %v3903
        %v4463 = vsel %vm4304, %v3903, %v3905
        %v4464 = vsel %vm4304, %v3905, %v3907
        %v4465 = vsel %vm4304, %v3909, %v3911
        %v4466 = vsel %vm4304, %v3911, %v3913
        %v4467 = vsel %vm4304, %v3913, %v3915
        %v4468 = vsel %vm4304, %v3915, %v3917
        %v4469 = vsel %vm4304, %v3917, %v3919
        %v4470 = vsel %vm4304, %v3919, %v3921
        %v4471 = vsel %vm4304, %v3921, %v3923
        %v4472 = vsel %vm4304, %v3923, %v3925
        %v4473 = vsel %vm4304, %v3925, %v3927
        %v4474 = vsel %vm4304, %v3927, %v3929
        %v4475 = vsel %vm4304, %v3929, %v3931
        %v4476 = vsel %vm4304, %v3931, %v3933
        %v4477 = vsel %vm4304, %v3933, %v3935
        %v4478 = vsel %vm4304, %v3935, %v3937
        %v4479 = vsel %vm4304, %v3937, %v3939
        %v4480 = vsel %vm4304, %v3939, %v3941
        %v4481 = vsel %vm4304, %v3941, %v3943
        %v4482 = vsel %vm4304, %v3943, %v3945
        %v4483 = vsel %vm4304, %v3945, %v3947
        %v4484 = vsel %vm4304, %v3947, %v3949
        %v4485 = vsel %vm4304, %v3949, %v3951
        %v4486 = vsel %vm4304, %v3951, %v3953
        %v4487 = vsel %vm4304, %v3953, %v3955
        %v4488 = vsel %vm4304, %v3955, %v3957
        %v4489 = vsel %vm4304, %v3957, %v3959
        %v4490 = vsel %vm4304, %v3959, %v3961
        %v4491 = vsel %vm4304, %v3961, %v3963
        %v4492 = vsel %vm4304, %v3963, %v3965
        %v4493 = vsel %vm4304, %v3965, %v3967
        %v4494 = vsel %vm4304, %v3967, %v3969
        %v4495 = vsel %vm4304, %v3969, %v3971
        %v4496 = vsel %vm4304, %v3971, %v3973
        %v4497 = vsel %vm4304, %v3975, %v3977
        %v4498 = vsel %vm4304, %v3977, %v3979
        %v4499 = vsel %vm4304, %v3979, %v3981
        %v4500 = vsel %vm4304, %v3981, %v3983
        %v4501 = vsel %vm4304, %v3983, %v3985
        %v4502 = vsel %vm4304, %v3985, %v3987
        %v4503 = vsel %vm4304, %v3987, %v3989
        %v4504 = vsel %vm4304, %v3989, %v3991
        %v4505 = vsel %vm4304, %v3991, %v3993
        %v4506 = vsel %vm4304, %v3993, %v3995
        %v4507 = vsel %vm4304, %v3995, %v3997
        %v4508 = vsel %vm4304, %v3997, %v3999
        %v4509 = vsel %vm4304, %v3999, %v4001
        %v4510 = vsel %vm4304, %v4001, %v4003
        %v4511 = vsel %vm4304, %v4003, %v4005
        %v4512 = vsel %vm4304, %v4005, %v4007
        %v4513 = vsel %vm4304, %v4007, %v4009
        %v4514 = vsel %vm4304, %v4009, %v4011
        %v4515 = vsel %vm4304, %v4011, %v4013
        %v4516 = vsel %vm4304, %v4013, %v4015
        %v4517 = vsel %vm4304, %v4015, %v4017
        %v4518 = vsel %vm4304, %v4017, %v4019
        %v4519 = vsel %vm4304, %v4019, %v4021
        %v4520 = vsel %vm4304, %v4021, %v4023
        %v4521 = vsel %vm4304, %v4023, %v4025
        %v4522 = vsel %vm4304, %v4025, %v4027
        %v4523 = vsel %vm4304, %v4027, %v4029
        %v4524 = vsel %vm4304, %v4029, %v4031
        %v4525 = vsel %vm4304, %v4031, %v4033
        %v4526 = vsel %vm4304, %v4033, %v4035
        %v4527 = vsel %vm4304, %v4035, %v4037
        %v4528 = vsel %vm4304, %v4037, %v4039
        %v4529 = vsel %vm4304, %v4041, %v4043
        %v4530 = vsel %vm4304, %v4043, %v4045
        %v4531 = vsel %vm4304, %v4045, %v4047
        %v4532 = vsel %vm4304, %v4047, %v4049
        %v4533 = vsel %vm4304, %v4049, %v4051
        %v4534 = vsel %vm4304, %v4051, %v4053
        %v4535 = vsel %vm4304, %v4053, %v4055
        %v4536 = vsel %vm4304, %v4055, %v4057
        %v4537 = vsel %vm4304, %v4057, %v4059
        %v4538 = vsel %vm4304, %v4059, %v4061
        %v4539 = vsel %vm4304, %v4061, %v4063
        %v4540 = vsel %vm4304, %v4063, %v4065
        %v4541 = vsel %vm4304, %v4065, %v4067
        %v4542 = vsel %vm4304, %v4067, %v4069
        %v4543 = vsel %vm4304, %v4069, %v4071
        %v4544 = vsel %vm4304, %v4071, %v4073
        %v4545 = vsel %vm4304, %v4073, %v4075
        %v4546 = vsel %vm4304, %v4075, %v4077
        %v4547 = vsel %vm4304, %v4077, %v4079
        %v4548 = vsel %vm4304, %v4079, %v4081
        %v4549 = vsel %vm4304, %v4081, %v4083
        %v4550 = vsel %vm4304, %v4083, %v4085
        %v4551 = vsel %vm4304, %v4085, %v4087
        %v4552 = vsel %vm4304, %v4087, %v4089
        %v4553 = vsel %vm4304, %v4089, %v4091
        %v4554 = vsel %vm4304, %v4091, %v4093
        %v4555 = vsel %vm4304, %v4093, %v4095
        %v4556 = vsel %vm4304, %v4095, %v4097
        %v4557 = vsel %vm4304, %v4097, %v4099
        %v4558 = vsel %vm4304, %v4099, %v4101
        %v4559 = vsel %vm4304, %v4101, %v4103
        %v4560 = vsel %vm4304, %v4103, %v4105
        %v4561 = vsel %vm4304, %v4107, %v4109
        %v4562 = vsel %vm4304, %v4109, %v4111
        %v4563 = vsel %vm4304, %v4111, %v4113
        %v4564 = vsel %vm4304, %v4113, %v4115
        %v4565 = vsel %vm4304, %v4115, %v4117
        %v4566 = vsel %vm4304, %v4117, %v4119
        %v4567 = vsel %vm4304, %v4119, %v4121
        %v4568 = vsel %vm4304, %v4121, %v4123
        %v4569 = vsel %vm4304, %v4123, %v4125
        %v4570 = vsel %vm4304, %v4125, %v4127
        %v4571 = vsel %vm4304, %v4127, %v4129
        %v4572 = vsel %vm4304, %v4129, %v4131
        %v4573 = vsel %vm4304, %v4131, %v4133
        %v4574 = vsel %vm4304, %v4133, %v4135
        %v4575 = vsel %vm4304, %v4135, %v4137
        %v4576 = vsel %vm4304, %v4137, %v4139
        %v4577 = vsel %vm4304, %v4139, %v4141
        %v4578 = vsel %vm4304, %v4141, %v4143
        %v4579 = vsel %vm4304, %v4143, %v4145
        %v4580 = vsel %vm4304, %v4145, %v4147
        %v4581 = vsel %vm4304, %v4147, %v4149
        %v4582 = vsel %vm4304, %v4149, %v4151
        %v4583 = vsel %vm4304, %v4151, %v4153
        %v4584 = vsel %vm4304, %v4153, %v4155
        %v4585 = vsel %vm4304, %v4155, %v4157
        %v4586 = vsel %vm4304, %v4157, %v4159
        %v4587 = vsel %vm4304, %v4159, %v4161
        %v4588 = vsel %vm4304, %v4161, %v4163
        %v4589 = vsel %vm4304, %v4163, %v4165
        %v4590 = vsel %vm4304, %v4165, %v4167
        %v4591 = vsel %vm4304, %v4167, %v4169
        %v4592 = vsel %vm4304, %v4169, %v4171
        %v4593 = vsel %vm4304, %v4173, %v4175
        %v4594 = vsel %vm4304, %v4175, %v4177
        %v4595 = vsel %vm4304, %v4177, %v4179
        %v4596 = vsel %vm4304, %v4179, %v4181
        %v4597 = vsel %vm4304, %v4181, %v4183
        %v4598 = vsel %vm4304, %v4183, %v4185
        %v4599 = vsel %vm4304, %v4185, %v4187
        %v4600 = vsel %vm4304, %v4187, %v4189
        %v4601 = vsel %vm4304, %v4189, %v4191
        %v4602 = vsel %vm4304, %v4191, %v4193
        %v4603 = vsel %vm4304, %v4193, %v4195
        %v4604 = vsel %vm4304, %v4195, %v4197
        %v4605 = vsel %vm4304, %v4197, %v4199
        %v4606 = vsel %vm4304, %v4199, %v4201
        %v4607 = vsel %vm4304, %v4201, %v4203
        %v4608 = vsel %vm4304, %v4203, %v4205
        %v4609 = vsel %vm4304, %v4205, %v4207
        %v4610 = vsel %vm4304, %v4207, %v4209
        %v4611 = vsel %vm4304, %v4209, %v4211
        %v4612 = vsel %vm4304, %v4211, %v4213
        %v4613 = vsel %vm4304, %v4213, %v4215
        %v4614 = vsel %vm4304, %v4215, %v4217
        %v4615 = vsel %vm4304, %v4217, %v4219
        %v4616 = vsel %vm4304, %v4219, %v4221
        %v4617 = vsel %vm4304, %v4221, %v4223
        %v4618 = vsel %vm4304, %v4223, %v4225
        %v4619 = vsel %vm4304, %v4225, %v4227
        %v4620 = vsel %vm4304, %v4227, %v4229
        %v4621 = vsel %vm4304, %v4229, %v4231
        %v4622 = vsel %vm4304, %v4231, %v4233
        %v4623 = vsel %vm4304, %v4233, %v4235
        %v4624 = vsel %vm4304, %v4235, %v4237
        %v4625 = vsel %vm4304, %v4239, %v4241
        %v4626 = vsel %vm4304, %v4241, %v4243
        %v4627 = vsel %vm4304, %v4243, %v4245
        %v4628 = vsel %vm4304, %v4245, %v4247
        %v4629 = vsel %vm4304, %v4247, %v4249
        %v4630 = vsel %vm4304, %v4249, %v4251
        %v4631 = vsel %vm4304, %v4251, %v4253
        %v4632 = vsel %vm4304, %v4253, %v4255
        %v4633 = vsel %vm4304, %v4255, %v4257
        %v4634 = vsel %vm4304, %v4257, %v4259
        %v4635 = vsel %vm4304, %v4259, %v4261
        %v4636 = vsel %vm4304, %v4261, %v4263
        %v4637 = vsel %vm4304, %v4263, %v4265
        %v4638 = vsel %vm4304, %v4265, %v4267
        %v4639 = vsel %vm4304, %v4267, %v4269
        %v4640 = vsel %vm4304, %v4269, %v4271
        %v4641 = vsel %vm4304, %v4271, %v4273
        %v4642 = vsel %vm4304, %v4273, %v4275
        %v4643 = vsel %vm4304, %v4275, %v4277
        %v4644 = vsel %vm4304, %v4277, %v4279
        %v4645 = vsel %vm4304, %v4279, %v4281
        %v4646 = vsel %vm4304, %v4281, %v4283
        %v4647 = vsel %vm4304, %v4283, %v4285
        %v4648 = vsel %vm4304, %v4285, %v4287
        %v4649 = vsel %vm4304, %v4287, %v4289
        %v4650 = vsel %vm4304, %v4289, %v4291
        %v4651 = vsel %vm4304, %v4291, %v4293
        %v4652 = vsel %vm4304, %v4293, %v4295
        %v4653 = vsel %vm4304, %v4295, %v4297
        %v4654 = vsel %vm4304, %v4297, %v4299
        %v4655 = vsel %vm4304, %v4299, %v4301
        %v4656 = vsel %vm4304, %v4301, %v4303
        %v5009 = vld [vmem:[%s712] sm:$0xff]
        %v5010 = vld [vmem:[%s712 + $0x8] sm:$0xff]
        %v5013 = vunpack.c.l.b16 %v5009
        %v5014 = vunpack.c.h.b16 %v5009
        %v5015 = vunpack.c.l.b16 %v5010
        %v5016 = vunpack.c.h.b16 %v5010
        %v5017 = vpack.c.b16 %v5013, %v5013
        %v5018 = vpack.c.b16 %v5014, %v5014
        %v5019 = vpack.c.b16 %v5015, %v5015
        %v5020 = vpack.c.b16 %v5016, %v5016
        %vm5024 = vcmask 392192
        %v5026 = vsel %vm5024, %v5020, 0
        %5028 = vmatprep.subr.bf16.mxu0 %v867
        %5029 = vmatpush1.bf16.msra.mxu0 %v866
        %5030 = vmatprep.subr.bf16.mxu0 %v1054
        %5031 = vmatpush1.bf16.msra.mxu0 %v1053
        %5032 = vmatprep.subr.bf16.mxu0 %v1185
        %5033 = vmatpush1.bf16.msra.mxu0 %v1184
        %5034 = vmatprep.subr.bf16.mxu0 %v1316
        %5035 = vmatpush1.bf16.msra.mxu0 %v1315
        %5036 = vmatprep.subr.bf16.mxu0 %v1447
        %5037 = vmatpush1.bf16.msra.mxu0 %v1446
        %5038 = vmatprep.subr.bf16.mxu0 %v1578
        %5039 = vmatpush1.bf16.msra.mxu0 %v1577
        %5040 = vmatprep.subr.bf16.mxu0 %v1709
        %5041 = vmatpush1.bf16.msra.mxu0 %v1708
        %5042 = vmatprep.subr.bf16.mxu0 %v1840
        %5043 = vmatpush1.bf16.msra.mxu0 %v1839
        %5044 = vmatprep.subr.bf16.mxu0 %v1971
        %5045 = vmatpush1.bf16.msra.mxu0 %v1970
        %5046 = vmatprep.subr.bf16.mxu0 %v2102
        %5047 = vmatpush1.bf16.msra.mxu0 %v2101
        %5048 = vmatprep.subr.bf16.mxu0 %v2233
        %5049 = vmatpush1.bf16.msra.mxu0 %v2232
        %5050 = vmatprep.subr.bf16.mxu0 %v2364
        %5051 = vmatpush1.bf16.msra.mxu0 %v2363
        %5052 = vmatprep.subr.bf16.mxu0 %v2495
        %5053 = vmatpush1.bf16.msra.mxu0 %v2494
        %5054 = vmatprep.subr.bf16.mxu0 %v2626
        %5055 = vmatpush1.bf16.msra.mxu0 %v2625
        %5056 = vmatprep.subr.bf16.mxu0 %v2757
        %5057 = vmatpush1.bf16.msra.mxu0 %v2756
        %5058 = vmatprep.subr.bf16.mxu0 %v2888
        %5059 = vmatpush1.bf16.msra.mxu0 %v2887
        %5060 = vmatprep.mubr.bf16.mxu0 %v5018
        %5061 = vmatmul.mubr.bf16.gmra.mrb[0].mxu0 %v5017
        %v5062 = vpop.f32.mrb[0].mxu0
        %v5063 = vadd.f32 0.0, %v5062
        %v5064 = vpop.f32.mrb[0].mxu0
        %v5065 = vadd.f32 0.0, %v5064
        %v5066 = vpop.f32.mrb[0].mxu0
        %v5067 = vpop.f32.mrb[0].mxu0
        %5068 = vdwg.mxu0
        %5069 = vmatprep.subr.bf16.mxu0 %v4306
        %5070 = vmatpush1.bf16.msra.mxu0 %v4305
        %5071 = vmatprep.subr.bf16.mxu0 %v4338
        %5072 = vmatpush1.bf16.msra.mxu0 %v4337
        %5073 = vmatprep.subr.bf16.mxu0 %v4370
        %5074 = vmatpush1.bf16.msra.mxu0 %v4369
        %5075 = vmatprep.subr.bf16.mxu0 %v4402
        %5076 = vmatpush1.bf16.msra.mxu0 %v4401
        %5077 = vmatprep.subr.bf16.mxu0 %v4434
        %5078 = vmatpush1.bf16.msra.mxu0 %v4433
        %5079 = vmatprep.subr.bf16.mxu0 %v4466
        %5080 = vmatpush1.bf16.msra.mxu0 %v4465
        %5081 = vmatprep.subr.bf16.mxu0 %v4498
        %5082 = vmatpush1.bf16.msra.mxu0 %v4497
        %5083 = vmatprep.subr.bf16.mxu0 %v4530
        %5084 = vmatpush1.bf16.msra.mxu0 %v4529
        %5085 = vmatprep.subr.bf16.mxu0 %v4562
        %5086 = vmatpush1.bf16.msra.mxu0 %v4561
        %5087 = vmatprep.subr.bf16.mxu0 %v4594
        %5088 = vmatpush1.bf16.msra.mxu0 %v4593
        %5089 = vmatprep.subr.bf16.mxu0 %v4626
        %5090 = vmatpush1.bf16.msra.mxu0 %v4625
        %5091 = vmatprep.subr.bf16.mxu0 0
        %5092 = vmatpush1.bf16.msra.mxu0 0
        %5093 = vmatprep.subr.bf16.mxu0 0
        %5094 = vmatpush1.bf16.msra.mxu0 0
        %5095 = vmatprep.subr.bf16.mxu0 0
        %5096 = vmatpush1.bf16.msra.mxu0 0
        %5097 = vmatprep.subr.bf16.mxu0 0
        %5098 = vmatpush1.bf16.msra.mxu0 0
        %5099 = vmatprep.subr.bf16.mxu0 0
        %5100 = vmatpush1.bf16.msra.mxu0 0
        %5101 = vmatprep.mubr.bf16.mxu0 %v5026
        %5102 = vmatmul.mubr.bf16.gmra.mrb[0].mxu0 %v5019
        %v5103 = vpop.f32.mrb[0].mxu0
        %v5104 = vadd.f32 %v5063, %v5103
        %v5105 = vpop.f32.mrb[0].mxu0
        %v5106 = vadd.f32 %v5065, %v5105
        %v5107 = vpop.f32.mrb[0].mxu0
        %v5108 = vpop.f32.mrb[0].mxu0
        %5109 = vdwg.mxu0
        %5110 = vmatprep.subr.bf16.mxu0 %v869
        %5111 = vmatpush1.bf16.msra.mxu0 %v868
        %5112 = vmatprep.subr.bf16.mxu0 %v1056
        %5113 = vmatpush1.bf16.msra.mxu0 %v1055
        %5114 = vmatprep.subr.bf16.mxu0 %v1187
        %5115 = vmatpush1.bf16.msra.mxu0 %v1186
        %5116 = vmatprep.subr.bf16.mxu0 %v1318
        %5117 = vmatpush1.bf16.msra.mxu0 %v1317
        %5118 = vmatprep.subr.bf16.mxu0 %v1449
        %5119 = vmatpush1.bf16.msra.mxu0 %v1448
        %5120 = vmatprep.subr.bf16.mxu0 %v1580
        %5121 = vmatpush1.bf16.msra.mxu0 %v1579
        %5122 = vmatprep.subr.bf16.mxu0 %v1711
        %5123 = vmatpush1.bf16.msra.mxu0 %v1710
        %5124 = vmatprep.subr.bf16.mxu0 %v1842
        %5125 = vmatpush1.bf16.msra.mxu0 %v1841
        %5126 = vmatprep.subr.bf16.mxu0 %v1973
        %5127 = vmatpush1.bf16.msra.mxu0 %v1972
        %5128 = vmatprep.subr.bf16.mxu0 %v2104
        %5129 = vmatpush1.bf16.msra.mxu0 %v2103
        %5130 = vmatprep.subr.bf16.mxu0 %v2235
        %5131 = vmatpush1.bf16.msra.mxu0 %v2234
        %5132 = vmatprep.subr.bf16.mxu0 %v2366
        %5133 = vmatpush1.bf16.msra.mxu0 %v2365
        %5134 = vmatprep.subr.bf16.mxu0 %v2497
        %5135 = vmatpush1.bf16.msra.mxu0 %v2496
        %5136 = vmatprep.subr.bf16.mxu0 %v2628
        %5137 = vmatpush1.bf16.msra.mxu0 %v2627
        %5138 = vmatprep.subr.bf16.mxu0 %v2759
        %5139 = vmatpush1.bf16.msra.mxu0 %v2758
        %5140 = vmatprep.subr.bf16.mxu0 %v2890
        %5141 = vmatpush1.bf16.msra.mxu0 %v2889
        %5142 = vmatprep.mubr.bf16.mxu0 %v5018
        %5143 = vmatmul.mubr.bf16.gmra.mrb[0].mxu0 %v5017
        %v5144 = vpop.f32.mrb[0].mxu0
        %v5145 = vadd.f32 0.0, %v5144
        %v5146 = vpop.f32.mrb[0].mxu0
        %v5147 = vadd.f32 0.0, %v5146
        %v5148 = vpop.f32.mrb[0].mxu0
        %v5149 = vpop.f32.mrb[0].mxu0
        %5150 = vdwg.mxu0
        %5151 = vmatprep.subr.bf16.mxu0 %v4308
        %5152 = vmatpush1.bf16.msra.mxu0 %v4307
        %5153 = vmatprep.subr.bf16.mxu0 %v4340
        %5154 = vmatpush1.bf16.msra.mxu0 %v4339
        %5155 = vmatprep.subr.bf16.mxu0 %v4372
        %5156 = vmatpush1.bf16.msra.mxu0 %v4371
        %5157 = vmatprep.subr.bf16.mxu0 %v4404
        %5158 = vmatpush1.bf16.msra.mxu0 %v4403
        %5159 = vmatprep.subr.bf16.mxu0 %v4436
        %5160 = vmatpush1.bf16.msra.mxu0 %v4435
        %5161 = vmatprep.subr.bf16.mxu0 %v4468
        %5162 = vmatpush1.bf16.msra.mxu0 %v4467
        %5163 = vmatprep.subr.bf16.mxu0 %v4500
        %5164 = vmatpush1.bf16.msra.mxu0 %v4499
        %5165 = vmatprep.subr.bf16.mxu0 %v4532
        %5166 = vmatpush1.bf16.msra.mxu0 %v4531
        %5167 = vmatprep.subr.bf16.mxu0 %v4564
        %5168 = vmatpush1.bf16.msra.mxu0 %v4563
        %5169 = vmatprep.subr.bf16.mxu0 %v4596
        %5170 = vmatpush1.bf16.msra.mxu0 %v4595
        %5171 = vmatprep.subr.bf16.mxu0 %v4628
        %5172 = vmatpush1.bf16.msra.mxu0 %v4627
        %5173 = vmatprep.subr.bf16.mxu0 0
        %5174 = vmatpush1.bf16.msra.mxu0 0
        %5175 = vmatprep.subr.bf16.mxu0 0
        %5176 = vmatpush1.bf16.msra.mxu0 0
        %5177 = vmatprep.subr.bf16.mxu0 0
        %5178 = vmatpush1.bf16.msra.mxu0 0
        %5179 = vmatprep.subr.bf16.mxu0 0
        %5180 = vmatpush1.bf16.msra.mxu0 0
        %5181 = vmatprep.subr.bf16.mxu0 0
        %5182 = vmatpush1.bf16.msra.mxu0 0
        %5183 = vmatprep.mubr.bf16.mxu0 %v5026
        %5184 = vmatmul.mubr.bf16.gmra.mrb[0].mxu0 %v5019
        %v5185 = vpop.f32.mrb[0].mxu0
        %v5186 = vadd.f32 %v5145, %v5185
        %v5187 = vpop.f32.mrb[0].mxu0
        %v5188 = vadd.f32 %v5147, %v5187
        %v5189 = vpop.f32.mrb[0].mxu0
        %v5190 = vpop.f32.mrb[0].mxu0
        %5191 = vdwg.mxu0
        %5192 = vmatprep.subr.bf16.mxu0 %v871
        %5193 = vmatpush1.bf16.msra.mxu0 %v870
        %5194 = vmatprep.subr.bf16.mxu0 %v1058
        %5195 = vmatpush1.bf16.msra.mxu0 %v1057
        %5196 = vmatprep.subr.bf16.mxu0 %v1189
        %5197 = vmatpush1.bf16.msra.mxu0 %v1188
        %5198 = vmatprep.subr.bf16.mxu0 %v1320
        %5199 = vmatpush1.bf16.msra.mxu0 %v1319
        %5200 = vmatprep.subr.bf16.mxu0 %v1451
        %5201 = vmatpush1.bf16.msra.mxu0 %v1450
        %5202 = vmatprep.subr.bf16.mxu0 %v1582
        %5203 = vmatpush1.bf16.msra.mxu0 %v1581
        %5204 = vmatprep.subr.bf16.mxu0 %v1713
        %5205 = vmatpush1.bf16.msra.mxu0 %v1712
        %5206 = vmatprep.subr.bf16.mxu0 %v1844
        %5207 = vmatpush1.bf16.msra.mxu0 %v1843
        %5208 = vmatprep.subr.bf16.mxu0 %v1975
        %5209 = vmatpush1.bf16.msra.mxu0 %v1974
        %5210 = vmatprep.subr.bf16.mxu0 %v2106
        %5211 = vmatpush1.bf16.msra.mxu0 %v2105
        %5212 = vmatprep.subr.bf16.mxu0 %v2237
        %5213 = vmatpush1.bf16.msra.mxu0 %v2236
        %5214 = vmatprep.subr.bf16.mxu0 %v2368
        %5215 = vmatpush1.bf16.msra.mxu0 %v2367
        %5216 = vmatprep.subr.bf16.mxu0 %v2499
        %5217 = vmatpush1.bf16.msra.mxu0 %v2498
        %5218 = vmatprep.subr.bf16.mxu0 %v2630
        %5219 = vmatpush1.bf16.msra.mxu0 %v2629
        %5220 = vmatprep.subr.bf16.mxu0 %v2761
        %5221 = vmatpush1.bf16.msra.mxu0 %v2760
        %5222 = vmatprep.subr.bf16.mxu0 %v2892
        %5223 = vmatpush1.bf16.msra.mxu0 %v2891
        %5224 = vmatprep.mubr.bf16.mxu0 %v5018
        %5225 = vmatmul.mubr.bf16.gmra.mrb[0].mxu0 %v5017
        %v5226 = vpop.f32.mrb[0].mxu0
        %v5227 = vadd.f32 0.0, %v5226
        %v5228 = vpop.f32.mrb[0].mxu0
        %v5229 = vadd.f32 0.0, %v5228
        %v5230 = vpop.f32.mrb[0].mxu0
        %v5231 = vpop.f32.mrb[0].mxu0
        %5232 = vdwg.mxu0
        %5233 = vmatprep.subr.bf16.mxu0 %v4310
        %5234 = vmatpush1.bf16.msra.mxu0 %v4309
        %5235 = vmatprep.subr.bf16.mxu0 %v4342
        %5236 = vmatpush1.bf16.msra.mxu0 %v4341
        %5237 = vmatprep.subr.bf16.mxu0 %v4374
        %5238 = vmatpush1.bf16.msra.mxu0 %v4373
        %5239 = vmatprep.subr.bf16.mxu0 %v4406
        %5240 = vmatpush1.bf16.msra.mxu0 %v4405
        %5241 = vmatprep.subr.bf16.mxu0 %v4438
        %5242 = vmatpush1.bf16.msra.mxu0 %v4437
        %5243 = vmatprep.subr.bf16.mxu0 %v4470
        %5244 = vmatpush1.bf16.msra.mxu0 %v4469
        %5245 = vmatprep.subr.bf16.mxu0 %v4502
        %5246 = vmatpush1.bf16.msra.mxu0 %v4501
        %5247 = vmatprep.subr.bf16.mxu0 %v4534
        %5248 = vmatpush1.bf16.msra.mxu0 %v4533
        %5249 = vmatprep.subr.bf16.mxu0 %v4566
        %5250 = vmatpush1.bf16.msra.mxu0 %v4565
        %5251 = vmatprep.subr.bf16.mxu0 %v4598
        %5252 = vmatpush1.bf16.msra.mxu0 %v4597
        %5253 = vmatprep.subr.bf16.mxu0 %v4630
        %5254 = vmatpush1.bf16.msra.mxu0 %v4629
        %5255 = vmatprep.subr.bf16.mxu0 0
        %5256 = vmatpush1.bf16.msra.mxu0 0
        %5257 = vmatprep.subr.bf16.mxu0 0
        %5258 = vmatpush1.bf16.msra.mxu0 0
        %5259 = vmatprep.subr.bf16.mxu0 0
        %5260 = vmatpush1.bf16.msra.mxu0 0
        %5261 = vmatprep.subr.bf16.mxu0 0
        %5262 = vmatpush1.bf16.msra.mxu0 0
        %5263 = vmatprep.subr.bf16.mxu0 0
        %5264 = vmatpush1.bf16.msra.mxu0 0
        %5265 = vmatprep.mubr.bf16.mxu0 %v5026
        %5266 = vmatmul.mubr.bf16.gmra.mrb[0].mxu0 %v5019
        %v5267 = vpop.f32.mrb[0].mxu0
        %v5268 = vadd.f32 %v5227, %v5267
        %v5269 = vpop.f32.mrb[0].mxu0
        %v5270 = vadd.f32 %v5229, %v5269
        %v5271 = vpop.f32.mrb[0].mxu0
        %v5272 = vpop.f32.mrb[0].mxu0
        %5273 = vdwg.mxu0
        %5274 = vmatprep.subr.bf16.mxu0 %v873
        %5275 = vmatpush1.bf16.msra.mxu0 %v872
        %5276 = vmatprep.subr.bf16.mxu0 %v1060
        %5277 = vmatpush1.bf16.msra.mxu0 %v1059
        %5278 = vmatprep.subr.bf16.mxu0 %v1191
        %5279 = vmatpush1.bf16.msra.mxu0 %v1190
        %5280 = vmatprep.subr.bf16.mxu0 %v1322
        %5281 = vmatpush1.bf16.msra.mxu0 %v1321
        %5282 = vmatprep.subr.bf16.mxu0 %v1453
        %5283 = vmatpush1.bf16.msra.mxu0 %v1452
        %5284 = vmatprep.subr.bf16.mxu0 %v1584
        %5285 = vmatpush1.bf16.msra.mxu0 %v1583
        %5286 = vmatprep.subr.bf16.mxu0 %v1715
        %5287 = vmatpush1.bf16.msra.mxu0 %v1714
        %5288 = vmatprep.subr.bf16.mxu0 %v1846
        %5289 = vmatpush1.bf16.msra.mxu0 %v1845
        %5290 = vmatprep.subr.bf16.mxu0 %v1977
        %5291 = vmatpush1.bf16.msra.mxu0 %v1976
        %5292 = vmatprep.subr.bf16.mxu0 %v2108
        %5293 = vmatpush1.bf16.msra.mxu0 %v2107
        %5294 = vmatprep.subr.bf16.mxu0 %v2239
        %5295 = vmatpush1.bf16.msra.mxu0 %v2238
        %5296 = vmatprep.subr.bf16.mxu0 %v2370
        %5297 = vmatpush1.bf16.msra.mxu0 %v2369
        %5298 = vmatprep.subr.bf16.mxu0 %v2501
        %5299 = vmatpush1.bf16.msra.mxu0 %v2500
        %5300 = vmatprep.subr.bf16.mxu0 %v2632
        %5301 = vmatpush1.bf16.msra.mxu0 %v2631
        %5302 = vmatprep.subr.bf16.mxu0 %v2763
        %5303 = vmatpush1.bf16.msra.mxu0 %v2762
        %5304 = vmatprep.subr.bf16.mxu0 %v2894
        %5305 = vmatpush1.bf16.msra.mxu0 %v2893
        %5306 = vmatprep.mubr.bf16.mxu0 %v5018
        %5307 = vmatmul.mubr.bf16.gmra.mrb[0].mxu0 %v5017
        %v5308 = vpop.f32.mrb[0].mxu0
        %v5309 = vadd.f32 0.0, %v5308
        %v5310 = vpop.f32.mrb[0].mxu0
        %v5311 = vadd.f32 0.0, %v5310
        %v5312 = vpop.f32.mrb[0].mxu0
        %v5313 = vpop.f32.mrb[0].mxu0
        %5314 = vdwg.mxu0
        %5315 = vmatprep.subr.bf16.mxu0 %v4312
        %5316 = vmatpush1.bf16.msra.mxu0 %v4311
        %5317 = vmatprep.subr.bf16.mxu0 %v4344
        %5318 = vmatpush1.bf16.msra.mxu0 %v4343
        %5319 = vmatprep.subr.bf16.mxu0 %v4376
        %5320 = vmatpush1.bf16.msra.mxu0 %v4375
        %5321 = vmatprep.subr.bf16.mxu0 %v4408
        %5322 = vmatpush1.bf16.msra.mxu0 %v4407
        %5323 = vmatprep.subr.bf16.mxu0 %v4440
        %5324 = vmatpush1.bf16.msra.mxu0 %v4439
        %5325 = vmatprep.subr.bf16.mxu0 %v4472
        %5326 = vmatpush1.bf16.msra.mxu0 %v4471
        %5327 = vmatprep.subr.bf16.mxu0 %v4504
        %5328 = vmatpush1.bf16.msra.mxu0 %v4503
        %5329 = vmatprep.subr.bf16.mxu0 %v4536
        %5330 = vmatpush1.bf16.msra.mxu0 %v4535
        %5331 = vmatprep.subr.bf16.mxu0 %v4568
        %5332 = vmatpush1.bf16.msra.mxu0 %v4567
        %5333 = vmatprep.subr.bf16.mxu0 %v4600
        %5334 = vmatpush1.bf16.msra.mxu0 %v4599
        %5335 = vmatprep.subr.bf16.mxu0 %v4632
        %5336 = vmatpush1.bf16.msra.mxu0 %v4631
        %5337 = vmatprep.subr.bf16.mxu0 0
        %5338 = vmatpush1.bf16.msra.mxu0 0
        %5339 = vmatprep.subr.bf16.mxu0 0
        %5340 = vmatpush1.bf16.msra.mxu0 0
        %5341 = vmatprep.subr.bf16.mxu0 0
        %5342 = vmatpush1.bf16.msra.mxu0 0
        %5343 = vmatprep.subr.bf16.mxu0 0
        %5344 = vmatpush1.bf16.msra.mxu0 0
        %5345 = vmatprep.subr.bf16.mxu0 0
        %5346 = vmatpush1.bf16.msra.mxu0 0
        %5347 = vmatprep.mubr.bf16.mxu0 %v5026
        %5348 = vmatmul.mubr.bf16.gmra.mrb[0].mxu0 %v5019
        %v5349 = vpop.f32.mrb[0].mxu0
        %v5350 = vadd.f32 %v5309, %v5349
        %v5351 = vpop.f32.mrb[0].mxu0
        %v5352 = vadd.f32 %v5311, %v5351
        %v5353 = vpop.f32.mrb[0].mxu0
        %v5354 = vpop.f32.mrb[0].mxu0
        %5355 = vdwg.mxu0
        %5356 = vmatprep.subr.bf16.mxu0 %v875
        %5357 = vmatpush1.bf16.msra.mxu0 %v874
        %5358 = vmatprep.subr.bf16.mxu0 %v1062
        %5359 = vmatpush1.bf16.msra.mxu0 %v1061
        %5360 = vmatprep.subr.bf16.mxu0 %v1193
        %5361 = vmatpush1.bf16.msra.mxu0 %v1192
        %5362 = vmatprep.subr.bf16.mxu0 %v1324
        %5363 = vmatpush1.bf16.msra.mxu0 %v1323
        %5364 = vmatprep.subr.bf16.mxu0 %v1455
        %5365 = vmatpush1.bf16.msra.mxu0 %v1454
        %5366 = vmatprep.subr.bf16.mxu0 %v1586
        %5367 = vmatpush1.bf16.msra.mxu0 %v1585
        %5368 = vmatprep.subr.bf16.mxu0 %v1717
        %5369 = vmatpush1.bf16.msra.mxu0 %v1716
        %5370 = vmatprep.subr.bf16.mxu0 %v1848
        %5371 = vmatpush1.bf16.msra.mxu0 %v1847
        %5372 = vmatprep.subr.bf16.mxu0 %v1979
        %5373 = vmatpush1.bf16.msra.mxu0 %v1978
        %5374 = vmatprep.subr.bf16.mxu0 %v2110
        %5375 = vmatpush1.bf16.msra.mxu0 %v2109
        %5376 = vmatprep.subr.bf16.mxu0 %v2241
        %5377 = vmatpush1.bf16.msra.mxu0 %v2240
        %5378 = vmatprep.subr.bf16.mxu0 %v2372
        %5379 = vmatpush1.bf16.msra.mxu0 %v2371
        %5380 = vmatprep.subr.bf16.mxu0 %v2503
        %5381 = vmatpush1.bf16.msra.mxu0 %v2502
        %5382 = vmatprep.subr.bf16.mxu0 %v2634
        %5383 = vmatpush1.bf16.msra.mxu0 %v2633
        %5384 = vmatprep.subr.bf16.mxu0 %v2765
        %5385 = vmatpush1.bf16.msra.mxu0 %v2764
        %5386 = vmatprep.subr.bf16.mxu0 %v2896
        %5387 = vmatpush1.bf16.msra.mxu0 %v2895
        %5388 = vmatprep.mubr.bf16.mxu0 %v5018
        %5389 = vmatmul.mubr.bf16.gmra.mrb[0].mxu0 %v5017
        %v5390 = vpop.f32.mrb[0].mxu0
        %v5391 = vadd.f32 0.0, %v5390
        %v5392 = vpop.f32.mrb[0].mxu0
        %v5393 = vadd.f32 0.0, %v5392
        %v5394 = vpop.f32.mrb[0].mxu0
        %v5395 = vpop.f32.mrb[0].mxu0
        %5396 = vdwg.mxu0
        %5397 = vmatprep.subr.bf16.mxu0 %v4314
        %5398 = vmatpush1.bf16.msra.mxu0 %v4313
        %5399 = vmatprep.subr.bf16.mxu0 %v4346
        %5400 = vmatpush1.bf16.msra.mxu0 %v4345
        %5401 = vmatprep.subr.bf16.mxu0 %v4378
        %5402 = vmatpush1.bf16.msra.mxu0 %v4377
        %5403 = vmatprep.subr.bf16.mxu0 %v4410
        %5404 = vmatpush1.bf16.msra.mxu0 %v4409
        %5405 = vmatprep.subr.bf16.mxu0 %v4442
        %5406 = vmatpush1.bf16.msra.mxu0 %v4441
        %5407 = vmatprep.subr.bf16.mxu0 %v4474
        %5408 = vmatpush1.bf16.msra.mxu0 %v4473
        %5409 = vmatprep.subr.bf16.mxu0 %v4506
        %5410 = vmatpush1.bf16.msra.mxu0 %v4505
        %5411 = vmatprep.subr.bf16.mxu0 %v4538
        %5412 = vmatpush1.bf16.msra.mxu0 %v4537
        %5413 = vmatprep.subr.bf16.mxu0 %v4570
        %5414 = vmatpush1.bf16.msra.mxu0 %v4569
        %5415 = vmatprep.subr.bf16.mxu0 %v4602
        %5416 = vmatpush1.bf16.msra.mxu0 %v4601
        %5417 = vmatprep.subr.bf16.mxu0 %v4634
        %5418 = vmatpush1.bf16.msra.mxu0 %v4633
        %5419 = vmatprep.subr.bf16.mxu0 0
        %5420 = vmatpush1.bf16.msra.mxu0 0
        %5421 = vmatprep.subr.bf16.mxu0 0
        %5422 = vmatpush1.bf16.msra.mxu0 0
        %5423 = vmatprep.subr.bf16.mxu0 0
        %5424 = vmatpush1.bf16.msra.mxu0 0
        %5425 = vmatprep.subr.bf16.mxu0 0
        %5426 = vmatpush1.bf16.msra.mxu0 0
        %5427 = vmatprep.subr.bf16.mxu0 0
        %5428 = vmatpush1.bf16.msra.mxu0 0
        %5429 = vmatprep.mubr.bf16.mxu0 %v5026
        %5430 = vmatmul.mubr.bf16.gmra.mrb[0].mxu0 %v5019
        %v5431 = vpop.f32.mrb[0].mxu0
        %v5432 = vadd.f32 %v5391, %v5431
        %v5433 = vpop.f32.mrb[0].mxu0
        %v5434 = vadd.f32 %v5393, %v5433
        %v5435 = vpop.f32.mrb[0].mxu0
        %v5436 = vpop.f32.mrb[0].mxu0
        %5437 = vdwg.mxu0
        %5438 = vmatprep.subr.bf16.mxu0 %v877
        %5439 = vmatpush1.bf16.msra.mxu0 %v876
        %5440 = vmatprep.subr.bf16.mxu0 %v1064
        %5441 = vmatpush1.bf16.msra.mxu0 %v1063
        %5442 = vmatprep.subr.bf16.mxu0 %v1195
        %5443 = vmatpush1.bf16.msra.mxu0 %v1194
        %5444 = vmatprep.subr.bf16.mxu0 %v1326
        %5445 = vmatpush1.bf16.msra.mxu0 %v1325
        %5446 = vmatprep.subr.bf16.mxu0 %v1457
        %5447 = vmatpush1.bf16.msra.mxu0 %v1456
        %5448 = vmatprep.subr.bf16.mxu0 %v1588
        %5449 = vmatpush1.bf16.msra.mxu0 %v1587
        %5450 = vmatprep.subr.bf16.mxu0 %v1719
        %5451 = vmatpush1.bf16.msra.mxu0 %v1718
        %5452 = vmatprep.subr.bf16.mxu0 %v1850
        %5453 = vmatpush1.bf16.msra.mxu0 %v1849
        %5454 = vmatprep.subr.bf16.mxu0 %v1981
        %5455 = vmatpush1.bf16.msra.mxu0 %v1980
        %5456 = vmatprep.subr.bf16.mxu0 %v2112
        %5457 = vmatpush1.bf16.msra.mxu0 %v2111
        %5458 = vmatprep.subr.bf16.mxu0 %v2243
        %5459 = vmatpush1.bf16.msra.mxu0 %v2242
        %5460 = vmatprep.subr.bf16.mxu0 %v2374
        %5461 = vmatpush1.bf16.msra.mxu0 %v2373
        %5462 = vmatprep.subr.bf16.mxu0 %v2505
        %5463 = vmatpush1.bf16.msra.mxu0 %v2504
        %5464 = vmatprep.subr.bf16.mxu0 %v2636
        %5465 = vmatpush1.bf16.msra.mxu0 %v2635
        %5466 = vmatprep.subr.bf16.mxu0 %v2767
        %5467 = vmatpush1.bf16.msra.mxu0 %v2766
        %5468 = vmatprep.subr.bf16.mxu0 %v2898
        %5469 = vmatpush1.bf16.msra.mxu0 %v2897
        %5470 = vmatprep.mubr.bf16.mxu0 %v5018
        %5471 = vmatmul.mubr.bf16.gmra.mrb[0].mxu0 %v5017
        %v5472 = vpop.f32.mrb[0].mxu0
        %v5473 = vadd.f32 0.0, %v5472
        %v5474 = vpop.f32.mrb[0].mxu0
        %v5475 = vadd.f32 0.0, %v5474
        %v5476 = vpop.f32.mrb[0].mxu0
        %v5477 = vpop.f32.mrb[0].mxu0
        %5478 = vdwg.mxu0
        %5479 = vmatprep.subr.bf16.mxu0 %v4316
        %5480 = vmatpush1.bf16.msra.mxu0 %v4315
        %5481 = vmatprep.subr.bf16.mxu0 %v4348
        %5482 = vmatpush1.bf16.msra.mxu0 %v4347
        %5483 = vmatprep.subr.bf16.mxu0 %v4380
        %5484 = vmatpush1.bf16.msra.mxu0 %v4379
        %5485 = vmatprep.subr.bf16.mxu0 %v4412
        %5486 = vmatpush1.bf16.msra.mxu0 %v4411
        %5487 = vmatprep.subr.bf16.mxu0 %v4444
        %5488 = vmatpush1.bf16.msra.mxu0 %v4443
        %5489 = vmatprep.subr.bf16.mxu0 %v4476
        %5490 = vmatpush1.bf16.msra.mxu0 %v4475
        %5491 = vmatprep.subr.bf16.mxu0 %v4508
        %5492 = vmatpush1.bf16.msra.mxu0 %v4507
        %5493 = vmatprep.subr.bf16.mxu0 %v4540
        %5494 = vmatpush1.bf16.msra.mxu0 %v4539
        %5495 = vmatprep.subr.bf16.mxu0 %v4572
        %5496 = vmatpush1.bf16.msra.mxu0 %v4571
        %5497 = vmatprep.subr.bf16.mxu0 %v4604
        %5498 = vmatpush1.bf16.msra.mxu0 %v4603
        %5499 = vmatprep.subr.bf16.mxu0 %v4636
        %5500 = vmatpush1.bf16.msra.mxu0 %v4635
        %5501 = vmatprep.subr.bf16.mxu0 0
        %5502 = vmatpush1.bf16.msra.mxu0 0
        %5503 = vmatprep.subr.bf16.mxu0 0
        %5504 = vmatpush1.bf16.msra.mxu0 0
        %5505 = vmatprep.subr.bf16.mxu0 0
        %5506 = vmatpush1.bf16.msra.mxu0 0
        %5507 = vmatprep.subr.bf16.mxu0 0
        %5508 = vmatpush1.bf16.msra.mxu0 0
        %5509 = vmatprep.subr.bf16.mxu0 0
        %5510 = vmatpush1.bf16.msra.mxu0 0
        %5511 = vmatprep.mubr.bf16.mxu0 %v5026
        %5512 = vmatmul.mubr.bf16.gmra.mrb[0].mxu0 %v5019
        %v5513 = vpop.f32.mrb[0].mxu0
        %v5514 = vadd.f32 %v5473, %v5513
        %v5515 = vpop.f32.mrb[0].mxu0
        %v5516 = vadd.f32 %v5475, %v5515
        %v5517 = vpop.f32.mrb[0].mxu0
        %v5518 = vpop.f32.mrb[0].mxu0
        %5519 = vdwg.mxu0
        %5520 = vmatprep.subr.bf16.mxu0 %v879
        %5521 = vmatpush1.bf16.msra.mxu0 %v878
        %5522 = vmatprep.subr.bf16.mxu0 %v1066
        %5523 = vmatpush1.bf16.msra.mxu0 %v1065
        %5524 = vmatprep.subr.bf16.mxu0 %v1197
        %5525 = vmatpush1.bf16.msra.mxu0 %v1196
        %5526 = vmatprep.subr.bf16.mxu0 %v1328
        %5527 = vmatpush1.bf16.msra.mxu0 %v1327
        %5528 = vmatprep.subr.bf16.mxu0 %v1459
        %5529 = vmatpush1.bf16.msra.mxu0 %v1458
        %5530 = vmatprep.subr.bf16.mxu0 %v1590
        %5531 = vmatpush1.bf16.msra.mxu0 %v1589
        %5532 = vmatprep.subr.bf16.mxu0 %v1721
        %5533 = vmatpush1.bf16.msra.mxu0 %v1720
        %5534 = vmatprep.subr.bf16.mxu0 %v1852
        %5535 = vmatpush1.bf16.msra.mxu0 %v1851
        %5536 = vmatprep.subr.bf16.mxu0 %v1983
        %5537 = vmatpush1.bf16.msra.mxu0 %v1982
        %5538 = vmatprep.subr.bf16.mxu0 %v2114
        %5539 = vmatpush1.bf16.msra.mxu0 %v2113
        %5540 = vmatprep.subr.bf16.mxu0 %v2245
        %5541 = vmatpush1.bf16.msra.mxu0 %v2244
        %5542 = vmatprep.subr.bf16.mxu0 %v2376
        %5543 = vmatpush1.bf16.msra.mxu0 %v2375
        %5544 = vmatprep.subr.bf16.mxu0 %v2507
        %5545 = vmatpush1.bf16.msra.mxu0 %v2506
        %5546 = vmatprep.subr.bf16.mxu0 %v2638
        %5547 = vmatpush1.bf16.msra.mxu0 %v2637
        %5548 = vmatprep.subr.bf16.mxu0 %v2769
        %5549 = vmatpush1.bf16.msra.mxu0 %v2768
        %5550 = vmatprep.subr.bf16.mxu0 %v2900
        %5551 = vmatpush1.bf16.msra.mxu0 %v2899
        %5552 = vmatprep.mubr.bf16.mxu0 %v5018
        %5553 = vmatmul.mubr.bf16.gmra.mrb[0].mxu0 %v5017
        %v5554 = vpop.f32.mrb[0].mxu0
        %v5555 = vadd.f32 0.0, %v5554
        %v5556 = vpop.f32.mrb[0].mxu0
        %v5557 = vadd.f32 0.0, %v5556
        %v5558 = vpop.f32.mrb[0].mxu0
        %v5559 = vpop.f32.mrb[0].mxu0
        %5560 = vdwg.mxu0
        %5561 = vmatprep.subr.bf16.mxu0 %v4318
        %5562 = vmatpush1.bf16.msra.mxu0 %v4317
        %5563 = vmatprep.subr.bf16.mxu0 %v4350
        %5564 = vmatpush1.bf16.msra.mxu0 %v4349
        %5565 = vmatprep.subr.bf16.mxu0 %v4382
        %5566 = vmatpush1.bf16.msra.mxu0 %v4381
        %5567 = vmatprep.subr.bf16.mxu0 %v4414
        %5568 = vmatpush1.bf16.msra.mxu0 %v4413
        %5569 = vmatprep.subr.bf16.mxu0 %v4446
        %5570 = vmatpush1.bf16.msra.mxu0 %v4445
        %5571 = vmatprep.subr.bf16.mxu0 %v4478
        %5572 = vmatpush1.bf16.msra.mxu0 %v4477
        %5573 = vmatprep.subr.bf16.mxu0 %v4510
        %5574 = vmatpush1.bf16.msra.mxu0 %v4509
        %5575 = vmatprep.subr.bf16.mxu0 %v4542
        %5576 = vmatpush1.bf16.msra.mxu0 %v4541
        %5577 = vmatprep.subr.bf16.mxu0 %v4574
        %5578 = vmatpush1.bf16.msra.mxu0 %v4573
        %5579 = vmatprep.subr.bf16.mxu0 %v4606
        %5580 = vmatpush1.bf16.msra.mxu0 %v4605
        %5581 = vmatprep.subr.bf16.mxu0 %v4638
        %5582 = vmatpush1.bf16.msra.mxu0 %v4637
        %5583 = vmatprep.subr.bf16.mxu0 0
        %5584 = vmatpush1.bf16.msra.mxu0 0
        %5585 = vmatprep.subr.bf16.mxu0 0
        %5586 = vmatpush1.bf16.msra.mxu0 0
        %5587 = vmatprep.subr.bf16.mxu0 0
        %5588 = vmatpush1.bf16.msra.mxu0 0
        %5589 = vmatprep.subr.bf16.mxu0 0
        %5590 = vmatpush1.bf16.msra.mxu0 0
        %5591 = vmatprep.subr.bf16.mxu0 0
        %5592 = vmatpush1.bf16.msra.mxu0 0
        %5593 = vmatprep.mubr.bf16.mxu0 %v5026
        %5594 = vmatmul.mubr.bf16.gmra.mrb[0].mxu0 %v5019
        %v5595 = vpop.f32.mrb[0].mxu0
        %v5596 = vadd.f32 %v5555, %v5595
        %v5597 = vpop.f32.mrb[0].mxu0
        %v5598 = vadd.f32 %v5557, %v5597
        %v5599 = vpop.f32.mrb[0].mxu0
        %v5600 = vpop.f32.mrb[0].mxu0
        %5601 = vdwg.mxu0
        %5602 = vmatprep.subr.bf16.mxu0 %v881
        %5603 = vmatpush1.bf16.msra.mxu0 %v880
        %5604 = vmatprep.subr.bf16.mxu0 %v1068
        %5605 = vmatpush1.bf16.msra.mxu0 %v1067
        %5606 = vmatprep.subr.bf16.mxu0 %v1199
        %5607 = vmatpush1.bf16.msra.mxu0 %v1198
        %5608 = vmatprep.subr.bf16.mxu0 %v1330
        %5609 = vmatpush1.bf16.msra.mxu0 %v1329
        %5610 = vmatprep.subr.bf16.mxu0 %v1461
        %5611 = vmatpush1.bf16.msra.mxu0 %v1460
        %5612 = vmatprep.subr.bf16.mxu0 %v1592
        %5613 = vmatpush1.bf16.msra.mxu0 %v1591
        %5614 = vmatprep.subr.bf16.mxu0 %v1723
        %5615 = vmatpush1.bf16.msra.mxu0 %v1722
        %5616 = vmatprep.subr.bf16.mxu0 %v1854
        %5617 = vmatpush1.bf16.msra.mxu0 %v1853
        %5618 = vmatprep.subr.bf16.mxu0 %v1985
        %5619 = vmatpush1.bf16.msra.mxu0 %v1984
        %5620 = vmatprep.subr.bf16.mxu0 %v2116
        %5621 = vmatpush1.bf16.msra.mxu0 %v2115
        %5622 = vmatprep.subr.bf16.mxu0 %v2247
        %5623 = vmatpush1.bf16.msra.mxu0 %v2246
        %5624 = vmatprep.subr.bf16.mxu0 %v2378
        %5625 = vmatpush1.bf16.msra.mxu0 %v2377
        %5626 = vmatprep.subr.bf16.mxu0 %v2509
        %5627 = vmatpush1.bf16.msra.mxu0 %v2508
        %5628 = vmatprep.subr.bf16.mxu0 %v2640
        %5629 = vmatpush1.bf16.msra.mxu0 %v2639
        %5630 = vmatprep.subr.bf16.mxu0 %v2771
        %5631 = vmatpush1.bf16.msra.mxu0 %v2770
        %5632 = vmatprep.subr.bf16.mxu0 %v2902
        %5633 = vmatpush1.bf16.msra.mxu0 %v2901
        %5634 = vmatprep.mubr.bf16.mxu0 %v5018
        %5635 = vmatmul.mubr.bf16.gmra.mrb[0].mxu0 %v5017
        %v5636 = vpop.f32.mrb[0].mxu0
        %v5637 = vadd.f32 0.0, %v5636
        %v5638 = vpop.f32.mrb[0].mxu0
        %v5639 = vadd.f32 0.0, %v5638
        %v5640 = vpop.f32.mrb[0].mxu0
        %v5641 = vpop.f32.mrb[0].mxu0
        %5642 = vdwg.mxu0
        %5643 = vmatprep.subr.bf16.mxu0 %v4320
        %5644 = vmatpush1.bf16.msra.mxu0 %v4319
        %5645 = vmatprep.subr.bf16.mxu0 %v4352
        %5646 = vmatpush1.bf16.msra.mxu0 %v4351
        %5647 = vmatprep.subr.bf16.mxu0 %v4384
        %5648 = vmatpush1.bf16.msra.mxu0 %v4383
        %5649 = vmatprep.subr.bf16.mxu0 %v4416
        %5650 = vmatpush1.bf16.msra.mxu0 %v4415
        %5651 = vmatprep.subr.bf16.mxu0 %v4448
        %5652 = vmatpush1.bf16.msra.mxu0 %v4447
        %5653 = vmatprep.subr.bf16.mxu0 %v4480
        %5654 = vmatpush1.bf16.msra.mxu0 %v4479
        %5655 = vmatprep.subr.bf16.mxu0 %v4512
        %5656 = vmatpush1.bf16.msra.mxu0 %v4511
        %5657 = vmatprep.subr.bf16.mxu0 %v4544
        %5658 = vmatpush1.bf16.msra.mxu0 %v4543
        %5659 = vmatprep.subr.bf16.mxu0 %v4576
        %5660 = vmatpush1.bf16.msra.mxu0 %v4575
        %5661 = vmatprep.subr.bf16.mxu0 %v4608
        %5662 = vmatpush1.bf16.msra.mxu0 %v4607
        %5663 = vmatprep.subr.bf16.mxu0 %v4640
        %5664 = vmatpush1.bf16.msra.mxu0 %v4639
        %5665 = vmatprep.subr.bf16.mxu0 0
        %5666 = vmatpush1.bf16.msra.mxu0 0
        %5667 = vmatprep.subr.bf16.mxu0 0
        %5668 = vmatpush1.bf16.msra.mxu0 0
        %5669 = vmatprep.subr.bf16.mxu0 0
        %5670 = vmatpush1.bf16.msra.mxu0 0
        %5671 = vmatprep.subr.bf16.mxu0 0
        %5672 = vmatpush1.bf16.msra.mxu0 0
        %5673 = vmatprep.subr.bf16.mxu0 0
        %5674 = vmatpush1.bf16.msra.mxu0 0
        %5675 = vmatprep.mubr.bf16.mxu0 %v5026
        %5676 = vmatmul.mubr.bf16.gmra.mrb[0].mxu0 %v5019
        %v5677 = vpop.f32.mrb[0].mxu0
        %v5678 = vadd.f32 %v5637, %v5677
        %v5679 = vpop.f32.mrb[0].mxu0
        %v5680 = vadd.f32 %v5639, %v5679
        %v5681 = vpop.f32.mrb[0].mxu0
        %v5682 = vpop.f32.mrb[0].mxu0
        %5683 = vdwg.mxu0
        %5684 = vmatprep.subr.bf16.mxu0 %v883
        %5685 = vmatpush1.bf16.msra.mxu0 %v882
        %5686 = vmatprep.subr.bf16.mxu0 %v1070
        %5687 = vmatpush1.bf16.msra.mxu0 %v1069
        %5688 = vmatprep.subr.bf16.mxu0 %v1201
        %5689 = vmatpush1.bf16.msra.mxu0 %v1200
        %5690 = vmatprep.subr.bf16.mxu0 %v1332
        %5691 = vmatpush1.bf16.msra.mxu0 %v1331
        %5692 = vmatprep.subr.bf16.mxu0 %v1463
        %5693 = vmatpush1.bf16.msra.mxu0 %v1462
        %5694 = vmatprep.subr.bf16.mxu0 %v1594
        %5695 = vmatpush1.bf16.msra.mxu0 %v1593
        %5696 = vmatprep.subr.bf16.mxu0 %v1725
        %5697 = vmatpush1.bf16.msra.mxu0 %v1724
        %5698 = vmatprep.subr.bf16.mxu0 %v1856
        %5699 = vmatpush1.bf16.msra.mxu0 %v1855
        %5700 = vmatprep.subr.bf16.mxu0 %v1987
        %5701 = vmatpush1.bf16.msra.mxu0 %v1986
        %5702 = vmatprep.subr.bf16.mxu0 %v2118
        %5703 = vmatpush1.bf16.msra.mxu0 %v2117
        %5704 = vmatprep.subr.bf16.mxu0 %v2249
        %5705 = vmatpush1.bf16.msra.mxu0 %v2248
        %5706 = vmatprep.subr.bf16.mxu0 %v2380
        %5707 = vmatpush1.bf16.msra.mxu0 %v2379
        %5708 = vmatprep.subr.bf16.mxu0 %v2511
        %5709 = vmatpush1.bf16.msra.mxu0 %v2510
        %5710 = vmatprep.subr.bf16.mxu0 %v2642
        %5711 = vmatpush1.bf16.msra.mxu0 %v2641
        %5712 = vmatprep.subr.bf16.mxu0 %v2773
        %5713 = vmatpush1.bf16.msra.mxu0 %v2772
        %5714 = vmatprep.subr.bf16.mxu0 %v2904
        %5715 = vmatpush1.bf16.msra.mxu0 %v2903
        %5716 = vmatprep.mubr.bf16.mxu0 %v5018
        %5717 = vmatmul.mubr.bf16.gmra.mrb[0].mxu0 %v5017
        %v5718 = vpop.f32.mrb[0].mxu0
        %v5719 = vadd.f32 0.0, %v5718
        %v5720 = vpop.f32.mrb[0].mxu0
        %v5721 = vadd.f32 0.0, %v5720
        %v5722 = vpop.f32.mrb[0].mxu0
        %v5723 = vpop.f32.mrb[0].mxu0
        %5724 = vdwg.mxu0
        %5725 = vmatprep.subr.bf16.mxu0 %v4322
        %5726 = vmatpush1.bf16.msra.mxu0 %v4321
        %5727 = vmatprep.subr.bf16.mxu0 %v4354
        %5728 = vmatpush1.bf16.msra.mxu0 %v4353
        %5729 = vmatprep.subr.bf16.mxu0 %v4386
        %5730 = vmatpush1.bf16.msra.mxu0 %v4385
        %5731 = vmatprep.subr.bf16.mxu0 %v4418
        %5732 = vmatpush1.bf16.msra.mxu0 %v4417
        %5733 = vmatprep.subr.bf16.mxu0 %v4450
        %5734 = vmatpush1.bf16.msra.mxu0 %v4449
        %5735 = vmatprep.subr.bf16.mxu0 %v4482
        %5736 = vmatpush1.bf16.msra.mxu0 %v4481
        %5737 = vmatprep.subr.bf16.mxu0 %v4514
        %5738 = vmatpush1.bf16.msra.mxu0 %v4513
        %5739 = vmatprep.subr.bf16.mxu0 %v4546
        %5740 = vmatpush1.bf16.msra.mxu0 %v4545
        %5741 = vmatprep.subr.bf16.mxu0 %v4578
        %5742 = vmatpush1.bf16.msra.mxu0 %v4577
        %5743 = vmatprep.subr.bf16.mxu0 %v4610
        %5744 = vmatpush1.bf16.msra.mxu0 %v4609
        %5745 = vmatprep.subr.bf16.mxu0 %v4642
        %5746 = vmatpush1.bf16.msra.mxu0 %v4641
        %5747 = vmatprep.subr.bf16.mxu0 0
        %5748 = vmatpush1.bf16.msra.mxu0 0
        %5749 = vmatprep.subr.bf16.mxu0 0
        %5750 = vmatpush1.bf16.msra.mxu0 0
        %5751 = vmatprep.subr.bf16.mxu0 0
        %5752 = vmatpush1.bf16.msra.mxu0 0
        %5753 = vmatprep.subr.bf16.mxu0 0
        %5754 = vmatpush1.bf16.msra.mxu0 0
        %5755 = vmatprep.subr.bf16.mxu0 0
        %5756 = vmatpush1.bf16.msra.mxu0 0
        %5757 = vmatprep.mubr.bf16.mxu0 %v5026
        %5758 = vmatmul.mubr.bf16.gmra.mrb[0].mxu0 %v5019
        %v5759 = vpop.f32.mrb[0].mxu0
        %v5760 = vadd.f32 %v5719, %v5759
        %v5761 = vpop.f32.mrb[0].mxu0
        %v5762 = vadd.f32 %v5721, %v5761
        %v5763 = vpop.f32.mrb[0].mxu0
        %v5764 = vpop.f32.mrb[0].mxu0
        %5765 = vdwg.mxu0
        %5766 = vmatprep.subr.bf16.mxu0 %v885
        %5767 = vmatpush1.bf16.msra.mxu0 %v884
        %5768 = vmatprep.subr.bf16.mxu0 %v1072
        %5769 = vmatpush1.bf16.msra.mxu0 %v1071
        %5770 = vmatprep.subr.bf16.mxu0 %v1203
        %5771 = vmatpush1.bf16.msra.mxu0 %v1202
        %5772 = vmatprep.subr.bf16.mxu0 %v1334
        %5773 = vmatpush1.bf16.msra.mxu0 %v1333
        %5774 = vmatprep.subr.bf16.mxu0 %v1465
        %5775 = vmatpush1.bf16.msra.mxu0 %v1464
        %5776 = vmatprep.subr.bf16.mxu0 %v1596
        %5777 = vmatpush1.bf16.msra.mxu0 %v1595
        %5778 = vmatprep.subr.bf16.mxu0 %v1727
        %5779 = vmatpush1.bf16.msra.mxu0 %v1726
        %5780 = vmatprep.subr.bf16.mxu0 %v1858
        %5781 = vmatpush1.bf16.msra.mxu0 %v1857
        %5782 = vmatprep.subr.bf16.mxu0 %v1989
        %5783 = vmatpush1.bf16.msra.mxu0 %v1988
        %5784 = vmatprep.subr.bf16.mxu0 %v2120
        %5785 = vmatpush1.bf16.msra.mxu0 %v2119
        %5786 = vmatprep.subr.bf16.mxu0 %v2251
        %5787 = vmatpush1.bf16.msra.mxu0 %v2250
        %5788 = vmatprep.subr.bf16.mxu0 %v2382
        %5789 = vmatpush1.bf16.msra.mxu0 %v2381
        %5790 = vmatprep.subr.bf16.mxu0 %v2513
        %5791 = vmatpush1.bf16.msra.mxu0 %v2512
        %5792 = vmatprep.subr.bf16.mxu0 %v2644
        %5793 = vmatpush1.bf16.msra.mxu0 %v2643
        %5794 = vmatprep.subr.bf16.mxu0 %v2775
        %5795 = vmatpush1.bf16.msra.mxu0 %v2774
        %5796 = vmatprep.subr.bf16.mxu0 %v2906
        %5797 = vmatpush1.bf16.msra.mxu0 %v2905
        %5798 = vmatprep.mubr.bf16.mxu0 %v5018
        %5799 = vmatmul.mubr.bf16.gmra.mrb[0].mxu0 %v5017
        %v5800 = vpop.f32.mrb[0].mxu0
        %v5801 = vadd.f32 0.0, %v5800
        %v5802 = vpop.f32.mrb[0].mxu0
        %v5803 = vadd.f32 0.0, %v5802
        %v5804 = vpop.f32.mrb[0].mxu0
        %v5805 = vpop.f32.mrb[0].mxu0
        %5806 = vdwg.mxu0
        %5807 = vmatprep.subr.bf16.mxu0 %v4324
        %5808 = vmatpush1.bf16.msra.mxu0 %v4323
        %5809 = vmatprep.subr.bf16.mxu0 %v4356
        %5810 = vmatpush1.bf16.msra.mxu0 %v4355
        %5811 = vmatprep.subr.bf16.mxu0 %v4388
        %5812 = vmatpush1.bf16.msra.mxu0 %v4387
        %5813 = vmatprep.subr.bf16.mxu0 %v4420
        %5814 = vmatpush1.bf16.msra.mxu0 %v4419
        %5815 = vmatprep.subr.bf16.mxu0 %v4452
        %5816 = vmatpush1.bf16.msra.mxu0 %v4451
        %5817 = vmatprep.subr.bf16.mxu0 %v4484
        %5818 = vmatpush1.bf16.msra.mxu0 %v4483
        %5819 = vmatprep.subr.bf16.mxu0 %v4516
        %5820 = vmatpush1.bf16.msra.mxu0 %v4515
        %5821 = vmatprep.subr.bf16.mxu0 %v4548
        %5822 = vmatpush1.bf16.msra.mxu0 %v4547
        %5823 = vmatprep.subr.bf16.mxu0 %v4580
        %5824 = vmatpush1.bf16.msra.mxu0 %v4579
        %5825 = vmatprep.subr.bf16.mxu0 %v4612
        %5826 = vmatpush1.bf16.msra.mxu0 %v4611
        %5827 = vmatprep.subr.bf16.mxu0 %v4644
        %5828 = vmatpush1.bf16.msra.mxu0 %v4643
        %5829 = vmatprep.subr.bf16.mxu0 0
        %5830 = vmatpush1.bf16.msra.mxu0 0
        %5831 = vmatprep.subr.bf16.mxu0 0
        %5832 = vmatpush1.bf16.msra.mxu0 0
        %5833 = vmatprep.subr.bf16.mxu0 0
        %5834 = vmatpush1.bf16.msra.mxu0 0
        %5835 = vmatprep.subr.bf16.mxu0 0
        %5836 = vmatpush1.bf16.msra.mxu0 0
        %5837 = vmatprep.subr.bf16.mxu0 0
        %5838 = vmatpush1.bf16.msra.mxu0 0
        %5839 = vmatprep.mubr.bf16.mxu0 %v5026
        %5840 = vmatmul.mubr.bf16.gmra.mrb[0].mxu0 %v5019
        %v5841 = vpop.f32.mrb[0].mxu0
        %v5842 = vadd.f32 %v5801, %v5841
        %v5843 = vpop.f32.mrb[0].mxu0
        %v5844 = vadd.f32 %v5803, %v5843
        %v5845 = vpop.f32.mrb[0].mxu0
        %v5846 = vpop.f32.mrb[0].mxu0
        %5847 = vdwg.mxu0
        %5848 = vmatprep.subr.bf16.mxu0 %v887
        %5849 = vmatpush1.bf16.msra.mxu0 %v886
        %5850 = vmatprep.subr.bf16.mxu0 %v1074
        %5851 = vmatpush1.bf16.msra.mxu0 %v1073
        %5852 = vmatprep.subr.bf16.mxu0 %v1205
        %5853 = vmatpush1.bf16.msra.mxu0 %v1204
        %5854 = vmatprep.subr.bf16.mxu0 %v1336
        %5855 = vmatpush1.bf16.msra.mxu0 %v1335
        %5856 = vmatprep.subr.bf16.mxu0 %v1467
        %5857 = vmatpush1.bf16.msra.mxu0 %v1466
        %5858 = vmatprep.subr.bf16.mxu0 %v1598
        %5859 = vmatpush1.bf16.msra.mxu0 %v1597
        %5860 = vmatprep.subr.bf16.mxu0 %v1729
        %5861 = vmatpush1.bf16.msra.mxu0 %v1728
        %5862 = vmatprep.subr.bf16.mxu0 %v1860
        %5863 = vmatpush1.bf16.msra.mxu0 %v1859
        %5864 = vmatprep.subr.bf16.mxu0 %v1991
        %5865 = vmatpush1.bf16.msra.mxu0 %v1990
        %5866 = vmatprep.subr.bf16.mxu0 %v2122
        %5867 = vmatpush1.bf16.msra.mxu0 %v2121
        %5868 = vmatprep.subr.bf16.mxu0 %v2253
        %5869 = vmatpush1.bf16.msra.mxu0 %v2252
        %5870 = vmatprep.subr.bf16.mxu0 %v2384
        %5871 = vmatpush1.bf16.msra.mxu0 %v2383
        %5872 = vmatprep.subr.bf16.mxu0 %v2515
        %5873 = vmatpush1.bf16.msra.mxu0 %v2514
        %5874 = vmatprep.subr.bf16.mxu0 %v2646
        %5875 = vmatpush1.bf16.msra.mxu0 %v2645
        %5876 = vmatprep.subr.bf16.mxu0 %v2777
        %5877 = vmatpush1.bf16.msra.mxu0 %v2776
        %5878 = vmatprep.subr.bf16.mxu0 %v2908
        %5879 = vmatpush1.bf16.msra.mxu0 %v2907
        %5880 = vmatprep.mubr.bf16.mxu0 %v5018
        %5881 = vmatmul.mubr.bf16.gmra.mrb[0].mxu0 %v5017
        %v5882 = vpop.f32.mrb[0].mxu0
        %v5883 = vadd.f32 0.0, %v5882
        %v5884 = vpop.f32.mrb[0].mxu0
        %v5885 = vadd.f32 0.0, %v5884
        %v5886 = vpop.f32.mrb[0].mxu0
        %v5887 = vpop.f32.mrb[0].mxu0
        %5888 = vdwg.mxu0
        %5889 = vmatprep.subr.bf16.mxu0 %v4326
        %5890 = vmatpush1.bf16.msra.mxu0 %v4325
        %5891 = vmatprep.subr.bf16.mxu0 %v4358
        %5892 = vmatpush1.bf16.msra.mxu0 %v4357
        %5893 = vmatprep.subr.bf16.mxu0 %v4390
        %5894 = vmatpush1.bf16.msra.mxu0 %v4389
        %5895 = vmatprep.subr.bf16.mxu0 %v4422
        %5896 = vmatpush1.bf16.msra.mxu0 %v4421
        %5897 = vmatprep.subr.bf16.mxu0 %v4454
        %5898 = vmatpush1.bf16.msra.mxu0 %v4453
        %5899 = vmatprep.subr.bf16.mxu0 %v4486
        %5900 = vmatpush1.bf16.msra.mxu0 %v4485
        %5901 = vmatprep.subr.bf16.mxu0 %v4518
        %5902 = vmatpush1.bf16.msra.mxu0 %v4517
        %5903 = vmatprep.subr.bf16.mxu0 %v4550
        %5904 = vmatpush1.bf16.msra.mxu0 %v4549
        %5905 = vmatprep.subr.bf16.mxu0 %v4582
        %5906 = vmatpush1.bf16.msra.mxu0 %v4581
        %5907 = vmatprep.subr.bf16.mxu0 %v4614
        %5908 = vmatpush1.bf16.msra.mxu0 %v4613
        %5909 = vmatprep.subr.bf16.mxu0 %v4646
        %5910 = vmatpush1.bf16.msra.mxu0 %v4645
        %5911 = vmatprep.subr.bf16.mxu0 0
        %5912 = vmatpush1.bf16.msra.mxu0 0
        %5913 = vmatprep.subr.bf16.mxu0 0
        %5914 = vmatpush1.bf16.msra.mxu0 0
        %5915 = vmatprep.subr.bf16.mxu0 0
        %5916 = vmatpush1.bf16.msra.mxu0 0
        %5917 = vmatprep.subr.bf16.mxu0 0
        %5918 = vmatpush1.bf16.msra.mxu0 0
        %5919 = vmatprep.subr.bf16.mxu0 0
        %5920 = vmatpush1.bf16.msra.mxu0 0
        %5921 = vmatprep.mubr.bf16.mxu0 %v5026
        %5922 = vmatmul.mubr.bf16.gmra.mrb[0].mxu0 %v5019
        %v5923 = vpop.f32.mrb[0].mxu0
        %v5924 = vadd.f32 %v5883, %v5923
        %v5925 = vpop.f32.mrb[0].mxu0
        %v5926 = vadd.f32 %v5885, %v5925
        %v5927 = vpop.f32.mrb[0].mxu0
        %v5928 = vpop.f32.mrb[0].mxu0
        %5929 = vdwg.mxu0
        %5930 = vmatprep.subr.bf16.mxu0 %v889
        %5931 = vmatpush1.bf16.msra.mxu0 %v888
        %5932 = vmatprep.subr.bf16.mxu0 %v1076
        %5933 = vmatpush1.bf16.msra.mxu0 %v1075
        %5934 = vmatprep.subr.bf16.mxu0 %v1207
        %5935 = vmatpush1.bf16.msra.mxu0 %v1206
        %5936 = vmatprep.subr.bf16.mxu0 %v1338
        %5937 = vmatpush1.bf16.msra.mxu0 %v1337
        %5938 = vmatprep.subr.bf16.mxu0 %v1469
        %5939 = vmatpush1.bf16.msra.mxu0 %v1468
        %5940 = vmatprep.subr.bf16.mxu0 %v1600
        %5941 = vmatpush1.bf16.msra.mxu0 %v1599
        %5942 = vmatprep.subr.bf16.mxu0 %v1731
        %5943 = vmatpush1.bf16.msra.mxu0 %v1730
        %5944 = vmatprep.subr.bf16.mxu0 %v1862
        %5945 = vmatpush1.bf16.msra.mxu0 %v1861
        %5946 = vmatprep.subr.bf16.mxu0 %v1993
        %5947 = vmatpush1.bf16.msra.mxu0 %v1992
        %5948 = vmatprep.subr.bf16.mxu0 %v2124
        %5949 = vmatpush1.bf16.msra.mxu0 %v2123
        %5950 = vmatprep.subr.bf16.mxu0 %v2255
        %5951 = vmatpush1.bf16.msra.mxu0 %v2254
        %5952 = vmatprep.subr.bf16.mxu0 %v2386
        %5953 = vmatpush1.bf16.msra.mxu0 %v2385
        %5954 = vmatprep.subr.bf16.mxu0 %v2517
        %5955 = vmatpush1.bf16.msra.mxu0 %v2516
        %5956 = vmatprep.subr.bf16.mxu0 %v2648
        %5957 = vmatpush1.bf16.msra.mxu0 %v2647
        %5958 = vmatprep.subr.bf16.mxu0 %v2779
        %5959 = vmatpush1.bf16.msra.mxu0 %v2778
        %5960 = vmatprep.subr.bf16.mxu0 %v2910
        %5961 = vmatpush1.bf16.msra.mxu0 %v2909
        %5962 = vmatprep.mubr.bf16.mxu0 %v5018
        %5963 = vmatmul.mubr.bf16.gmra.mrb[0].mxu0 %v5017
        %v5964 = vpop.f32.mrb[0].mxu0
        %v5965 = vadd.f32 0.0, %v5964
        %v5966 = vpop.f32.mrb[0].mxu0
        %v5967 = vadd.f32 0.0, %v5966
        %v5968 = vpop.f32.mrb[0].mxu0
        %v5969 = vpop.f32.mrb[0].mxu0
        %5970 = vdwg.mxu0
        %5971 = vmatprep.subr.bf16.mxu0 %v4328
        %5972 = vmatpush1.bf16.msra.mxu0 %v4327
        %5973 = vmatprep.subr.bf16.mxu0 %v4360
        %5974 = vmatpush1.bf16.msra.mxu0 %v4359
        %5975 = vmatprep.subr.bf16.mxu0 %v4392
        %5976 = vmatpush1.bf16.msra.mxu0 %v4391
        %5977 = vmatprep.subr.bf16.mxu0 %v4424
        %5978 = vmatpush1.bf16.msra.mxu0 %v4423
        %5979 = vmatprep.subr.bf16.mxu0 %v4456
        %5980 = vmatpush1.bf16.msra.mxu0 %v4455
        %5981 = vmatprep.subr.bf16.mxu0 %v4488
        %5982 = vmatpush1.bf16.msra.mxu0 %v4487
        %5983 = vmatprep.subr.bf16.mxu0 %v4520
        %5984 = vmatpush1.bf16.msra.mxu0 %v4519
        %5985 = vmatprep.subr.bf16.mxu0 %v4552
        %5986 = vmatpush1.bf16.msra.mxu0 %v4551
        %5987 = vmatprep.subr.bf16.mxu0 %v4584
        %5988 = vmatpush1.bf16.msra.mxu0 %v4583
        %5989 = vmatprep.subr.bf16.mxu0 %v4616
        %5990 = vmatpush1.bf16.msra.mxu0 %v4615
        %5991 = vmatprep.subr.bf16.mxu0 %v4648
        %5992 = vmatpush1.bf16.msra.mxu0 %v4647
        %5993 = vmatprep.subr.bf16.mxu0 0
        %5994 = vmatpush1.bf16.msra.mxu0 0
        %5995 = vmatprep.subr.bf16.mxu0 0
        %5996 = vmatpush1.bf16.msra.mxu0 0
        %5997 = vmatprep.subr.bf16.mxu0 0
        %5998 = vmatpush1.bf16.msra.mxu0 0
        %5999 = vmatprep.subr.bf16.mxu0 0
        %6000 = vmatpush1.bf16.msra.mxu0 0
        %6001 = vmatprep.subr.bf16.mxu0 0
        %6002 = vmatpush1.bf16.msra.mxu0 0
        %6003 = vmatprep.mubr.bf16.mxu0 %v5026
        %6004 = vmatmul.mubr.bf16.gmra.mrb[0].mxu0 %v5019
        %v6005 = vpop.f32.mrb[0].mxu0
        %v6006 = vadd.f32 %v5965, %v6005
        %v6007 = vpop.f32.mrb[0].mxu0
        %v6008 = vadd.f32 %v5967, %v6007
        %v6009 = vpop.f32.mrb[0].mxu0
        %v6010 = vpop.f32.mrb[0].mxu0
        %6011 = vdwg.mxu0
        %6012 = vmatprep.subr.bf16.mxu0 %v891
        %6013 = vmatpush1.bf16.msra.mxu0 %v890
        %6014 = vmatprep.subr.bf16.mxu0 %v1078
        %6015 = vmatpush1.bf16.msra.mxu0 %v1077
        %6016 = vmatprep.subr.bf16.mxu0 %v1209
        %6017 = vmatpush1.bf16.msra.mxu0 %v1208
        %6018 = vmatprep.subr.bf16.mxu0 %v1340
        %6019 = vmatpush1.bf16.msra.mxu0 %v1339
        %6020 = vmatprep.subr.bf16.mxu0 %v1471
        %6021 = vmatpush1.bf16.msra.mxu0 %v1470
        %6022 = vmatprep.subr.bf16.mxu0 %v1602
        %6023 = vmatpush1.bf16.msra.mxu0 %v1601
        %6024 = vmatprep.subr.bf16.mxu0 %v1733
        %6025 = vmatpush1.bf16.msra.mxu0 %v1732
        %6026 = vmatprep.subr.bf16.mxu0 %v1864
        %6027 = vmatpush1.bf16.msra.mxu0 %v1863
        %6028 = vmatprep.subr.bf16.mxu0 %v1995
        %6029 = vmatpush1.bf16.msra.mxu0 %v1994
        %6030 = vmatprep.subr.bf16.mxu0 %v2126
        %6031 = vmatpush1.bf16.msra.mxu0 %v2125
        %6032 = vmatprep.subr.bf16.mxu0 %v2257
        %6033 = vmatpush1.bf16.msra.mxu0 %v2256
        %6034 = vmatprep.subr.bf16.mxu0 %v2388
        %6035 = vmatpush1.bf16.msra.mxu0 %v2387
        %6036 = vmatprep.subr.bf16.mxu0 %v2519
        %6037 = vmatpush1.bf16.msra.mxu0 %v2518
        %6038 = vmatprep.subr.bf16.mxu0 %v2650
        %6039 = vmatpush1.bf16.msra.mxu0 %v2649
        %6040 = vmatprep.subr.bf16.mxu0 %v2781
        %6041 = vmatpush1.bf16.msra.mxu0 %v2780
        %6042 = vmatprep.subr.bf16.mxu0 %v2912
        %6043 = vmatpush1.bf16.msra.mxu0 %v2911
        %6044 = vmatprep.mubr.bf16.mxu0 %v5018
        %6045 = vmatmul.mubr.bf16.gmra.mrb[0].mxu0 %v5017
        %v6046 = vpop.f32.mrb[0].mxu0
        %v6047 = vadd.f32 0.0, %v6046
        %v6048 = vpop.f32.mrb[0].mxu0
        %v6049 = vadd.f32 0.0, %v6048
        %v6050 = vpop.f32.mrb[0].mxu0
        %v6051 = vpop.f32.mrb[0].mxu0
        %6052 = vdwg.mxu0
        %6053 = vmatprep.subr.bf16.mxu0 %v4330
        %6054 = vmatpush1.bf16.msra.mxu0 %v4329
        %6055 = vmatprep.subr.bf16.mxu0 %v4362
        %6056 = vmatpush1.bf16.msra.mxu0 %v4361
        %6057 = vmatprep.subr.bf16.mxu0 %v4394
        %6058 = vmatpush1.bf16.msra.mxu0 %v4393
        %6059 = vmatprep.subr.bf16.mxu0 %v4426
        %6060 = vmatpush1.bf16.msra.mxu0 %v4425
        %6061 = vmatprep.subr.bf16.mxu0 %v4458
        %6062 = vmatpush1.bf16.msra.mxu0 %v4457
        %6063 = vmatprep.subr.bf16.mxu0 %v4490
        %6064 = vmatpush1.bf16.msra.mxu0 %v4489
        %6065 = vmatprep.subr.bf16.mxu0 %v4522
        %6066 = vmatpush1.bf16.msra.mxu0 %v4521
        %6067 = vmatprep.subr.bf16.mxu0 %v4554
        %6068 = vmatpush1.bf16.msra.mxu0 %v4553
        %6069 = vmatprep.subr.bf16.mxu0 %v4586
        %6070 = vmatpush1.bf16.msra.mxu0 %v4585
        %6071 = vmatprep.subr.bf16.mxu0 %v4618
        %6072 = vmatpush1.bf16.msra.mxu0 %v4617
        %6073 = vmatprep.subr.bf16.mxu0 %v4650
        %6074 = vmatpush1.bf16.msra.mxu0 %v4649
        %6075 = vmatprep.subr.bf16.mxu0 0
        %6076 = vmatpush1.bf16.msra.mxu0 0
        %6077 = vmatprep.subr.bf16.mxu0 0
        %6078 = vmatpush1.bf16.msra.mxu0 0
        %6079 = vmatprep.subr.bf16.mxu0 0
        %6080 = vmatpush1.bf16.msra.mxu0 0
        %6081 = vmatprep.subr.bf16.mxu0 0
        %6082 = vmatpush1.bf16.msra.mxu0 0
        %6083 = vmatprep.subr.bf16.mxu0 0
        %6084 = vmatpush1.bf16.msra.mxu0 0
        %6085 = vmatprep.mubr.bf16.mxu0 %v5026
        %6086 = vmatmul.mubr.bf16.gmra.mrb[0].mxu0 %v5019
        %v6087 = vpop.f32.mrb[0].mxu0
        %v6088 = vadd.f32 %v6047, %v6087
        %v6089 = vpop.f32.mrb[0].mxu0
        %v6090 = vadd.f32 %v6049, %v6089
        %v6091 = vpop.f32.mrb[0].mxu0
        %v6092 = vpop.f32.mrb[0].mxu0
        %6093 = vdwg.mxu0
        %6094 = vmatprep.subr.bf16.mxu0 %v893
        %6095 = vmatpush1.bf16.msra.mxu0 %v892
        %6096 = vmatprep.subr.bf16.mxu0 %v1080
        %6097 = vmatpush1.bf16.msra.mxu0 %v1079
        %6098 = vmatprep.subr.bf16.mxu0 %v1211
        %6099 = vmatpush1.bf16.msra.mxu0 %v1210
        %6100 = vmatprep.subr.bf16.mxu0 %v1342
        %6101 = vmatpush1.bf16.msra.mxu0 %v1341
        %6102 = vmatprep.subr.bf16.mxu0 %v1473
        %6103 = vmatpush1.bf16.msra.mxu0 %v1472
        %6104 = vmatprep.subr.bf16.mxu0 %v1604
        %6105 = vmatpush1.bf16.msra.mxu0 %v1603
        %6106 = vmatprep.subr.bf16.mxu0 %v1735
        %6107 = vmatpush1.bf16.msra.mxu0 %v1734
        %6108 = vmatprep.subr.bf16.mxu0 %v1866
        %6109 = vmatpush1.bf16.msra.mxu0 %v1865
        %6110 = vmatprep.subr.bf16.mxu0 %v1997
        %6111 = vmatpush1.bf16.msra.mxu0 %v1996
        %6112 = vmatprep.subr.bf16.mxu0 %v2128
        %6113 = vmatpush1.bf16.msra.mxu0 %v2127
        %6114 = vmatprep.subr.bf16.mxu0 %v2259
        %6115 = vmatpush1.bf16.msra.mxu0 %v2258
        %6116 = vmatprep.subr.bf16.mxu0 %v2390
        %6117 = vmatpush1.bf16.msra.mxu0 %v2389
        %6118 = vmatprep.subr.bf16.mxu0 %v2521
        %6119 = vmatpush1.bf16.msra.mxu0 %v2520
        %6120 = vmatprep.subr.bf16.mxu0 %v2652
        %6121 = vmatpush1.bf16.msra.mxu0 %v2651
        %6122 = vmatprep.subr.bf16.mxu0 %v2783
        %6123 = vmatpush1.bf16.msra.mxu0 %v2782
        %6124 = vmatprep.subr.bf16.mxu0 %v2914
        %6125 = vmatpush1.bf16.msra.mxu0 %v2913
        %6126 = vmatprep.mubr.bf16.mxu0 %v5018
        %6127 = vmatmul.mubr.bf16.gmra.mrb[0].mxu0 %v5017
        %v6128 = vpop.f32.mrb[0].mxu0
        %v6129 = vadd.f32 0.0, %v6128
        %v6130 = vpop.f32.mrb[0].mxu0
        %v6131 = vadd.f32 0.0, %v6130
        %v6132 = vpop.f32.mrb[0].mxu0
        %v6133 = vpop.f32.mrb[0].mxu0
        %6134 = vdwg.mxu0
        %6135 = vmatprep.subr.bf16.mxu0 %v4332
        %6136 = vmatpush1.bf16.msra.mxu0 %v4331
        %6137 = vmatprep.subr.bf16.mxu0 %v4364
        %6138 = vmatpush1.bf16.msra.mxu0 %v4363
        %6139 = vmatprep.subr.bf16.mxu0 %v4396
        %6140 = vmatpush1.bf16.msra.mxu0 %v4395
        %6141 = vmatprep.subr.bf16.mxu0 %v4428
        %6142 = vmatpush1.bf16.msra.mxu0 %v4427
        %6143 = vmatprep.subr.bf16.mxu0 %v4460
        %6144 = vmatpush1.bf16.msra.mxu0 %v4459
        %6145 = vmatprep.subr.bf16.mxu0 %v4492
        %6146 = vmatpush1.bf16.msra.mxu0 %v4491
        %6147 = vmatprep.subr.bf16.mxu0 %v4524
        %6148 = vmatpush1.bf16.msra.mxu0 %v4523
        %6149 = vmatprep.subr.bf16.mxu0 %v4556
        %6150 = vmatpush1.bf16.msra.mxu0 %v4555
        %6151 = vmatprep.subr.bf16.mxu0 %v4588
        %6152 = vmatpush1.bf16.msra.mxu0 %v4587
        %6153 = vmatprep.subr.bf16.mxu0 %v4620
        %6154 = vmatpush1.bf16.msra.mxu0 %v4619
        %6155 = vmatprep.subr.bf16.mxu0 %v4652
        %6156 = vmatpush1.bf16.msra.mxu0 %v4651
        %6157 = vmatprep.subr.bf16.mxu0 0
        %6158 = vmatpush1.bf16.msra.mxu0 0
        %6159 = vmatprep.subr.bf16.mxu0 0
        %6160 = vmatpush1.bf16.msra.mxu0 0
        %6161 = vmatprep.subr.bf16.mxu0 0
        %6162 = vmatpush1.bf16.msra.mxu0 0
        %6163 = vmatprep.subr.bf16.mxu0 0
        %6164 = vmatpush1.bf16.msra.mxu0 0
        %6165 = vmatprep.subr.bf16.mxu0 0
        %6166 = vmatpush1.bf16.msra.mxu0 0
        %6167 = vmatprep.mubr.bf16.mxu0 %v5026
        %6168 = vmatmul.mubr.bf16.gmra.mrb[0].mxu0 %v5019
        %v6169 = vpop.f32.mrb[0].mxu0
        %v6170 = vadd.f32 %v6129, %v6169
        %v6171 = vpop.f32.mrb[0].mxu0
        %v6172 = vadd.f32 %v6131, %v6171
        %v6173 = vpop.f32.mrb[0].mxu0
        %v6174 = vpop.f32.mrb[0].mxu0
        %6175 = vdwg.mxu0
        %6176 = vmatprep.subr.bf16.mxu0 %v895
        %6177 = vmatpush1.bf16.msra.mxu0 %v894
        %6178 = vmatprep.subr.bf16.mxu0 %v1082
        %6179 = vmatpush1.bf16.msra.mxu0 %v1081
        %6180 = vmatprep.subr.bf16.mxu0 %v1213
        %6181 = vmatpush1.bf16.msra.mxu0 %v1212
        %6182 = vmatprep.subr.bf16.mxu0 %v1344
        %6183 = vmatpush1.bf16.msra.mxu0 %v1343
        %6184 = vmatprep.subr.bf16.mxu0 %v1475
        %6185 = vmatpush1.bf16.msra.mxu0 %v1474
        %6186 = vmatprep.subr.bf16.mxu0 %v1606
        %6187 = vmatpush1.bf16.msra.mxu0 %v1605
        %6188 = vmatprep.subr.bf16.mxu0 %v1737
        %6189 = vmatpush1.bf16.msra.mxu0 %v1736
        %6190 = vmatprep.subr.bf16.mxu0 %v1868
        %6191 = vmatpush1.bf16.msra.mxu0 %v1867
        %6192 = vmatprep.subr.bf16.mxu0 %v1999
        %6193 = vmatpush1.bf16.msra.mxu0 %v1998
        %6194 = vmatprep.subr.bf16.mxu0 %v2130
        %6195 = vmatpush1.bf16.msra.mxu0 %v2129
        %6196 = vmatprep.subr.bf16.mxu0 %v2261
        %6197 = vmatpush1.bf16.msra.mxu0 %v2260
        %6198 = vmatprep.subr.bf16.mxu0 %v2392
        %6199 = vmatpush1.bf16.msra.mxu0 %v2391
        %6200 = vmatprep.subr.bf16.mxu0 %v2523
        %6201 = vmatpush1.bf16.msra.mxu0 %v2522
        %6202 = vmatprep.subr.bf16.mxu0 %v2654
        %6203 = vmatpush1.bf16.msra.mxu0 %v2653
        %6204 = vmatprep.subr.bf16.mxu0 %v2785
        %6205 = vmatpush1.bf16.msra.mxu0 %v2784
        %6206 = vmatprep.subr.bf16.mxu0 %v2916
        %6207 = vmatpush1.bf16.msra.mxu0 %v2915
        %6208 = vmatprep.mubr.bf16.mxu0 %v5018
        %6209 = vmatmul.mubr.bf16.gmra.mrb[0].mxu0 %v5017
        %v6210 = vpop.f32.mrb[0].mxu0
        %v6211 = vadd.f32 0.0, %v6210
        %v6212 = vpop.f32.mrb[0].mxu0
        %v6213 = vadd.f32 0.0, %v6212
        %v6214 = vpop.f32.mrb[0].mxu0
        %v6215 = vpop.f32.mrb[0].mxu0
        %6216 = vdwg.mxu0
        %6217 = vmatprep.subr.bf16.mxu0 %v4334
        %6218 = vmatpush1.bf16.msra.mxu0 %v4333
        %6219 = vmatprep.subr.bf16.mxu0 %v4366
        %6220 = vmatpush1.bf16.msra.mxu0 %v4365
        %6221 = vmatprep.subr.bf16.mxu0 %v4398
        %6222 = vmatpush1.bf16.msra.mxu0 %v4397
        %6223 = vmatprep.subr.bf16.mxu0 %v4430
        %6224 = vmatpush1.bf16.msra.mxu0 %v4429
        %6225 = vmatprep.subr.bf16.mxu0 %v4462
        %6226 = vmatpush1.bf16.msra.mxu0 %v4461
        %6227 = vmatprep.subr.bf16.mxu0 %v4494
        %6228 = vmatpush1.bf16.msra.mxu0 %v4493
        %6229 = vmatprep.subr.bf16.mxu0 %v4526
        %6230 = vmatpush1.bf16.msra.mxu0 %v4525
        %6231 = vmatprep.subr.bf16.mxu0 %v4558
        %6232 = vmatpush1.bf16.msra.mxu0 %v4557
        %6233 = vmatprep.subr.bf16.mxu0 %v4590
        %6234 = vmatpush1.bf16.msra.mxu0 %v4589
        %6235 = vmatprep.subr.bf16.mxu0 %v4622
        %6236 = vmatpush1.bf16.msra.mxu0 %v4621
        %6237 = vmatprep.subr.bf16.mxu0 %v4654
        %6238 = vmatpush1.bf16.msra.mxu0 %v4653
        %6239 = vmatprep.subr.bf16.mxu0 0
        %6240 = vmatpush1.bf16.msra.mxu0 0
        %6241 = vmatprep.subr.bf16.mxu0 0
        %6242 = vmatpush1.bf16.msra.mxu0 0
        %6243 = vmatprep.subr.bf16.mxu0 0
        %6244 = vmatpush1.bf16.msra.mxu0 0
        %6245 = vmatprep.subr.bf16.mxu0 0
        %6246 = vmatpush1.bf16.msra.mxu0 0
        %6247 = vmatprep.subr.bf16.mxu0 0
        %6248 = vmatpush1.bf16.msra.mxu0 0
        %6249 = vmatprep.mubr.bf16.mxu0 %v5026
        %6250 = vmatmul.mubr.bf16.gmra.mrb[0].mxu0 %v5019
        %v6251 = vpop.f32.mrb[0].mxu0
        %v6252 = vadd.f32 %v6211, %v6251
        %v6253 = vpop.f32.mrb[0].mxu0
        %v6254 = vadd.f32 %v6213, %v6253
        %v6255 = vpop.f32.mrb[0].mxu0
        %v6256 = vpop.f32.mrb[0].mxu0
        %6257 = vdwg.mxu0
        %6258 = vmatprep.subr.bf16.mxu0 %v897
        %6259 = vmatpush1.bf16.msra.mxu0 %v896
        %6260 = vmatprep.subr.bf16.mxu0 %v1084
        %6261 = vmatpush1.bf16.msra.mxu0 %v1083
        %6262 = vmatprep.subr.bf16.mxu0 %v1215
        %6263 = vmatpush1.bf16.msra.mxu0 %v1214
        %6264 = vmatprep.subr.bf16.mxu0 %v1346
        %6265 = vmatpush1.bf16.msra.mxu0 %v1345
        %6266 = vmatprep.subr.bf16.mxu0 %v1477
        %6267 = vmatpush1.bf16.msra.mxu0 %v1476
        %6268 = vmatprep.subr.bf16.mxu0 %v1608
        %6269 = vmatpush1.bf16.msra.mxu0 %v1607
        %6270 = vmatprep.subr.bf16.mxu0 %v1739
        %6271 = vmatpush1.bf16.msra.mxu0 %v1738
        %6272 = vmatprep.subr.bf16.mxu0 %v1870
        %6273 = vmatpush1.bf16.msra.mxu0 %v1869
        %6274 = vmatprep.subr.bf16.mxu0 %v2001
        %6275 = vmatpush1.bf16.msra.mxu0 %v2000
        %6276 = vmatprep.subr.bf16.mxu0 %v2132
        %6277 = vmatpush1.bf16.msra.mxu0 %v2131
        %6278 = vmatprep.subr.bf16.mxu0 %v2263
        %6279 = vmatpush1.bf16.msra.mxu0 %v2262
        %6280 = vmatprep.subr.bf16.mxu0 %v2394
        %6281 = vmatpush1.bf16.msra.mxu0 %v2393
        %6282 = vmatprep.subr.bf16.mxu0 %v2525
        %6283 = vmatpush1.bf16.msra.mxu0 %v2524
        %6284 = vmatprep.subr.bf16.mxu0 %v2656
        %6285 = vmatpush1.bf16.msra.mxu0 %v2655
        %6286 = vmatprep.subr.bf16.mxu0 %v2787
        %6287 = vmatpush1.bf16.msra.mxu0 %v2786
        %6288 = vmatprep.subr.bf16.mxu0 %v2918
        %6289 = vmatpush1.bf16.msra.mxu0 %v2917
        %6290 = vmatprep.mubr.bf16.mxu0 %v5018
        %6291 = vmatmul.mubr.bf16.gmra.mrb[0].mxu0 %v5017
        %v6292 = vpop.f32.mrb[0].mxu0
        %v6293 = vadd.f32 0.0, %v6292
        %v6294 = vpop.f32.mrb[0].mxu0
        %v6295 = vadd.f32 0.0, %v6294
        %v6296 = vpop.f32.mrb[0].mxu0
        %v6297 = vpop.f32.mrb[0].mxu0
        %6298 = vdwg.mxu0
        %6299 = vmatprep.subr.bf16.mxu0 %v4336
        %6300 = vmatpush1.bf16.msra.mxu0 %v4335
        %6301 = vmatprep.subr.bf16.mxu0 %v4368
        %6302 = vmatpush1.bf16.msra.mxu0 %v4367
        %6303 = vmatprep.subr.bf16.mxu0 %v4400
        %6304 = vmatpush1.bf16.msra.mxu0 %v4399
        %6305 = vmatprep.subr.bf16.mxu0 %v4432
        %6306 = vmatpush1.bf16.msra.mxu0 %v4431
        %6307 = vmatprep.subr.bf16.mxu0 %v4464
        %6308 = vmatpush1.bf16.msra.mxu0 %v4463
        %6309 = vmatprep.subr.bf16.mxu0 %v4496
        %6310 = vmatpush1.bf16.msra.mxu0 %v4495
        %6311 = vmatprep.subr.bf16.mxu0 %v4528
        %6312 = vmatpush1.bf16.msra.mxu0 %v4527
        %6313 = vmatprep.subr.bf16.mxu0 %v4560
        %6314 = vmatpush1.bf16.msra.mxu0 %v4559
        %6315 = vmatprep.subr.bf16.mxu0 %v4592
        %6316 = vmatpush1.bf16.msra.mxu0 %v4591
        %6317 = vmatprep.subr.bf16.mxu0 %v4624
        %6318 = vmatpush1.bf16.msra.mxu0 %v4623
        %6319 = vmatprep.subr.bf16.mxu0 %v4656
        %6320 = vmatpush1.bf16.msra.mxu0 %v4655
        %6321 = vmatprep.subr.bf16.mxu0 0
        %6322 = vmatpush1.bf16.msra.mxu0 0
        %6323 = vmatprep.subr.bf16.mxu0 0
        %6324 = vmatpush1.bf16.msra.mxu0 0
        %6325 = vmatprep.subr.bf16.mxu0 0
        %6326 = vmatpush1.bf16.msra.mxu0 0
        %6327 = vmatprep.subr.bf16.mxu0 0
        %6328 = vmatpush1.bf16.msra.mxu0 0
        %6329 = vmatprep.subr.bf16.mxu0 0
        %6330 = vmatpush1.bf16.msra.mxu0 0
        %6331 = vmatprep.mubr.bf16.mxu0 %v5026
        %6332 = vmatmul.mubr.bf16.gmra.mrb[0].mxu0 %v5019
        %v6333 = vpop.f32.mrb[0].mxu0
        %v6334 = vadd.f32 %v6293, %v6333
        %v6335 = vpop.f32.mrb[0].mxu0
        %v6336 = vadd.f32 %v6295, %v6335
        %v6337 = vpop.f32.mrb[0].mxu0
        %v6338 = vpop.f32.mrb[0].mxu0
        %6339 = vdwg.mxu0
        %6340 = vst [vmem:[%s721] sm:$0xff] %v5104
        %6341 = vst [vmem:[%s721 + $0x8] sm:$0xff] %v5106
        %6342 = vst [vmem:[%s721 + $0x10] sm:$0xff] %v5186
        %6343 = vst [vmem:[%s721 + $0x18] sm:$0xff] %v5188
        %6344 = vst [vmem:[%s721 + $0x20] sm:$0xff] %v5268
        %6345 = vst [vmem:[%s721 + $0x28] sm:$0xff] %v5270
        %6346 = vst [vmem:[%s721 + $0x30] sm:$0xff] %v5350
        %6347 = vst [vmem:[%s721 + $0x38] sm:$0xff] %v5352
        %6348 = vst [vmem:[%s721 + $0x40] sm:$0xff] %v5432
        %6349 = vst [vmem:[%s721 + $0x48] sm:$0xff] %v5434
        %6350 = vst [vmem:[%s721 + $0x50] sm:$0xff] %v5514
        %6351 = vst [vmem:[%s721 + $0x58] sm:$0xff] %v5516
        %6352 = vst [vmem:[%s721 + $0x60] sm:$0xff] %v5596
        %6353 = vst [vmem:[%s721 + $0x68] sm:$0xff] %v5598
        %6354 = vst [vmem:[%s721 + $0x70] sm:$0xff] %v5678
        %6355 = vst [vmem:[%s721 + $0x78] sm:$0xff] %v5680
        %6356 = vst [vmem:[%s721 + $0x80] sm:$0xff] %v5760
        %6357 = vst [vmem:[%s721 + $0x88] sm:$0xff] %v5762
        %6358 = vst [vmem:[%s721 + $0x90] sm:$0xff] %v5842
        %6359 = vst [vmem:[%s721 + $0x98] sm:$0xff] %v5844
        %6360 = vst [vmem:[%s721 + $0xa0] sm:$0xff] %v5924
        %6361 = vst [vmem:[%s721 + $0xa8] sm:$0xff] %v5926
        %6362 = vst [vmem:[%s721 + $0xb0] sm:$0xff] %v6006
        %6363 = vst [vmem:[%s721 + $0xb8] sm:$0xff] %v6008
        %6364 = vst [vmem:[%s721 + $0xc0] sm:$0xff] %v6088
        %6365 = vst [vmem:[%s721 + $0xc8] sm:$0xff] %v6090
        %6366 = vst [vmem:[%s721 + $0xd0] sm:$0xff] %v6170
        %6367 = vst [vmem:[%s721 + $0xd8] sm:$0xff] %v6172
        %6368 = vst [vmem:[%s721 + $0xe0] sm:$0xff] %v6252
        %6369 = vst [vmem:[%s721 + $0xe8] sm:$0xff] %v6254
        %6370 = vst [vmem:[%s721 + $0xf0] sm:$0xff] %v6334
        %6371 = vst [vmem:[%s721 + $0xf8] sm:$0xff] %v6336
        %s6372 = smul.u32 32, %s19
        %p6373 = scmp.lt.s32.totalorder %s18, 0
        %s6374 = scalar_select %p6373, %s18, 0
        %p6375 = scmp.lt.s32.totalorder %s6372, 127
        %s6376 = scalar_select %p6375, %s6372, 127
        %s6377 = smul.addr %s6374, 128
        %s6378 = sadd.s32 %s6376, %s6377
        %s6379 = smul.addr %s6378, 8
        %s6380 = scalar_lea.vmem %s3, %s6379
        // Predicated region
        $region122: #{dilated_conv3d_block.1} parent=112 // pred_check
          %p6381 = pneg %p132
        $region123: #{dilated_conv3d_block.1} parent=112 // pred_check_branch
          %6383 = sbr.rel (%p6381) target = $region125
        $region124: #{dilated_conv3d_block.1} parent=112 // pred_region
          %s6384 = smul.u32 32, %s19
        $region125: #{dilated_conv3d_block.1} parent=112 // pred_fallthru
          _
      $region113: #{dilated_conv3d_block.1} parent=5 // pred_fallthru
        _
      %p6385 = scmp.le.s32.totalorder 2, %s9
      // Predicated region
      $region126: #{dilated_conv3d_block.1} parent=5 // pred_check
        %p6386 = pneg %p6385
      $region127: #{dilated_conv3d_block.1} parent=5 // pred_check_branch
        %6388 = sbr.rel (%p6386) target = $region129
      $region128: #{dilated_conv3d_block.1} parent=5 // pred_region
        %s6389 = ssub.s32 %s9, 2
        // Predicated region
        $region130: #{dilated_conv3d_block.1} parent=128 // pred_check
          %p6390 = pneg %p138
        $region131: #{dilated_conv3d_block.1} parent=128 // pred_check_branch
          %6392 = sbr.rel (%p6390) target = $region133
        $region132: #{dilated_conv3d_block.1} parent=128 // pred_region
          %s6393 = smul.u32 32, %s21
          %p6394 = scmp.lt.s32.totalorder %s20, 0
          %s6395 = scalar_select %p6394, %s20, 0
          %p6396 = scmp.lt.s32.totalorder %s6393, 127
          %s6397 = scalar_select %p6396, %s6393, 127
          %s6398 = smul.addr %s6395, 128
          %s6399 = sadd.s32 %s6397, %s6398
          %s6400 = smul.addr %s6399, 8
          %s6401 = scalar_lea.vmem %s3, %s6400
        $region133: #{dilated_conv3d_block.1} parent=128 // pred_fallthru
          _
      $region129: #{dilated_conv3d_block.1} parent=5 // pred_fallthru
        _
    $region6: #{dilated_conv3d_block.1} parent=1 // loop_footer
      %s13 = sadd.s32 1, %s9
    $region7: #{dilated_conv3d_block.1} parent=1 // loop_footer_branch
      %8 = sbr.rel target = $region3
    $region8: #{dilated_conv3d_block.1} parent=1 // loop_exit
      _

</llo_original>
